<compile_context>
chip_gen: v5e
topology: v5e:2x2
jax: 0.10.0
libtpu: 0.0.40
codegen_flags: <defaults>
</compile_context>

<pallas_src>
import jax
import jax.numpy as jnp
from jax.experimental import pallas as pl
from jax.experimental.pallas import tpu as pltpu

GATE_BLOCK = 128                      # one 128-lane block per LSTM gate
GATE_SCALE = (0.5, 0.5, 1.0, 0.5)     # PyTorch gate order i, f, g, o; i/f/o pre-scaled
                                      # so sigmoid(z) = 0.5*tanh(0.5*z) + 0.5 -> one tanh


def _full_spec(shape):
    nd = len(shape)
    return pl.BlockSpec(shape, lambda i, _nd=nd: (0,) * _nd)


# ---------------- one-time parameter import transform (like a state_dict import) ---------------
def _pad_gates(w, H, G):
    """[.., 4H] -> [.., 4G]; gate g -> lanes [g*G, g*G+H), i/f/o columns pre-scaled by 0.5."""
    parts = []
    for g in range(4):
        blk = GATE_SCALE[g] * w[..., g * H:(g + 1) * H]
        pad = jnp.zeros(w.shape[:-1] + (G - H,), w.dtype)
        parts.append(jnp.concatenate([blk, pad], axis=-1))
    return jnp.concatenate(parts, axis=-1)


def _pad_rows(w, G):
    """[H, N] -> [G, N] with zero row padding (so a full [B, G] h-vreg can feed the dot)."""
    H = w.shape[0]
    return jnp.concatenate([w, jnp.zeros((G - H, w.shape[1]), w.dtype)], axis=0)


def prepare_params(params, num_layers, H, G=GATE_BLOCK):
    prep = {
        "conv_w": params["conv_w"],                       # [K, Cin, Cout]
        "conv_b": params["conv_b"],                       # [1, Cout]
        "proj_w": _pad_rows(params["proj_w"], G),         # [G, out_len]
        "proj_b": params["proj_b"],                       # [1, out_len]
        # layer 0: input is the 14-channel conv output -> no row padding needed
        "w0_in": _pad_gates(params["lstm0_wih"], H, G),                 # [14, 4G]
        "w0_h": _pad_rows(_pad_gates(params["lstm0_whh"], H, G), G),    # [G, 4G]
        "b0": _pad_gates(params["lstm0_b"], H, G),                      # [1, 4G]
    }
    for l in range(1, num_layers):
        wih = _pad_rows(_pad_gates(params[f"lstm{l}_wih"], H, G), G)    # [G, 4G]
        whh = _pad_rows(_pad_gates(params[f"lstm{l}_whh"], H, G), G)    # [G, 4G]
        prep[f"w{l}_cat"] = jnp.concatenate([wih, whh], axis=0)         # [2G, 4G]
        prep[f"b{l}"] = _pad_gates(params[f"lstm{l}_b"], H, G)          # [1, 4G]
    return prep


# ---------------------------------- fused Pallas kernel ----------------------------------------
def make_fused_kernel(num_layers, batch, conv_k=3, pool_k=3, G=GATE_BLOCK):
    B, K = batch, conv_k

    def kernel(*refs):
        # refs: x_flat, conv_w, conv_b, w0_in, w0_h, b0, (w_cat, b) * (L-1), proj_w, proj_b, out
        it = iter(refs)
        x_ref = next(it)
        cw_ref = next(it)
        cb_ref = next(it)
        w0in_ref = next(it)
        w0h_ref = next(it)
        b0_ref = next(it)
        upper = [(next(it), next(it)) for _ in range(num_layers - 1)]
        pw_ref = next(it)
        pb_ref = next(it)
        o_ref = next(it)

        TB, _Cin = x_ref.shape
        T = TB // B
        Cout = cw_ref.shape[2]
        L1 = T - K + 1                 # conv output length
        L2 = L1 - (pool_k - 1)         # maxpool(k=3, stride=1) output length

        # Load once; everything is KB-scale and stays VMEM/vreg resident.
        xf = x_ref[...]                # [T*B, Cin], time-major (t-major, b-minor)
        cw = cw_ref[...]               # [K, Cin, Cout]
        cb = cb_ref[...]               # [1, Cout]
        w0h = w0h_ref[...]             # [G, 4G]
        wcat = [w[...] for (w, _) in upper]   # [2G, 4G]
        bup = [b[...] for (_, b) in upper]    # [1, 4G]

        # ---- Conv1d(Cin->14, k=3) + ReLU, fully batched (prologue, off critical path) ----
        # rows of xf are t*B + b, so shift-k windows are contiguous row slices.
        y = jnp.dot(xf[0:L1 * B, :], cw[0], preferred_element_type=jnp.float32)
        for k in range(1, K):
            y = y + jnp.dot(xf[k * B:(k + L1) * B, :], cw[k],
                            preferred_element_type=jnp.float32)
        y = jnp.maximum(y + cb, 0.0)                       # [L1*B, Cout]

        # ---- MaxPool1d(k=3, stride=1) over time (shift by B rows) ----
        s = jnp.maximum(jnp.maximum(y[0:L2 * B, :], y[B:(L2 + 1) * B, :]),
                        y[2 * B:(L2 + 2) * B, :])          # [L2*B, Cout]

        # ---- layer-0 input projection hoisted out of the recurrence (time-major) ----
        pre0 = jnp.dot(s, w0in_ref[...],
                       preferred_element_type=jnp.float32) + b0_ref[...]   # [L2*B, 4G]

        def cell(gates, c_prev):
            # Gate blocks (PyTorch order i,f,g,o), each in its own 128-lane block;
            # i/f/o columns are pre-scaled by 0.5, so sigmoid == 0.5*tanh + 0.5.
            tg = jnp.tanh(gates)                            # [B, 4G]
            i_g = 0.5 * tg[:, 0 * G:1 * G] + 0.5
            f_g = 0.5 * tg[:, 1 * G:2 * G] + 0.5
            g_g = tg[:, 2 * G:3 * G]
            o_g = 0.5 * tg[:, 3 * G:4 * G] + 0.5
            c_new = f_g * c_prev + i_g * g_g                # pad lanes stay exactly 0
            h_new = o_g * jnp.tanh(c_new)
            return h_new, c_new

        h = [jnp.zeros((B, G), jnp.float32) for _ in range(num_layers)]
        c = [jnp.zeros((B, G), jnp.float32) for _ in range(num_layers)]

        # ---- stacked LSTM, step-synchronous, fully unrolled, batched over B ----
        for t in range(L2):
            g0 = pre0[t * B:(t + 1) * B, :] + jnp.dot(
                h[0], w0h, preferred_element_type=jnp.float32)          # [B, 4G]
            h[0], c[0] = cell(g0, c[0])
            for l in range(1, num_layers):
                hin = jnp.concatenate([h[l - 1], h[l]], axis=-1)        # [B, 2G], vreg-aligned
                gl = jnp.dot(hin, wcat[l - 1],
                             preferred_element_type=jnp.float32) + bup[l - 1]
                h[l], c[l] = cell(gl, c[l])

        # ---- final Linear on the last hidden state of the top layer ----
        out = jnp.dot(h[num_layers - 1], pw_ref[...],
                      preferred_element_type=jnp.float32) + pb_ref[...]  # [B, out_len]
        o_ref[...] = out

    return kernel


def cnn_lstm_forward(x, params, num_layers, G=GATE_BLOCK):
    B, T, Cin = x.shape
    H = params["lstm0_whh"].shape[0]
    out_len = params["proj_w"].shape[1]

    prep = prepare_params(params, num_layers, H, G)
    # time-major flat input so the conv's shifted windows are contiguous row slices
    x_flat = jnp.transpose(x, (1, 0, 2)).reshape(T * B, Cin)

    args = [x_flat, prep["conv_w"], prep["conv_b"],
            prep["w0_in"], prep["w0_h"], prep["b0"]]
    for l in range(1, num_layers):
        args += [prep[f"w{l}_cat"], prep[f"b{l}"]]
    args += [prep["proj_w"], prep["proj_b"]]

    kernel = make_fused_kernel(num_layers, B, G=G)
    return pl.pallas_call(
        kernel,
        out_shape=jax.ShapeDtypeStruct((B, out_len), jnp.float32),
        grid=(1,),
        in_specs=[_full_spec(a.shape) for a in args],
        out_specs=_full_spec((B, out_len)),
        compiler_params=pltpu.CompilerParams(dimension_semantics=("arbitrary",)),
    )(*args)


# -------------------- plain-JAX reference (for correctness check) --------------------
def reference_forward(x, params, num_layers):
    cw, cb = params["conv_w"], params["conv_b"]
    B, T, _ = x.shape
    L1 = T - 2
    y = jnp.zeros((B, L1, cw.shape[2]), jnp.float32)
    for k in range(3):
        y = y + jnp.einsum("btc,cd->btd", x[:, k:k + L1, :], cw[k])
    y = jnp.maximum(y + cb, 0.0)
    L2 = L1 - 2
    seq = jnp.maximum(jnp.maximum(y[:, 0:L2], y[:, 1:L2 + 1]), y[:, 2:L2 + 2])

    H = params["lstm0_whh"].shape[0]
    for l in range(num_layers):
        wih = params[f"lstm{l}_wih"]
        whh = params[f"lstm{l}_whh"]
        b = params[f"lstm{l}_b"]
        h = jnp.zeros((B, H), jnp.float32)
        c = jnp.zeros((B, H), jnp.float32)
        outs = []
        for t in range(L2):
            g = seq[:, t, :] @ wih + h @ whh + b
            i = jax.nn.sigmoid(g[:, 0:H])
            f = jax.nn.sigmoid(g[:, H:2 * H])
            gg = jnp.tanh(g[:, 2 * H:3 * H])
            o = jax.nn.sigmoid(g[:, 3 * H:4 * H])
            c = f * c + i * gg
            h = o * jnp.tanh(c)
            outs.append(h)
        seq = jnp.stack(outs, axis=1)
    return seq[:, -1, :] @ params["proj_w"] + params["proj_b"]


def init_params(key, in_var, hid, out_len, num_layers):
    params = {}
    keys = jax.random.split(key, 4 + 3 * num_layers)
    params["conv_w"] = 0.1 * jax.random.normal(keys[0], (3, in_var, 14), jnp.float32)
    params["conv_b"] = 0.1 * jax.random.normal(keys[1], (1, 14), jnp.float32)
    idx = 2
    inp = 14
    for l in range(num_layers):
        # fused gate layout: columns ordered [i | f | g | o]; bias = b_ih + b_hh
        params[f"lstm{l}_wih"] = 0.2 * jax.random.normal(keys[idx], (inp, 4 * hid), jnp.float32); idx += 1
        params[f"lstm{l}_whh"] = 0.2 * jax.random.normal(keys[idx], (hid, 4 * hid), jnp.float32); idx += 1
        params[f"lstm{l}_b"] = 0.1 * jax.random.normal(keys[idx], (1, 4 * hid), jnp.float32); idx += 1
        inp = hid
    params["proj_w"] = 0.2 * jax.random.normal(keys[idx], (hid, out_len), jnp.float32); idx += 1
    params["proj_b"] = 0.1 * jax.random.normal(keys[idx], (1, out_len), jnp.float32)
    return params


if __name__ == "__main__":
    # settings: in_var=4, input_len=16, output_len=8, rnn_layer=2, hidR=20 (fixed)
    B, T, IN_VAR = 2, 16, 4
    OUT_LEN, HID, NUM_LAYERS = 8, 20, 2

    key = jax.random.PRNGKey(0)
    kx, kp = jax.random.split(key)
    x = jax.random.normal(kx, (B, T, IN_VAR), jnp.float32)
    params = init_params(kp, IN_VAR, HID, OUT_LEN, NUM_LAYERS)

    out = cnn_lstm_forward(x, params, NUM_LAYERS)
    out = jax.block_until_ready(out)

    ref = reference_forward(x, params, NUM_LAYERS)
    assert out.shape == (B, OUT_LEN), out.shape
    assert jnp.allclose(out, ref, atol=1e-3, rtol=1e-3), "Pallas output mismatch vs JAX reference"
    print("KERNEL_OK")
</pallas_src>

<mosaic_0001>
module attributes {stable_mosaic.version = 11 : i64} {
  func.func @kernel(%arg0: i32, %arg1: memref<32x4xf32, #tpu.memory_space<vmem>>, %arg2: memref<3x4x14xf32, #tpu.memory_space<vmem>>, %arg3: memref<1x14xf32, #tpu.memory_space<vmem>>, %arg4: memref<14x512xf32, #tpu.memory_space<vmem>>, %arg5: memref<128x512xf32, #tpu.memory_space<vmem>>, %arg6: memref<1x512xf32, #tpu.memory_space<vmem>>, %arg7: memref<256x512xf32, #tpu.memory_space<vmem>>, %arg8: memref<1x512xf32, #tpu.memory_space<vmem>>, %arg9: memref<128x8xf32, #tpu.memory_space<vmem>>, %arg10: memref<1x8xf32, #tpu.memory_space<vmem>>, %arg11: memref<2x8xf32, #tpu.memory_space<vmem>>) attributes {dimension_semantics = [#tpu.dimension_semantics<arbitrary>], iteration_bounds = array<i64: 1>, scalar_prefetch = 0 : i64, scratch_operands = 0 : i64, tpu.core_type = #tpu.core_type<tc>, window_params = [{pipeline_mode = #tpu.pipeline_mode<synchronous>, transform_indices = @transform_0, window_bounds = array<i64: 32, 4>}, {pipeline_mode = #tpu.pipeline_mode<synchronous>, transform_indices = @transform_1, window_bounds = array<i64: 3, 4, 14>}, {pipeline_mode = #tpu.pipeline_mode<synchronous>, transform_indices = @transform_2, window_bounds = array<i64: 1, 14>}, {pipeline_mode = #tpu.pipeline_mode<synchronous>, transform_indices = @transform_3, window_bounds = array<i64: 14, 512>}, {pipeline_mode = #tpu.pipeline_mode<synchronous>, transform_indices = @transform_4, window_bounds = array<i64: 128, 512>}, {pipeline_mode = #tpu.pipeline_mode<synchronous>, transform_indices = @transform_5, window_bounds = array<i64: 1, 512>}, {pipeline_mode = #tpu.pipeline_mode<synchronous>, transform_indices = @transform_6, window_bounds = array<i64: 256, 512>}, {pipeline_mode = #tpu.pipeline_mode<synchronous>, transform_indices = @transform_7, window_bounds = array<i64: 1, 512>}, {pipeline_mode = #tpu.pipeline_mode<synchronous>, transform_indices = @transform_8, window_bounds = array<i64: 128, 8>}, {pipeline_mode = #tpu.pipeline_mode<synchronous>, transform_indices = @transform_9, window_bounds = array<i64: 1, 8>}, {pipeline_mode = #tpu.pipeline_mode<synchronous>, transform_indices = @transform_10, window_bounds = array<i64: 2, 8>}]} {
    %c0 = arith.constant 0 : index
    %c0_0 = arith.constant 0 : index
    %0 = vector.load %arg1[%c0, %c0_0] : memref<32x4xf32, #tpu.memory_space<vmem>>, vector<32x4xf32>
    %c0_1 = arith.constant 0 : index
    %c0_2 = arith.constant 0 : index
    %c0_3 = arith.constant 0 : index
    %1 = vector.load %arg2[%c0_1, %c0_2, %c0_3] : memref<3x4x14xf32, #tpu.memory_space<vmem>>, vector<3x4x14xf32>
    %c0_4 = arith.constant 0 : index
    %c0_5 = arith.constant 0 : index
    %2 = vector.load %arg3[%c0_4, %c0_5] : memref<1x14xf32, #tpu.memory_space<vmem>>, vector<1x14xf32>
    %c0_6 = arith.constant 0 : index
    %c0_7 = arith.constant 0 : index
    %3 = vector.load %arg5[%c0_6, %c0_7] : memref<128x512xf32, #tpu.memory_space<vmem>>, vector<128x512xf32>
    %c0_8 = arith.constant 0 : index
    %c0_9 = arith.constant 0 : index
    %4 = vector.load %arg7[%c0_8, %c0_9] : memref<256x512xf32, #tpu.memory_space<vmem>>, vector<256x512xf32>
    %c0_10 = arith.constant 0 : index
    %c0_11 = arith.constant 0 : index
    %5 = vector.load %arg8[%c0_10, %c0_11] : memref<1x512xf32, #tpu.memory_space<vmem>>, vector<1x512xf32>
    %6 = vector.extract_strided_slice %0 {offsets = [0, 0], sizes = [28, 4], strides = [1, 1]} : vector<32x4xf32> to vector<28x4xf32>
    %7 = vector.extract_strided_slice %1 {offsets = [0, 0, 0], sizes = [1, 4, 14], strides = [1, 1, 1]} : vector<3x4x14xf32> to vector<1x4x14xf32>
    %8 = vector.shape_cast %7 : vector<1x4x14xf32> to vector<4x14xf32>
    %cst = arith.constant dense<0.000000e+00> : vector<28x14xf32>
    %9 = tpu.matmul %6, %8, %cst {dimension_numbers = #tpu.dot_dimension_numbers<[1], [0], [0], [1], [0, 0, 1, 1], [], []>} : vector<28x4xf32>, vector<4x14xf32>, vector<28x14xf32> -> vector<28x14xf32>
    %10 = vector.extract_strided_slice %0 {offsets = [2, 0], sizes = [28, 4], strides = [1, 1]} : vector<32x4xf32> to vector<28x4xf32>
    %11 = vector.extract_strided_slice %1 {offsets = [1, 0, 0], sizes = [1, 4, 14], strides = [1, 1, 1]} : vector<3x4x14xf32> to vector<1x4x14xf32>
    %12 = vector.shape_cast %11 : vector<1x4x14xf32> to vector<4x14xf32>
    %cst_12 = arith.constant dense<0.000000e+00> : vector<28x14xf32>
    %13 = tpu.matmul %10, %12, %cst_12 {dimension_numbers = #tpu.dot_dimension_numbers<[1], [0], [0], [1], [0, 0, 1, 1], [], []>} : vector<28x4xf32>, vector<4x14xf32>, vector<28x14xf32> -> vector<28x14xf32>
    %14 = arith.addf %9, %13 : vector<28x14xf32>
    %15 = vector.extract_strided_slice %0 {offsets = [4, 0], sizes = [28, 4], strides = [1, 1]} : vector<32x4xf32> to vector<28x4xf32>
    %16 = vector.extract_strided_slice %1 {offsets = [2, 0, 0], sizes = [1, 4, 14], strides = [1, 1, 1]} : vector<3x4x14xf32> to vector<1x4x14xf32>
    %17 = vector.shape_cast %16 : vector<1x4x14xf32> to vector<4x14xf32>
    %cst_13 = arith.constant dense<0.000000e+00> : vector<28x14xf32>
    %18 = tpu.matmul %15, %17, %cst_13 {dimension_numbers = #tpu.dot_dimension_numbers<[1], [0], [0], [1], [0, 0, 1, 1], [], []>} : vector<28x4xf32>, vector<4x14xf32>, vector<28x14xf32> -> vector<28x14xf32>
    %19 = arith.addf %14, %18 : vector<28x14xf32>
    %20 = vector.broadcast %2 : vector<1x14xf32> to vector<28x14xf32>
    %21 = arith.addf %19, %20 : vector<28x14xf32>
    %cst_14 = arith.constant 0.000000e+00 : f32
    %22 = vector.broadcast %cst_14 : f32 to vector<28x14xf32>
    %23 = arith.maximumf %21, %22 : vector<28x14xf32>
    %24 = vector.extract_strided_slice %23 {offsets = [0, 0], sizes = [24, 14], strides = [1, 1]} : vector<28x14xf32> to vector<24x14xf32>
    %25 = vector.extract_strided_slice %23 {offsets = [2, 0], sizes = [24, 14], strides = [1, 1]} : vector<28x14xf32> to vector<24x14xf32>
    %26 = arith.maximumf %24, %25 : vector<24x14xf32>
    %27 = vector.extract_strided_slice %23 {offsets = [4, 0], sizes = [24, 14], strides = [1, 1]} : vector<28x14xf32> to vector<24x14xf32>
    %28 = arith.maximumf %26, %27 : vector<24x14xf32>
    %c0_15 = arith.constant 0 : index
    %c0_16 = arith.constant 0 : index
    %29 = vector.load %arg4[%c0_15, %c0_16] : memref<14x512xf32, #tpu.memory_space<vmem>>, vector<14x512xf32>
    %cst_17 = arith.constant dense<0.000000e+00> : vector<24x512xf32>
    %30 = tpu.matmul %28, %29, %cst_17 {dimension_numbers = #tpu.dot_dimension_numbers<[1], [0], [0], [1], [0, 0, 1, 1], [], []>} : vector<24x14xf32>, vector<14x512xf32>, vector<24x512xf32> -> vector<24x512xf32>
    %c0_18 = arith.constant 0 : index
    %c0_19 = arith.constant 0 : index
    %31 = vector.load %arg6[%c0_18, %c0_19] : memref<1x512xf32, #tpu.memory_space<vmem>>, vector<1x512xf32>
    %32 = vector.broadcast %31 : vector<1x512xf32> to vector<24x512xf32>
    %33 = arith.addf %30, %32 : vector<24x512xf32>
    %cst_20 = arith.constant 0.000000e+00 : f32
    %34 = vector.broadcast %cst_20 : f32 to vector<2x128xf32>
    %cst_21 = arith.constant 0.000000e+00 : f32
    %35 = vector.broadcast %cst_21 : f32 to vector<2x128xf32>
    %cst_22 = arith.constant 0.000000e+00 : f32
    %36 = vector.broadcast %cst_22 : f32 to vector<2x128xf32>
    %cst_23 = arith.constant 0.000000e+00 : f32
    %37 = vector.broadcast %cst_23 : f32 to vector<2x128xf32>
    %38 = vector.extract_strided_slice %33 {offsets = [0, 0], sizes = [2, 512], strides = [1, 1]} : vector<24x512xf32> to vector<2x512xf32>
    %cst_24 = arith.constant dense<0.000000e+00> : vector<2x512xf32>
    %39 = tpu.matmul %34, %3, %cst_24 {dimension_numbers = #tpu.dot_dimension_numbers<[1], [0], [0], [1], [0, 0, 1, 1], [], []>} : vector<2x128xf32>, vector<128x512xf32>, vector<2x512xf32> -> vector<2x512xf32>
    %40 = arith.addf %38, %39 : vector<2x512xf32>
    %41 = math.tanh %40 : vector<2x512xf32>
    %42 = vector.extract_strided_slice %41 {offsets = [0, 0], sizes = [2, 128], strides = [1, 1]} : vector<2x512xf32> to vector<2x128xf32>
    %cst_25 = arith.constant 5.000000e-01 : f32
    %43 = vector.broadcast %cst_25 : f32 to vector<2x128xf32>
    %44 = arith.mulf %43, %42 : vector<2x128xf32>
    %cst_26 = arith.constant 5.000000e-01 : f32
    %45 = vector.broadcast %cst_26 : f32 to vector<2x128xf32>
    %46 = arith.addf %44, %45 : vector<2x128xf32>
    %47 = vector.extract_strided_slice %41 {offsets = [0, 128], sizes = [2, 128], strides = [1, 1]} : vector<2x512xf32> to vector<2x128xf32>
    %cst_27 = arith.constant 5.000000e-01 : f32
    %48 = vector.broadcast %cst_27 : f32 to vector<2x128xf32>
    %49 = arith.mulf %48, %47 : vector<2x128xf32>
    %cst_28 = arith.constant 5.000000e-01 : f32
    %50 = vector.broadcast %cst_28 : f32 to vector<2x128xf32>
    %51 = arith.addf %49, %50 : vector<2x128xf32>
    %52 = vector.extract_strided_slice %41 {offsets = [0, 256], sizes = [2, 128], strides = [1, 1]} : vector<2x512xf32> to vector<2x128xf32>
    %53 = vector.extract_strided_slice %41 {offsets = [0, 384], sizes = [2, 128], strides = [1, 1]} : vector<2x512xf32> to vector<2x128xf32>
    %cst_29 = arith.constant 5.000000e-01 : f32
    %54 = vector.broadcast %cst_29 : f32 to vector<2x128xf32>
    %55 = arith.mulf %54, %53 : vector<2x128xf32>
    %cst_30 = arith.constant 5.000000e-01 : f32
    %56 = vector.broadcast %cst_30 : f32 to vector<2x128xf32>
    %57 = arith.addf %55, %56 : vector<2x128xf32>
    %58 = arith.mulf %51, %36 : vector<2x128xf32>
    %59 = arith.mulf %46, %52 : vector<2x128xf32>
    %60 = arith.addf %58, %59 : vector<2x128xf32>
    %61 = math.tanh %60 : vector<2x128xf32>
    %62 = arith.mulf %57, %61 : vector<2x128xf32>
    %63 = tpu.concatenate %62, %35 in 1 : vector<2x128xf32>, vector<2x128xf32> -> vector<2x256xf32>
    %cst_31 = arith.constant dense<0.000000e+00> : vector<2x512xf32>
    %64 = tpu.matmul %63, %4, %cst_31 {dimension_numbers = #tpu.dot_dimension_numbers<[1], [0], [0], [1], [0, 0, 1, 1], [], []>} : vector<2x256xf32>, vector<256x512xf32>, vector<2x512xf32> -> vector<2x512xf32>
    %65 = vector.broadcast %5 : vector<1x512xf32> to vector<2x512xf32>
    %66 = arith.addf %64, %65 : vector<2x512xf32>
    %67 = math.tanh %66 : vector<2x512xf32>
    %68 = vector.extract_strided_slice %67 {offsets = [0, 0], sizes = [2, 128], strides = [1, 1]} : vector<2x512xf32> to vector<2x128xf32>
    %cst_32 = arith.constant 5.000000e-01 : f32
    %69 = vector.broadcast %cst_32 : f32 to vector<2x128xf32>
    %70 = arith.mulf %69, %68 : vector<2x128xf32>
    %cst_33 = arith.constant 5.000000e-01 : f32
    %71 = vector.broadcast %cst_33 : f32 to vector<2x128xf32>
    %72 = arith.addf %70, %71 : vector<2x128xf32>
    %73 = vector.extract_strided_slice %67 {offsets = [0, 128], sizes = [2, 128], strides = [1, 1]} : vector<2x512xf32> to vector<2x128xf32>
    %cst_34 = arith.constant 5.000000e-01 : f32
    %74 = vector.broadcast %cst_34 : f32 to vector<2x128xf32>
    %75 = arith.mulf %74, %73 : vector<2x128xf32>
    %cst_35 = arith.constant 5.000000e-01 : f32
    %76 = vector.broadcast %cst_35 : f32 to vector<2x128xf32>
    %77 = arith.addf %75, %76 : vector<2x128xf32>
    %78 = vector.extract_strided_slice %67 {offsets = [0, 256], sizes = [2, 128], strides = [1, 1]} : vector<2x512xf32> to vector<2x128xf32>
    %79 = vector.extract_strided_slice %67 {offsets = [0, 384], sizes = [2, 128], strides = [1, 1]} : vector<2x512xf32> to vector<2x128xf32>
    %cst_36 = arith.constant 5.000000e-01 : f32
    %80 = vector.broadcast %cst_36 : f32 to vector<2x128xf32>
    %81 = arith.mulf %80, %79 : vector<2x128xf32>
    %cst_37 = arith.constant 5.000000e-01 : f32
    %82 = vector.broadcast %cst_37 : f32 to vector<2x128xf32>
    %83 = arith.addf %81, %82 : vector<2x128xf32>
    %84 = arith.mulf %77, %37 : vector<2x128xf32>
    %85 = arith.mulf %72, %78 : vector<2x128xf32>
    %86 = arith.addf %84, %85 : vector<2x128xf32>
    %87 = math.tanh %86 : vector<2x128xf32>
    %88 = arith.mulf %83, %87 : vector<2x128xf32>
    %89 = vector.extract_strided_slice %33 {offsets = [2, 0], sizes = [2, 512], strides = [1, 1]} : vector<24x512xf32> to vector<2x512xf32>
    %cst_38 = arith.constant dense<0.000000e+00> : vector<2x512xf32>
    %90 = tpu.matmul %62, %3, %cst_38 {dimension_numbers = #tpu.dot_dimension_numbers<[1], [0], [0], [1], [0, 0, 1, 1], [], []>} : vector<2x128xf32>, vector<128x512xf32>, vector<2x512xf32> -> vector<2x512xf32>
    %91 = arith.addf %89, %90 : vector<2x512xf32>
    %92 = math.tanh %91 : vector<2x512xf32>
    %93 = vector.extract_strided_slice %92 {offsets = [0, 0], sizes = [2, 128], strides = [1, 1]} : vector<2x512xf32> to vector<2x128xf32>
    %cst_39 = arith.constant 5.000000e-01 : f32
    %94 = vector.broadcast %cst_39 : f32 to vector<2x128xf32>
    %95 = arith.mulf %94, %93 : vector<2x128xf32>
    %cst_40 = arith.constant 5.000000e-01 : f32
    %96 = vector.broadcast %cst_40 : f32 to vector<2x128xf32>
    %97 = arith.addf %95, %96 : vector<2x128xf32>
    %98 = vector.extract_strided_slice %92 {offsets = [0, 128], sizes = [2, 128], strides = [1, 1]} : vector<2x512xf32> to vector<2x128xf32>
    %cst_41 = arith.constant 5.000000e-01 : f32
    %99 = vector.broadcast %cst_41 : f32 to vector<2x128xf32>
    %100 = arith.mulf %99, %98 : vector<2x128xf32>
    %cst_42 = arith.constant 5.000000e-01 : f32
    %101 = vector.broadcast %cst_42 : f32 to vector<2x128xf32>
    %102 = arith.addf %100, %101 : vector<2x128xf32>
    %103 = vector.extract_strided_slice %92 {offsets = [0, 256], sizes = [2, 128], strides = [1, 1]} : vector<2x512xf32> to vector<2x128xf32>
    %104 = vector.extract_strided_slice %92 {offsets = [0, 384], sizes = [2, 128], strides = [1, 1]} : vector<2x512xf32> to vector<2x128xf32>
    %cst_43 = arith.constant 5.000000e-01 : f32
    %105 = vector.broadcast %cst_43 : f32 to vector<2x128xf32>
    %106 = arith.mulf %105, %104 : vector<2x128xf32>
    %cst_44 = arith.constant 5.000000e-01 : f32
    %107 = vector.broadcast %cst_44 : f32 to vector<2x128xf32>
    %108 = arith.addf %106, %107 : vector<2x128xf32>
    %109 = arith.mulf %102, %60 : vector<2x128xf32>
    %110 = arith.mulf %97, %103 : vector<2x128xf32>
    %111 = arith.addf %109, %110 : vector<2x128xf32>
    %112 = math.tanh %111 : vector<2x128xf32>
    %113 = arith.mulf %108, %112 : vector<2x128xf32>
    %114 = tpu.concatenate %113, %88 in 1 : vector<2x128xf32>, vector<2x128xf32> -> vector<2x256xf32>
    %cst_45 = arith.constant dense<0.000000e+00> : vector<2x512xf32>
    %115 = tpu.matmul %114, %4, %cst_45 {dimension_numbers = #tpu.dot_dimension_numbers<[1], [0], [0], [1], [0, 0, 1, 1], [], []>} : vector<2x256xf32>, vector<256x512xf32>, vector<2x512xf32> -> vector<2x512xf32>
    %116 = vector.broadcast %5 : vector<1x512xf32> to vector<2x512xf32>
    %117 = arith.addf %115, %116 : vector<2x512xf32>
    %118 = math.tanh %117 : vector<2x512xf32>
    %119 = vector.extract_strided_slice %118 {offsets = [0, 0], sizes = [2, 128], strides = [1, 1]} : vector<2x512xf32> to vector<2x128xf32>
    %cst_46 = arith.constant 5.000000e-01 : f32
    %120 = vector.broadcast %cst_46 : f32 to vector<2x128xf32>
    %121 = arith.mulf %120, %119 : vector<2x128xf32>
    %cst_47 = arith.constant 5.000000e-01 : f32
    %122 = vector.broadcast %cst_47 : f32 to vector<2x128xf32>
    %123 = arith.addf %121, %122 : vector<2x128xf32>
    %124 = vector.extract_strided_slice %118 {offsets = [0, 128], sizes = [2, 128], strides = [1, 1]} : vector<2x512xf32> to vector<2x128xf32>
    %cst_48 = arith.constant 5.000000e-01 : f32
    %125 = vector.broadcast %cst_48 : f32 to vector<2x128xf32>
    %126 = arith.mulf %125, %124 : vector<2x128xf32>
    %cst_49 = arith.constant 5.000000e-01 : f32
    %127 = vector.broadcast %cst_49 : f32 to vector<2x128xf32>
    %128 = arith.addf %126, %127 : vector<2x128xf32>
    %129 = vector.extract_strided_slice %118 {offsets = [0, 256], sizes = [2, 128], strides = [1, 1]} : vector<2x512xf32> to vector<2x128xf32>
    %130 = vector.extract_strided_slice %118 {offsets = [0, 384], sizes = [2, 128], strides = [1, 1]} : vector<2x512xf32> to vector<2x128xf32>
    %cst_50 = arith.constant 5.000000e-01 : f32
    %131 = vector.broadcast %cst_50 : f32 to vector<2x128xf32>
    %132 = arith.mulf %131, %130 : vector<2x128xf32>
    %cst_51 = arith.constant 5.000000e-01 : f32
    %133 = vector.broadcast %cst_51 : f32 to vector<2x128xf32>
    %134 = arith.addf %132, %133 : vector<2x128xf32>
    %135 = arith.mulf %128, %86 : vector<2x128xf32>
    %136 = arith.mulf %123, %129 : vector<2x128xf32>
    %137 = arith.addf %135, %136 : vector<2x128xf32>
    %138 = math.tanh %137 : vector<2x128xf32>
    %139 = arith.mulf %134, %138 : vector<2x128xf32>
    %140 = vector.extract_strided_slice %33 {offsets = [4, 0], sizes = [2, 512], strides = [1, 1]} : vector<24x512xf32> to vector<2x512xf32>
    %cst_52 = arith.constant dense<0.000000e+00> : vector<2x512xf32>
    %141 = tpu.matmul %113, %3, %cst_52 {dimension_numbers = #tpu.dot_dimension_numbers<[1], [0], [0], [1], [0, 0, 1, 1], [], []>} : vector<2x128xf32>, vector<128x512xf32>, vector<2x512xf32> -> vector<2x512xf32>
    %142 = arith.addf %140, %141 : vector<2x512xf32>
    %143 = math.tanh %142 : vector<2x512xf32>
    %144 = vector.extract_strided_slice %143 {offsets = [0, 0], sizes = [2, 128], strides = [1, 1]} : vector<2x512xf32> to vector<2x128xf32>
    %cst_53 = arith.constant 5.000000e-01 : f32
    %145 = vector.broadcast %cst_53 : f32 to vector<2x128xf32>
    %146 = arith.mulf %145, %144 : vector<2x128xf32>
    %cst_54 = arith.constant 5.000000e-01 : f32
    %147 = vector.broadcast %cst_54 : f32 to vector<2x128xf32>
    %148 = arith.addf %146, %147 : vector<2x128xf32>
    %149 = vector.extract_strided_slice %143 {offsets = [0, 128], sizes = [2, 128], strides = [1, 1]} : vector<2x512xf32> to vector<2x128xf32>
    %cst_55 = arith.constant 5.000000e-01 : f32
    %150 = vector.broadcast %cst_55 : f32 to vector<2x128xf32>
    %151 = arith.mulf %150, %149 : vector<2x128xf32>
    %cst_56 = arith.constant 5.000000e-01 : f32
    %152 = vector.broadcast %cst_56 : f32 to vector<2x128xf32>
    %153 = arith.addf %151, %152 : vector<2x128xf32>
    %154 = vector.extract_strided_slice %143 {offsets = [0, 256], sizes = [2, 128], strides = [1, 1]} : vector<2x512xf32> to vector<2x128xf32>
    %155 = vector.extract_strided_slice %143 {offsets = [0, 384], sizes = [2, 128], strides = [1, 1]} : vector<2x512xf32> to vector<2x128xf32>
    %cst_57 = arith.constant 5.000000e-01 : f32
    %156 = vector.broadcast %cst_57 : f32 to vector<2x128xf32>
    %157 = arith.mulf %156, %155 : vector<2x128xf32>
    %cst_58 = arith.constant 5.000000e-01 : f32
    %158 = vector.broadcast %cst_58 : f32 to vector<2x128xf32>
    %159 = arith.addf %157, %158 : vector<2x128xf32>
    %160 = arith.mulf %153, %111 : vector<2x128xf32>
    %161 = arith.mulf %148, %154 : vector<2x128xf32>
    %162 = arith.addf %160, %161 : vector<2x128xf32>
    %163 = math.tanh %162 : vector<2x128xf32>
    %164 = arith.mulf %159, %163 : vector<2x128xf32>
    %165 = tpu.concatenate %164, %139 in 1 : vector<2x128xf32>, vector<2x128xf32> -> vector<2x256xf32>
    %cst_59 = arith.constant dense<0.000000e+00> : vector<2x512xf32>
    %166 = tpu.matmul %165, %4, %cst_59 {dimension_numbers = #tpu.dot_dimension_numbers<[1], [0], [0], [1], [0, 0, 1, 1], [], []>} : vector<2x256xf32>, vector<256x512xf32>, vector<2x512xf32> -> vector<2x512xf32>
    %167 = vector.broadcast %5 : vector<1x512xf32> to vector<2x512xf32>
    %168 = arith.addf %166, %167 : vector<2x512xf32>
    %169 = math.tanh %168 : vector<2x512xf32>
    %170 = vector.extract_strided_slice %169 {offsets = [0, 0], sizes = [2, 128], strides = [1, 1]} : vector<2x512xf32> to vector<2x128xf32>
    %cst_60 = arith.constant 5.000000e-01 : f32
    %171 = vector.broadcast %cst_60 : f32 to vector<2x128xf32>
    %172 = arith.mulf %171, %170 : vector<2x128xf32>
    %cst_61 = arith.constant 5.000000e-01 : f32
    %173 = vector.broadcast %cst_61 : f32 to vector<2x128xf32>
    %174 = arith.addf %172, %173 : vector<2x128xf32>
    %175 = vector.extract_strided_slice %169 {offsets = [0, 128], sizes = [2, 128], strides = [1, 1]} : vector<2x512xf32> to vector<2x128xf32>
    %cst_62 = arith.constant 5.000000e-01 : f32
    %176 = vector.broadcast %cst_62 : f32 to vector<2x128xf32>
    %177 = arith.mulf %176, %175 : vector<2x128xf32>
    %cst_63 = arith.constant 5.000000e-01 : f32
    %178 = vector.broadcast %cst_63 : f32 to vector<2x128xf32>
    %179 = arith.addf %177, %178 : vector<2x128xf32>
    %180 = vector.extract_strided_slice %169 {offsets = [0, 256], sizes = [2, 128], strides = [1, 1]} : vector<2x512xf32> to vector<2x128xf32>
    %181 = vector.extract_strided_slice %169 {offsets = [0, 384], sizes = [2, 128], strides = [1, 1]} : vector<2x512xf32> to vector<2x128xf32>
    %cst_64 = arith.constant 5.000000e-01 : f32
    %182 = vector.broadcast %cst_64 : f32 to vector<2x128xf32>
    %183 = arith.mulf %182, %181 : vector<2x128xf32>
    %cst_65 = arith.constant 5.000000e-01 : f32
    %184 = vector.broadcast %cst_65 : f32 to vector<2x128xf32>
    %185 = arith.addf %183, %184 : vector<2x128xf32>
    %186 = arith.mulf %179, %137 : vector<2x128xf32>
    %187 = arith.mulf %174, %180 : vector<2x128xf32>
    %188 = arith.addf %186, %187 : vector<2x128xf32>
    %189 = math.tanh %188 : vector<2x128xf32>
    %190 = arith.mulf %185, %189 : vector<2x128xf32>
    %191 = vector.extract_strided_slice %33 {offsets = [6, 0], sizes = [2, 512], strides = [1, 1]} : vector<24x512xf32> to vector<2x512xf32>
    %cst_66 = arith.constant dense<0.000000e+00> : vector<2x512xf32>
    %192 = tpu.matmul %164, %3, %cst_66 {dimension_numbers = #tpu.dot_dimension_numbers<[1], [0], [0], [1], [0, 0, 1, 1], [], []>} : vector<2x128xf32>, vector<128x512xf32>, vector<2x512xf32> -> vector<2x512xf32>
    %193 = arith.addf %191, %192 : vector<2x512xf32>
    %194 = math.tanh %193 : vector<2x512xf32>
    %195 = vector.extract_strided_slice %194 {offsets = [0, 0], sizes = [2, 128], strides = [1, 1]} : vector<2x512xf32> to vector<2x128xf32>
    %cst_67 = arith.constant 5.000000e-01 : f32
    %196 = vector.broadcast %cst_67 : f32 to vector<2x128xf32>
    %197 = arith.mulf %196, %195 : vector<2x128xf32>
    %cst_68 = arith.constant 5.000000e-01 : f32
    %198 = vector.broadcast %cst_68 : f32 to vector<2x128xf32>
    %199 = arith.addf %197, %198 : vector<2x128xf32>
    %200 = vector.extract_strided_slice %194 {offsets = [0, 128], sizes = [2, 128], strides = [1, 1]} : vector<2x512xf32> to vector<2x128xf32>
    %cst_69 = arith.constant 5.000000e-01 : f32
    %201 = vector.broadcast %cst_69 : f32 to vector<2x128xf32>
    %202 = arith.mulf %201, %200 : vector<2x128xf32>
    %cst_70 = arith.constant 5.000000e-01 : f32
    %203 = vector.broadcast %cst_70 : f32 to vector<2x128xf32>
    %204 = arith.addf %202, %203 : vector<2x128xf32>
    %205 = vector.extract_strided_slice %194 {offsets = [0, 256], sizes = [2, 128], strides = [1, 1]} : vector<2x512xf32> to vector<2x128xf32>
    %206 = vector.extract_strided_slice %194 {offsets = [0, 384], sizes = [2, 128], strides = [1, 1]} : vector<2x512xf32> to vector<2x128xf32>
    %cst_71 = arith.constant 5.000000e-01 : f32
    %207 = vector.broadcast %cst_71 : f32 to vector<2x128xf32>
    %208 = arith.mulf %207, %206 : vector<2x128xf32>
    %cst_72 = arith.constant 5.000000e-01 : f32
    %209 = vector.broadcast %cst_72 : f32 to vector<2x128xf32>
    %210 = arith.addf %208, %209 : vector<2x128xf32>
    %211 = arith.mulf %204, %162 : vector<2x128xf32>
    %212 = arith.mulf %199, %205 : vector<2x128xf32>
    %213 = arith.addf %211, %212 : vector<2x128xf32>
    %214 = math.tanh %213 : vector<2x128xf32>
    %215 = arith.mulf %210, %214 : vector<2x128xf32>
    %216 = tpu.concatenate %215, %190 in 1 : vector<2x128xf32>, vector<2x128xf32> -> vector<2x256xf32>
    %cst_73 = arith.constant dense<0.000000e+00> : vector<2x512xf32>
    %217 = tpu.matmul %216, %4, %cst_73 {dimension_numbers = #tpu.dot_dimension_numbers<[1], [0], [0], [1], [0, 0, 1, 1], [], []>} : vector<2x256xf32>, vector<256x512xf32>, vector<2x512xf32> -> vector<2x512xf32>
    %218 = vector.broadcast %5 : vector<1x512xf32> to vector<2x512xf32>
    %219 = arith.addf %217, %218 : vector<2x512xf32>
    %220 = math.tanh %219 : vector<2x512xf32>
    %221 = vector.extract_strided_slice %220 {offsets = [0, 0], sizes = [2, 128], strides = [1, 1]} : vector<2x512xf32> to vector<2x128xf32>
    %cst_74 = arith.constant 5.000000e-01 : f32
    %222 = vector.broadcast %cst_74 : f32 to vector<2x128xf32>
    %223 = arith.mulf %222, %221 : vector<2x128xf32>
    %cst_75 = arith.constant 5.000000e-01 : f32
    %224 = vector.broadcast %cst_75 : f32 to vector<2x128xf32>
    %225 = arith.addf %223, %224 : vector<2x128xf32>
    %226 = vector.extract_strided_slice %220 {offsets = [0, 128], sizes = [2, 128], strides = [1, 1]} : vector<2x512xf32> to vector<2x128xf32>
    %cst_76 = arith.constant 5.000000e-01 : f32
    %227 = vector.broadcast %cst_76 : f32 to vector<2x128xf32>
    %228 = arith.mulf %227, %226 : vector<2x128xf32>
    %cst_77 = arith.constant 5.000000e-01 : f32
    %229 = vector.broadcast %cst_77 : f32 to vector<2x128xf32>
    %230 = arith.addf %228, %229 : vector<2x128xf32>
    %231 = vector.extract_strided_slice %220 {offsets = [0, 256], sizes = [2, 128], strides = [1, 1]} : vector<2x512xf32> to vector<2x128xf32>
    %232 = vector.extract_strided_slice %220 {offsets = [0, 384], sizes = [2, 128], strides = [1, 1]} : vector<2x512xf32> to vector<2x128xf32>
    %cst_78 = arith.constant 5.000000e-01 : f32
    %233 = vector.broadcast %cst_78 : f32 to vector<2x128xf32>
    %234 = arith.mulf %233, %232 : vector<2x128xf32>
    %cst_79 = arith.constant 5.000000e-01 : f32
    %235 = vector.broadcast %cst_79 : f32 to vector<2x128xf32>
    %236 = arith.addf %234, %235 : vector<2x128xf32>
    %237 = arith.mulf %230, %188 : vector<2x128xf32>
    %238 = arith.mulf %225, %231 : vector<2x128xf32>
    %239 = arith.addf %237, %238 : vector<2x128xf32>
    %240 = math.tanh %239 : vector<2x128xf32>
    %241 = arith.mulf %236, %240 : vector<2x128xf32>
    %242 = vector.extract_strided_slice %33 {offsets = [8, 0], sizes = [2, 512], strides = [1, 1]} : vector<24x512xf32> to vector<2x512xf32>
    %cst_80 = arith.constant dense<0.000000e+00> : vector<2x512xf32>
    %243 = tpu.matmul %215, %3, %cst_80 {dimension_numbers = #tpu.dot_dimension_numbers<[1], [0], [0], [1], [0, 0, 1, 1], [], []>} : vector<2x128xf32>, vector<128x512xf32>, vector<2x512xf32> -> vector<2x512xf32>
    %244 = arith.addf %242, %243 : vector<2x512xf32>
    %245 = math.tanh %244 : vector<2x512xf32>
    %246 = vector.extract_strided_slice %245 {offsets = [0, 0], sizes = [2, 128], strides = [1, 1]} : vector<2x512xf32> to vector<2x128xf32>
    %cst_81 = arith.constant 5.000000e-01 : f32
    %247 = vector.broadcast %cst_81 : f32 to vector<2x128xf32>
    %248 = arith.mulf %247, %246 : vector<2x128xf32>
    %cst_82 = arith.constant 5.000000e-01 : f32
    %249 = vector.broadcast %cst_82 : f32 to vector<2x128xf32>
    %250 = arith.addf %248, %249 : vector<2x128xf32>
    %251 = vector.extract_strided_slice %245 {offsets = [0, 128], sizes = [2, 128], strides = [1, 1]} : vector<2x512xf32> to vector<2x128xf32>
    %cst_83 = arith.constant 5.000000e-01 : f32
    %252 = vector.broadcast %cst_83 : f32 to vector<2x128xf32>
    %253 = arith.mulf %252, %251 : vector<2x128xf32>
    %cst_84 = arith.constant 5.000000e-01 : f32
    %254 = vector.broadcast %cst_84 : f32 to vector<2x128xf32>
    %255 = arith.addf %253, %254 : vector<2x128xf32>
    %256 = vector.extract_strided_slice %245 {offsets = [0, 256], sizes = [2, 128], strides = [1, 1]} : vector<2x512xf32> to vector<2x128xf32>
    %257 = vector.extract_strided_slice %245 {offsets = [0, 384], sizes = [2, 128], strides = [1, 1]} : vector<2x512xf32> to vector<2x128xf32>
    %cst_85 = arith.constant 5.000000e-01 : f32
    %258 = vector.broadcast %cst_85 : f32 to vector<2x128xf32>
    %259 = arith.mulf %258, %257 : vector<2x128xf32>
    %cst_86 = arith.constant 5.000000e-01 : f32
    %260 = vector.broadcast %cst_86 : f32 to vector<2x128xf32>
    %261 = arith.addf %259, %260 : vector<2x128xf32>
    %262 = arith.mulf %255, %213 : vector<2x128xf32>
    %263 = arith.mulf %250, %256 : vector<2x128xf32>
    %264 = arith.addf %262, %263 : vector<2x128xf32>
    %265 = math.tanh %264 : vector<2x128xf32>
    %266 = arith.mulf %261, %265 : vector<2x128xf32>
    %267 = tpu.concatenate %266, %241 in 1 : vector<2x128xf32>, vector<2x128xf32> -> vector<2x256xf32>
    %cst_87 = arith.constant dense<0.000000e+00> : vector<2x512xf32>
    %268 = tpu.matmul %267, %4, %cst_87 {dimension_numbers = #tpu.dot_dimension_numbers<[1], [0], [0], [1], [0, 0, 1, 1], [], []>} : vector<2x256xf32>, vector<256x512xf32>, vector<2x512xf32> -> vector<2x512xf32>
    %269 = vector.broadcast %5 : vector<1x512xf32> to vector<2x512xf32>
    %270 = arith.addf %268, %269 : vector<2x512xf32>
    %271 = math.tanh %270 : vector<2x512xf32>
    %272 = vector.extract_strided_slice %271 {offsets = [0, 0], sizes = [2, 128], strides = [1, 1]} : vector<2x512xf32> to vector<2x128xf32>
    %cst_88 = arith.constant 5.000000e-01 : f32
    %273 = vector.broadcast %cst_88 : f32 to vector<2x128xf32>
    %274 = arith.mulf %273, %272 : vector<2x128xf32>
    %cst_89 = arith.constant 5.000000e-01 : f32
    %275 = vector.broadcast %cst_89 : f32 to vector<2x128xf32>
    %276 = arith.addf %274, %275 : vector<2x128xf32>
    %277 = vector.extract_strided_slice %271 {offsets = [0, 128], sizes = [2, 128], strides = [1, 1]} : vector<2x512xf32> to vector<2x128xf32>
    %cst_90 = arith.constant 5.000000e-01 : f32
    %278 = vector.broadcast %cst_90 : f32 to vector<2x128xf32>
    %279 = arith.mulf %278, %277 : vector<2x128xf32>
    %cst_91 = arith.constant 5.000000e-01 : f32
    %280 = vector.broadcast %cst_91 : f32 to vector<2x128xf32>
    %281 = arith.addf %279, %280 : vector<2x128xf32>
    %282 = vector.extract_strided_slice %271 {offsets = [0, 256], sizes = [2, 128], strides = [1, 1]} : vector<2x512xf32> to vector<2x128xf32>
    %283 = vector.extract_strided_slice %271 {offsets = [0, 384], sizes = [2, 128], strides = [1, 1]} : vector<2x512xf32> to vector<2x128xf32>
    %cst_92 = arith.constant 5.000000e-01 : f32
    %284 = vector.broadcast %cst_92 : f32 to vector<2x128xf32>
    %285 = arith.mulf %284, %283 : vector<2x128xf32>
    %cst_93 = arith.constant 5.000000e-01 : f32
    %286 = vector.broadcast %cst_93 : f32 to vector<2x128xf32>
    %287 = arith.addf %285, %286 : vector<2x128xf32>
    %288 = arith.mulf %281, %239 : vector<2x128xf32>
    %289 = arith.mulf %276, %282 : vector<2x128xf32>
    %290 = arith.addf %288, %289 : vector<2x128xf32>
    %291 = math.tanh %290 : vector<2x128xf32>
    %292 = arith.mulf %287, %291 : vector<2x128xf32>
    %293 = vector.extract_strided_slice %33 {offsets = [10, 0], sizes = [2, 512], strides = [1, 1]} : vector<24x512xf32> to vector<2x512xf32>
    %cst_94 = arith.constant dense<0.000000e+00> : vector<2x512xf32>
    %294 = tpu.matmul %266, %3, %cst_94 {dimension_numbers = #tpu.dot_dimension_numbers<[1], [0], [0], [1], [0, 0, 1, 1], [], []>} : vector<2x128xf32>, vector<128x512xf32>, vector<2x512xf32> -> vector<2x512xf32>
    %295 = arith.addf %293, %294 : vector<2x512xf32>
    %296 = math.tanh %295 : vector<2x512xf32>
    %297 = vector.extract_strided_slice %296 {offsets = [0, 0], sizes = [2, 128], strides = [1, 1]} : vector<2x512xf32> to vector<2x128xf32>
    %cst_95 = arith.constant 5.000000e-01 : f32
    %298 = vector.broadcast %cst_95 : f32 to vector<2x128xf32>
    %299 = arith.mulf %298, %297 : vector<2x128xf32>
    %cst_96 = arith.constant 5.000000e-01 : f32
    %300 = vector.broadcast %cst_96 : f32 to vector<2x128xf32>
    %301 = arith.addf %299, %300 : vector<2x128xf32>
    %302 = vector.extract_strided_slice %296 {offsets = [0, 128], sizes = [2, 128], strides = [1, 1]} : vector<2x512xf32> to vector<2x128xf32>
    %cst_97 = arith.constant 5.000000e-01 : f32
    %303 = vector.broadcast %cst_97 : f32 to vector<2x128xf32>
    %304 = arith.mulf %303, %302 : vector<2x128xf32>
    %cst_98 = arith.constant 5.000000e-01 : f32
    %305 = vector.broadcast %cst_98 : f32 to vector<2x128xf32>
    %306 = arith.addf %304, %305 : vector<2x128xf32>
    %307 = vector.extract_strided_slice %296 {offsets = [0, 256], sizes = [2, 128], strides = [1, 1]} : vector<2x512xf32> to vector<2x128xf32>
    %308 = vector.extract_strided_slice %296 {offsets = [0, 384], sizes = [2, 128], strides = [1, 1]} : vector<2x512xf32> to vector<2x128xf32>
    %cst_99 = arith.constant 5.000000e-01 : f32
    %309 = vector.broadcast %cst_99 : f32 to vector<2x128xf32>
    %310 = arith.mulf %309, %308 : vector<2x128xf32>
    %cst_100 = arith.constant 5.000000e-01 : f32
    %311 = vector.broadcast %cst_100 : f32 to vector<2x128xf32>
    %312 = arith.addf %310, %311 : vector<2x128xf32>
    %313 = arith.mulf %306, %264 : vector<2x128xf32>
    %314 = arith.mulf %301, %307 : vector<2x128xf32>
    %315 = arith.addf %313, %314 : vector<2x128xf32>
    %316 = math.tanh %315 : vector<2x128xf32>
    %317 = arith.mulf %312, %316 : vector<2x128xf32>
    %318 = tpu.concatenate %317, %292 in 1 : vector<2x128xf32>, vector<2x128xf32> -> vector<2x256xf32>
    %cst_101 = arith.constant dense<0.000000e+00> : vector<2x512xf32>
    %319 = tpu.matmul %318, %4, %cst_101 {dimension_numbers = #tpu.dot_dimension_numbers<[1], [0], [0], [1], [0, 0, 1, 1], [], []>} : vector<2x256xf32>, vector<256x512xf32>, vector<2x512xf32> -> vector<2x512xf32>
    %320 = vector.broadcast %5 : vector<1x512xf32> to vector<2x512xf32>
    %321 = arith.addf %319, %320 : vector<2x512xf32>
    %322 = math.tanh %321 : vector<2x512xf32>
    %323 = vector.extract_strided_slice %322 {offsets = [0, 0], sizes = [2, 128], strides = [1, 1]} : vector<2x512xf32> to vector<2x128xf32>
    %cst_102 = arith.constant 5.000000e-01 : f32
    %324 = vector.broadcast %cst_102 : f32 to vector<2x128xf32>
    %325 = arith.mulf %324, %323 : vector<2x128xf32>
    %cst_103 = arith.constant 5.000000e-01 : f32
    %326 = vector.broadcast %cst_103 : f32 to vector<2x128xf32>
    %327 = arith.addf %325, %326 : vector<2x128xf32>
    %328 = vector.extract_strided_slice %322 {offsets = [0, 128], sizes = [2, 128], strides = [1, 1]} : vector<2x512xf32> to vector<2x128xf32>
    %cst_104 = arith.constant 5.000000e-01 : f32
    %329 = vector.broadcast %cst_104 : f32 to vector<2x128xf32>
    %330 = arith.mulf %329, %328 : vector<2x128xf32>
    %cst_105 = arith.constant 5.000000e-01 : f32
    %331 = vector.broadcast %cst_105 : f32 to vector<2x128xf32>
    %332 = arith.addf %330, %331 : vector<2x128xf32>
    %333 = vector.extract_strided_slice %322 {offsets = [0, 256], sizes = [2, 128], strides = [1, 1]} : vector<2x512xf32> to vector<2x128xf32>
    %334 = vector.extract_strided_slice %322 {offsets = [0, 384], sizes = [2, 128], strides = [1, 1]} : vector<2x512xf32> to vector<2x128xf32>
    %cst_106 = arith.constant 5.000000e-01 : f32
    %335 = vector.broadcast %cst_106 : f32 to vector<2x128xf32>
    %336 = arith.mulf %335, %334 : vector<2x128xf32>
    %cst_107 = arith.constant 5.000000e-01 : f32
    %337 = vector.broadcast %cst_107 : f32 to vector<2x128xf32>
    %338 = arith.addf %336, %337 : vector<2x128xf32>
    %339 = arith.mulf %332, %290 : vector<2x128xf32>
    %340 = arith.mulf %327, %333 : vector<2x128xf32>
    %341 = arith.addf %339, %340 : vector<2x128xf32>
    %342 = math.tanh %341 : vector<2x128xf32>
    %343 = arith.mulf %338, %342 : vector<2x128xf32>
    %344 = vector.extract_strided_slice %33 {offsets = [12, 0], sizes = [2, 512], strides = [1, 1]} : vector<24x512xf32> to vector<2x512xf32>
    %cst_108 = arith.constant dense<0.000000e+00> : vector<2x512xf32>
    %345 = tpu.matmul %317, %3, %cst_108 {dimension_numbers = #tpu.dot_dimension_numbers<[1], [0], [0], [1], [0, 0, 1, 1], [], []>} : vector<2x128xf32>, vector<128x512xf32>, vector<2x512xf32> -> vector<2x512xf32>
    %346 = arith.addf %344, %345 : vector<2x512xf32>
    %347 = math.tanh %346 : vector<2x512xf32>
    %348 = vector.extract_strided_slice %347 {offsets = [0, 0], sizes = [2, 128], strides = [1, 1]} : vector<2x512xf32> to vector<2x128xf32>
    %cst_109 = arith.constant 5.000000e-01 : f32
    %349 = vector.broadcast %cst_109 : f32 to vector<2x128xf32>
    %350 = arith.mulf %349, %348 : vector<2x128xf32>
    %cst_110 = arith.constant 5.000000e-01 : f32
    %351 = vector.broadcast %cst_110 : f32 to vector<2x128xf32>
    %352 = arith.addf %350, %351 : vector<2x128xf32>
    %353 = vector.extract_strided_slice %347 {offsets = [0, 128], sizes = [2, 128], strides = [1, 1]} : vector<2x512xf32> to vector<2x128xf32>
    %cst_111 = arith.constant 5.000000e-01 : f32
    %354 = vector.broadcast %cst_111 : f32 to vector<2x128xf32>
    %355 = arith.mulf %354, %353 : vector<2x128xf32>
    %cst_112 = arith.constant 5.000000e-01 : f32
    %356 = vector.broadcast %cst_112 : f32 to vector<2x128xf32>
    %357 = arith.addf %355, %356 : vector<2x128xf32>
    %358 = vector.extract_strided_slice %347 {offsets = [0, 256], sizes = [2, 128], strides = [1, 1]} : vector<2x512xf32> to vector<2x128xf32>
    %359 = vector.extract_strided_slice %347 {offsets = [0, 384], sizes = [2, 128], strides = [1, 1]} : vector<2x512xf32> to vector<2x128xf32>
    %cst_113 = arith.constant 5.000000e-01 : f32
    %360 = vector.broadcast %cst_113 : f32 to vector<2x128xf32>
    %361 = arith.mulf %360, %359 : vector<2x128xf32>
    %cst_114 = arith.constant 5.000000e-01 : f32
    %362 = vector.broadcast %cst_114 : f32 to vector<2x128xf32>
    %363 = arith.addf %361, %362 : vector<2x128xf32>
    %364 = arith.mulf %357, %315 : vector<2x128xf32>
    %365 = arith.mulf %352, %358 : vector<2x128xf32>
    %366 = arith.addf %364, %365 : vector<2x128xf32>
    %367 = math.tanh %366 : vector<2x128xf32>
    %368 = arith.mulf %363, %367 : vector<2x128xf32>
    %369 = tpu.concatenate %368, %343 in 1 : vector<2x128xf32>, vector<2x128xf32> -> vector<2x256xf32>
    %cst_115 = arith.constant dense<0.000000e+00> : vector<2x512xf32>
    %370 = tpu.matmul %369, %4, %cst_115 {dimension_numbers = #tpu.dot_dimension_numbers<[1], [0], [0], [1], [0, 0, 1, 1], [], []>} : vector<2x256xf32>, vector<256x512xf32>, vector<2x512xf32> -> vector<2x512xf32>
    %371 = vector.broadcast %5 : vector<1x512xf32> to vector<2x512xf32>
    %372 = arith.addf %370, %371 : vector<2x512xf32>
    %373 = math.tanh %372 : vector<2x512xf32>
    %374 = vector.extract_strided_slice %373 {offsets = [0, 0], sizes = [2, 128], strides = [1, 1]} : vector<2x512xf32> to vector<2x128xf32>
    %cst_116 = arith.constant 5.000000e-01 : f32
    %375 = vector.broadcast %cst_116 : f32 to vector<2x128xf32>
    %376 = arith.mulf %375, %374 : vector<2x128xf32>
    %cst_117 = arith.constant 5.000000e-01 : f32
    %377 = vector.broadcast %cst_117 : f32 to vector<2x128xf32>
    %378 = arith.addf %376, %377 : vector<2x128xf32>
    %379 = vector.extract_strided_slice %373 {offsets = [0, 128], sizes = [2, 128], strides = [1, 1]} : vector<2x512xf32> to vector<2x128xf32>
    %cst_118 = arith.constant 5.000000e-01 : f32
    %380 = vector.broadcast %cst_118 : f32 to vector<2x128xf32>
    %381 = arith.mulf %380, %379 : vector<2x128xf32>
    %cst_119 = arith.constant 5.000000e-01 : f32
    %382 = vector.broadcast %cst_119 : f32 to vector<2x128xf32>
    %383 = arith.addf %381, %382 : vector<2x128xf32>
    %384 = vector.extract_strided_slice %373 {offsets = [0, 256], sizes = [2, 128], strides = [1, 1]} : vector<2x512xf32> to vector<2x128xf32>
    %385 = vector.extract_strided_slice %373 {offsets = [0, 384], sizes = [2, 128], strides = [1, 1]} : vector<2x512xf32> to vector<2x128xf32>
    %cst_120 = arith.constant 5.000000e-01 : f32
    %386 = vector.broadcast %cst_120 : f32 to vector<2x128xf32>
    %387 = arith.mulf %386, %385 : vector<2x128xf32>
    %cst_121 = arith.constant 5.000000e-01 : f32
    %388 = vector.broadcast %cst_121 : f32 to vector<2x128xf32>
    %389 = arith.addf %387, %388 : vector<2x128xf32>
    %390 = arith.mulf %383, %341 : vector<2x128xf32>
    %391 = arith.mulf %378, %384 : vector<2x128xf32>
    %392 = arith.addf %390, %391 : vector<2x128xf32>
    %393 = math.tanh %392 : vector<2x128xf32>
    %394 = arith.mulf %389, %393 : vector<2x128xf32>
    %395 = vector.extract_strided_slice %33 {offsets = [14, 0], sizes = [2, 512], strides = [1, 1]} : vector<24x512xf32> to vector<2x512xf32>
    %cst_122 = arith.constant dense<0.000000e+00> : vector<2x512xf32>
    %396 = tpu.matmul %368, %3, %cst_122 {dimension_numbers = #tpu.dot_dimension_numbers<[1], [0], [0], [1], [0, 0, 1, 1], [], []>} : vector<2x128xf32>, vector<128x512xf32>, vector<2x512xf32> -> vector<2x512xf32>
    %397 = arith.addf %395, %396 : vector<2x512xf32>
    %398 = math.tanh %397 : vector<2x512xf32>
    %399 = vector.extract_strided_slice %398 {offsets = [0, 0], sizes = [2, 128], strides = [1, 1]} : vector<2x512xf32> to vector<2x128xf32>
    %cst_123 = arith.constant 5.000000e-01 : f32
    %400 = vector.broadcast %cst_123 : f32 to vector<2x128xf32>
    %401 = arith.mulf %400, %399 : vector<2x128xf32>
    %cst_124 = arith.constant 5.000000e-01 : f32
    %402 = vector.broadcast %cst_124 : f32 to vector<2x128xf32>
    %403 = arith.addf %401, %402 : vector<2x128xf32>
    %404 = vector.extract_strided_slice %398 {offsets = [0, 128], sizes = [2, 128], strides = [1, 1]} : vector<2x512xf32> to vector<2x128xf32>
    %cst_125 = arith.constant 5.000000e-01 : f32
    %405 = vector.broadcast %cst_125 : f32 to vector<2x128xf32>
    %406 = arith.mulf %405, %404 : vector<2x128xf32>
    %cst_126 = arith.constant 5.000000e-01 : f32
    %407 = vector.broadcast %cst_126 : f32 to vector<2x128xf32>
    %408 = arith.addf %406, %407 : vector<2x128xf32>
    %409 = vector.extract_strided_slice %398 {offsets = [0, 256], sizes = [2, 128], strides = [1, 1]} : vector<2x512xf32> to vector<2x128xf32>
    %410 = vector.extract_strided_slice %398 {offsets = [0, 384], sizes = [2, 128], strides = [1, 1]} : vector<2x512xf32> to vector<2x128xf32>
    %cst_127 = arith.constant 5.000000e-01 : f32
    %411 = vector.broadcast %cst_127 : f32 to vector<2x128xf32>
    %412 = arith.mulf %411, %410 : vector<2x128xf32>
    %cst_128 = arith.constant 5.000000e-01 : f32
    %413 = vector.broadcast %cst_128 : f32 to vector<2x128xf32>
    %414 = arith.addf %412, %413 : vector<2x128xf32>
    %415 = arith.mulf %408, %366 : vector<2x128xf32>
    %416 = arith.mulf %403, %409 : vector<2x128xf32>
    %417 = arith.addf %415, %416 : vector<2x128xf32>
    %418 = math.tanh %417 : vector<2x128xf32>
    %419 = arith.mulf %414, %418 : vector<2x128xf32>
    %420 = tpu.concatenate %419, %394 in 1 : vector<2x128xf32>, vector<2x128xf32> -> vector<2x256xf32>
    %cst_129 = arith.constant dense<0.000000e+00> : vector<2x512xf32>
    %421 = tpu.matmul %420, %4, %cst_129 {dimension_numbers = #tpu.dot_dimension_numbers<[1], [0], [0], [1], [0, 0, 1, 1], [], []>} : vector<2x256xf32>, vector<256x512xf32>, vector<2x512xf32> -> vector<2x512xf32>
    %422 = vector.broadcast %5 : vector<1x512xf32> to vector<2x512xf32>
    %423 = arith.addf %421, %422 : vector<2x512xf32>
    %424 = math.tanh %423 : vector<2x512xf32>
    %425 = vector.extract_strided_slice %424 {offsets = [0, 0], sizes = [2, 128], strides = [1, 1]} : vector<2x512xf32> to vector<2x128xf32>
    %cst_130 = arith.constant 5.000000e-01 : f32
    %426 = vector.broadcast %cst_130 : f32 to vector<2x128xf32>
    %427 = arith.mulf %426, %425 : vector<2x128xf32>
    %cst_131 = arith.constant 5.000000e-01 : f32
    %428 = vector.broadcast %cst_131 : f32 to vector<2x128xf32>
    %429 = arith.addf %427, %428 : vector<2x128xf32>
    %430 = vector.extract_strided_slice %424 {offsets = [0, 128], sizes = [2, 128], strides = [1, 1]} : vector<2x512xf32> to vector<2x128xf32>
    %cst_132 = arith.constant 5.000000e-01 : f32
    %431 = vector.broadcast %cst_132 : f32 to vector<2x128xf32>
    %432 = arith.mulf %431, %430 : vector<2x128xf32>
    %cst_133 = arith.constant 5.000000e-01 : f32
    %433 = vector.broadcast %cst_133 : f32 to vector<2x128xf32>
    %434 = arith.addf %432, %433 : vector<2x128xf32>
    %435 = vector.extract_strided_slice %424 {offsets = [0, 256], sizes = [2, 128], strides = [1, 1]} : vector<2x512xf32> to vector<2x128xf32>
    %436 = vector.extract_strided_slice %424 {offsets = [0, 384], sizes = [2, 128], strides = [1, 1]} : vector<2x512xf32> to vector<2x128xf32>
    %cst_134 = arith.constant 5.000000e-01 : f32
    %437 = vector.broadcast %cst_134 : f32 to vector<2x128xf32>
    %438 = arith.mulf %437, %436 : vector<2x128xf32>
    %cst_135 = arith.constant 5.000000e-01 : f32
    %439 = vector.broadcast %cst_135 : f32 to vector<2x128xf32>
    %440 = arith.addf %438, %439 : vector<2x128xf32>
    %441 = arith.mulf %434, %392 : vector<2x128xf32>
    %442 = arith.mulf %429, %435 : vector<2x128xf32>
    %443 = arith.addf %441, %442 : vector<2x128xf32>
    %444 = math.tanh %443 : vector<2x128xf32>
    %445 = arith.mulf %440, %444 : vector<2x128xf32>
    %446 = vector.extract_strided_slice %33 {offsets = [16, 0], sizes = [2, 512], strides = [1, 1]} : vector<24x512xf32> to vector<2x512xf32>
    %cst_136 = arith.constant dense<0.000000e+00> : vector<2x512xf32>
    %447 = tpu.matmul %419, %3, %cst_136 {dimension_numbers = #tpu.dot_dimension_numbers<[1], [0], [0], [1], [0, 0, 1, 1], [], []>} : vector<2x128xf32>, vector<128x512xf32>, vector<2x512xf32> -> vector<2x512xf32>
    %448 = arith.addf %446, %447 : vector<2x512xf32>
    %449 = math.tanh %448 : vector<2x512xf32>
    %450 = vector.extract_strided_slice %449 {offsets = [0, 0], sizes = [2, 128], strides = [1, 1]} : vector<2x512xf32> to vector<2x128xf32>
    %cst_137 = arith.constant 5.000000e-01 : f32
    %451 = vector.broadcast %cst_137 : f32 to vector<2x128xf32>
    %452 = arith.mulf %451, %450 : vector<2x128xf32>
    %cst_138 = arith.constant 5.000000e-01 : f32
    %453 = vector.broadcast %cst_138 : f32 to vector<2x128xf32>
    %454 = arith.addf %452, %453 : vector<2x128xf32>
    %455 = vector.extract_strided_slice %449 {offsets = [0, 128], sizes = [2, 128], strides = [1, 1]} : vector<2x512xf32> to vector<2x128xf32>
    %cst_139 = arith.constant 5.000000e-01 : f32
    %456 = vector.broadcast %cst_139 : f32 to vector<2x128xf32>
    %457 = arith.mulf %456, %455 : vector<2x128xf32>
    %cst_140 = arith.constant 5.000000e-01 : f32
    %458 = vector.broadcast %cst_140 : f32 to vector<2x128xf32>
    %459 = arith.addf %457, %458 : vector<2x128xf32>
    %460 = vector.extract_strided_slice %449 {offsets = [0, 256], sizes = [2, 128], strides = [1, 1]} : vector<2x512xf32> to vector<2x128xf32>
    %461 = vector.extract_strided_slice %449 {offsets = [0, 384], sizes = [2, 128], strides = [1, 1]} : vector<2x512xf32> to vector<2x128xf32>
    %cst_141 = arith.constant 5.000000e-01 : f32
    %462 = vector.broadcast %cst_141 : f32 to vector<2x128xf32>
    %463 = arith.mulf %462, %461 : vector<2x128xf32>
    %cst_142 = arith.constant 5.000000e-01 : f32
    %464 = vector.broadcast %cst_142 : f32 to vector<2x128xf32>
    %465 = arith.addf %463, %464 : vector<2x128xf32>
    %466 = arith.mulf %459, %417 : vector<2x128xf32>
    %467 = arith.mulf %454, %460 : vector<2x128xf32>
    %468 = arith.addf %466, %467 : vector<2x128xf32>
    %469 = math.tanh %468 : vector<2x128xf32>
    %470 = arith.mulf %465, %469 : vector<2x128xf32>
    %471 = tpu.concatenate %470, %445 in 1 : vector<2x128xf32>, vector<2x128xf32> -> vector<2x256xf32>
    %cst_143 = arith.constant dense<0.000000e+00> : vector<2x512xf32>
    %472 = tpu.matmul %471, %4, %cst_143 {dimension_numbers = #tpu.dot_dimension_numbers<[1], [0], [0], [1], [0, 0, 1, 1], [], []>} : vector<2x256xf32>, vector<256x512xf32>, vector<2x512xf32> -> vector<2x512xf32>
    %473 = vector.broadcast %5 : vector<1x512xf32> to vector<2x512xf32>
    %474 = arith.addf %472, %473 : vector<2x512xf32>
    %475 = math.tanh %474 : vector<2x512xf32>
    %476 = vector.extract_strided_slice %475 {offsets = [0, 0], sizes = [2, 128], strides = [1, 1]} : vector<2x512xf32> to vector<2x128xf32>
    %cst_144 = arith.constant 5.000000e-01 : f32
    %477 = vector.broadcast %cst_144 : f32 to vector<2x128xf32>
    %478 = arith.mulf %477, %476 : vector<2x128xf32>
    %cst_145 = arith.constant 5.000000e-01 : f32
    %479 = vector.broadcast %cst_145 : f32 to vector<2x128xf32>
    %480 = arith.addf %478, %479 : vector<2x128xf32>
    %481 = vector.extract_strided_slice %475 {offsets = [0, 128], sizes = [2, 128], strides = [1, 1]} : vector<2x512xf32> to vector<2x128xf32>
    %cst_146 = arith.constant 5.000000e-01 : f32
    %482 = vector.broadcast %cst_146 : f32 to vector<2x128xf32>
    %483 = arith.mulf %482, %481 : vector<2x128xf32>
    %cst_147 = arith.constant 5.000000e-01 : f32
    %484 = vector.broadcast %cst_147 : f32 to vector<2x128xf32>
    %485 = arith.addf %483, %484 : vector<2x128xf32>
    %486 = vector.extract_strided_slice %475 {offsets = [0, 256], sizes = [2, 128], strides = [1, 1]} : vector<2x512xf32> to vector<2x128xf32>
    %487 = vector.extract_strided_slice %475 {offsets = [0, 384], sizes = [2, 128], strides = [1, 1]} : vector<2x512xf32> to vector<2x128xf32>
    %cst_148 = arith.constant 5.000000e-01 : f32
    %488 = vector.broadcast %cst_148 : f32 to vector<2x128xf32>
    %489 = arith.mulf %488, %487 : vector<2x128xf32>
    %cst_149 = arith.constant 5.000000e-01 : f32
    %490 = vector.broadcast %cst_149 : f32 to vector<2x128xf32>
    %491 = arith.addf %489, %490 : vector<2x128xf32>
    %492 = arith.mulf %485, %443 : vector<2x128xf32>
    %493 = arith.mulf %480, %486 : vector<2x128xf32>
    %494 = arith.addf %492, %493 : vector<2x128xf32>
    %495 = math.tanh %494 : vector<2x128xf32>
    %496 = arith.mulf %491, %495 : vector<2x128xf32>
    %497 = vector.extract_strided_slice %33 {offsets = [18, 0], sizes = [2, 512], strides = [1, 1]} : vector<24x512xf32> to vector<2x512xf32>
    %cst_150 = arith.constant dense<0.000000e+00> : vector<2x512xf32>
    %498 = tpu.matmul %470, %3, %cst_150 {dimension_numbers = #tpu.dot_dimension_numbers<[1], [0], [0], [1], [0, 0, 1, 1], [], []>} : vector<2x128xf32>, vector<128x512xf32>, vector<2x512xf32> -> vector<2x512xf32>
    %499 = arith.addf %497, %498 : vector<2x512xf32>
    %500 = math.tanh %499 : vector<2x512xf32>
    %501 = vector.extract_strided_slice %500 {offsets = [0, 0], sizes = [2, 128], strides = [1, 1]} : vector<2x512xf32> to vector<2x128xf32>
    %cst_151 = arith.constant 5.000000e-01 : f32
    %502 = vector.broadcast %cst_151 : f32 to vector<2x128xf32>
    %503 = arith.mulf %502, %501 : vector<2x128xf32>
    %cst_152 = arith.constant 5.000000e-01 : f32
    %504 = vector.broadcast %cst_152 : f32 to vector<2x128xf32>
    %505 = arith.addf %503, %504 : vector<2x128xf32>
    %506 = vector.extract_strided_slice %500 {offsets = [0, 128], sizes = [2, 128], strides = [1, 1]} : vector<2x512xf32> to vector<2x128xf32>
    %cst_153 = arith.constant 5.000000e-01 : f32
    %507 = vector.broadcast %cst_153 : f32 to vector<2x128xf32>
    %508 = arith.mulf %507, %506 : vector<2x128xf32>
    %cst_154 = arith.constant 5.000000e-01 : f32
    %509 = vector.broadcast %cst_154 : f32 to vector<2x128xf32>
    %510 = arith.addf %508, %509 : vector<2x128xf32>
    %511 = vector.extract_strided_slice %500 {offsets = [0, 256], sizes = [2, 128], strides = [1, 1]} : vector<2x512xf32> to vector<2x128xf32>
    %512 = vector.extract_strided_slice %500 {offsets = [0, 384], sizes = [2, 128], strides = [1, 1]} : vector<2x512xf32> to vector<2x128xf32>
    %cst_155 = arith.constant 5.000000e-01 : f32
    %513 = vector.broadcast %cst_155 : f32 to vector<2x128xf32>
    %514 = arith.mulf %513, %512 : vector<2x128xf32>
    %cst_156 = arith.constant 5.000000e-01 : f32
    %515 = vector.broadcast %cst_156 : f32 to vector<2x128xf32>
    %516 = arith.addf %514, %515 : vector<2x128xf32>
    %517 = arith.mulf %510, %468 : vector<2x128xf32>
    %518 = arith.mulf %505, %511 : vector<2x128xf32>
    %519 = arith.addf %517, %518 : vector<2x128xf32>
    %520 = math.tanh %519 : vector<2x128xf32>
    %521 = arith.mulf %516, %520 : vector<2x128xf32>
    %522 = tpu.concatenate %521, %496 in 1 : vector<2x128xf32>, vector<2x128xf32> -> vector<2x256xf32>
    %cst_157 = arith.constant dense<0.000000e+00> : vector<2x512xf32>
    %523 = tpu.matmul %522, %4, %cst_157 {dimension_numbers = #tpu.dot_dimension_numbers<[1], [0], [0], [1], [0, 0, 1, 1], [], []>} : vector<2x256xf32>, vector<256x512xf32>, vector<2x512xf32> -> vector<2x512xf32>
    %524 = vector.broadcast %5 : vector<1x512xf32> to vector<2x512xf32>
    %525 = arith.addf %523, %524 : vector<2x512xf32>
    %526 = math.tanh %525 : vector<2x512xf32>
    %527 = vector.extract_strided_slice %526 {offsets = [0, 0], sizes = [2, 128], strides = [1, 1]} : vector<2x512xf32> to vector<2x128xf32>
    %cst_158 = arith.constant 5.000000e-01 : f32
    %528 = vector.broadcast %cst_158 : f32 to vector<2x128xf32>
    %529 = arith.mulf %528, %527 : vector<2x128xf32>
    %cst_159 = arith.constant 5.000000e-01 : f32
    %530 = vector.broadcast %cst_159 : f32 to vector<2x128xf32>
    %531 = arith.addf %529, %530 : vector<2x128xf32>
    %532 = vector.extract_strided_slice %526 {offsets = [0, 128], sizes = [2, 128], strides = [1, 1]} : vector<2x512xf32> to vector<2x128xf32>
    %cst_160 = arith.constant 5.000000e-01 : f32
    %533 = vector.broadcast %cst_160 : f32 to vector<2x128xf32>
    %534 = arith.mulf %533, %532 : vector<2x128xf32>
    %cst_161 = arith.constant 5.000000e-01 : f32
    %535 = vector.broadcast %cst_161 : f32 to vector<2x128xf32>
    %536 = arith.addf %534, %535 : vector<2x128xf32>
    %537 = vector.extract_strided_slice %526 {offsets = [0, 256], sizes = [2, 128], strides = [1, 1]} : vector<2x512xf32> to vector<2x128xf32>
    %538 = vector.extract_strided_slice %526 {offsets = [0, 384], sizes = [2, 128], strides = [1, 1]} : vector<2x512xf32> to vector<2x128xf32>
    %cst_162 = arith.constant 5.000000e-01 : f32
    %539 = vector.broadcast %cst_162 : f32 to vector<2x128xf32>
    %540 = arith.mulf %539, %538 : vector<2x128xf32>
    %cst_163 = arith.constant 5.000000e-01 : f32
    %541 = vector.broadcast %cst_163 : f32 to vector<2x128xf32>
    %542 = arith.addf %540, %541 : vector<2x128xf32>
    %543 = arith.mulf %536, %494 : vector<2x128xf32>
    %544 = arith.mulf %531, %537 : vector<2x128xf32>
    %545 = arith.addf %543, %544 : vector<2x128xf32>
    %546 = math.tanh %545 : vector<2x128xf32>
    %547 = arith.mulf %542, %546 : vector<2x128xf32>
    %548 = vector.extract_strided_slice %33 {offsets = [20, 0], sizes = [2, 512], strides = [1, 1]} : vector<24x512xf32> to vector<2x512xf32>
    %cst_164 = arith.constant dense<0.000000e+00> : vector<2x512xf32>
    %549 = tpu.matmul %521, %3, %cst_164 {dimension_numbers = #tpu.dot_dimension_numbers<[1], [0], [0], [1], [0, 0, 1, 1], [], []>} : vector<2x128xf32>, vector<128x512xf32>, vector<2x512xf32> -> vector<2x512xf32>
    %550 = arith.addf %548, %549 : vector<2x512xf32>
    %551 = math.tanh %550 : vector<2x512xf32>
    %552 = vector.extract_strided_slice %551 {offsets = [0, 0], sizes = [2, 128], strides = [1, 1]} : vector<2x512xf32> to vector<2x128xf32>
    %cst_165 = arith.constant 5.000000e-01 : f32
    %553 = vector.broadcast %cst_165 : f32 to vector<2x128xf32>
    %554 = arith.mulf %553, %552 : vector<2x128xf32>
    %cst_166 = arith.constant 5.000000e-01 : f32
    %555 = vector.broadcast %cst_166 : f32 to vector<2x128xf32>
    %556 = arith.addf %554, %555 : vector<2x128xf32>
    %557 = vector.extract_strided_slice %551 {offsets = [0, 128], sizes = [2, 128], strides = [1, 1]} : vector<2x512xf32> to vector<2x128xf32>
    %cst_167 = arith.constant 5.000000e-01 : f32
    %558 = vector.broadcast %cst_167 : f32 to vector<2x128xf32>
    %559 = arith.mulf %558, %557 : vector<2x128xf32>
    %cst_168 = arith.constant 5.000000e-01 : f32
    %560 = vector.broadcast %cst_168 : f32 to vector<2x128xf32>
    %561 = arith.addf %559, %560 : vector<2x128xf32>
    %562 = vector.extract_strided_slice %551 {offsets = [0, 256], sizes = [2, 128], strides = [1, 1]} : vector<2x512xf32> to vector<2x128xf32>
    %563 = vector.extract_strided_slice %551 {offsets = [0, 384], sizes = [2, 128], strides = [1, 1]} : vector<2x512xf32> to vector<2x128xf32>
    %cst_169 = arith.constant 5.000000e-01 : f32
    %564 = vector.broadcast %cst_169 : f32 to vector<2x128xf32>
    %565 = arith.mulf %564, %563 : vector<2x128xf32>
    %cst_170 = arith.constant 5.000000e-01 : f32
    %566 = vector.broadcast %cst_170 : f32 to vector<2x128xf32>
    %567 = arith.addf %565, %566 : vector<2x128xf32>
    %568 = arith.mulf %561, %519 : vector<2x128xf32>
    %569 = arith.mulf %556, %562 : vector<2x128xf32>
    %570 = arith.addf %568, %569 : vector<2x128xf32>
    %571 = math.tanh %570 : vector<2x128xf32>
    %572 = arith.mulf %567, %571 : vector<2x128xf32>
    %573 = tpu.concatenate %572, %547 in 1 : vector<2x128xf32>, vector<2x128xf32> -> vector<2x256xf32>
    %cst_171 = arith.constant dense<0.000000e+00> : vector<2x512xf32>
    %574 = tpu.matmul %573, %4, %cst_171 {dimension_numbers = #tpu.dot_dimension_numbers<[1], [0], [0], [1], [0, 0, 1, 1], [], []>} : vector<2x256xf32>, vector<256x512xf32>, vector<2x512xf32> -> vector<2x512xf32>
    %575 = vector.broadcast %5 : vector<1x512xf32> to vector<2x512xf32>
    %576 = arith.addf %574, %575 : vector<2x512xf32>
    %577 = math.tanh %576 : vector<2x512xf32>
    %578 = vector.extract_strided_slice %577 {offsets = [0, 0], sizes = [2, 128], strides = [1, 1]} : vector<2x512xf32> to vector<2x128xf32>
    %cst_172 = arith.constant 5.000000e-01 : f32
    %579 = vector.broadcast %cst_172 : f32 to vector<2x128xf32>
    %580 = arith.mulf %579, %578 : vector<2x128xf32>
    %cst_173 = arith.constant 5.000000e-01 : f32
    %581 = vector.broadcast %cst_173 : f32 to vector<2x128xf32>
    %582 = arith.addf %580, %581 : vector<2x128xf32>
    %583 = vector.extract_strided_slice %577 {offsets = [0, 128], sizes = [2, 128], strides = [1, 1]} : vector<2x512xf32> to vector<2x128xf32>
    %cst_174 = arith.constant 5.000000e-01 : f32
    %584 = vector.broadcast %cst_174 : f32 to vector<2x128xf32>
    %585 = arith.mulf %584, %583 : vector<2x128xf32>
    %cst_175 = arith.constant 5.000000e-01 : f32
    %586 = vector.broadcast %cst_175 : f32 to vector<2x128xf32>
    %587 = arith.addf %585, %586 : vector<2x128xf32>
    %588 = vector.extract_strided_slice %577 {offsets = [0, 256], sizes = [2, 128], strides = [1, 1]} : vector<2x512xf32> to vector<2x128xf32>
    %589 = vector.extract_strided_slice %577 {offsets = [0, 384], sizes = [2, 128], strides = [1, 1]} : vector<2x512xf32> to vector<2x128xf32>
    %cst_176 = arith.constant 5.000000e-01 : f32
    %590 = vector.broadcast %cst_176 : f32 to vector<2x128xf32>
    %591 = arith.mulf %590, %589 : vector<2x128xf32>
    %cst_177 = arith.constant 5.000000e-01 : f32
    %592 = vector.broadcast %cst_177 : f32 to vector<2x128xf32>
    %593 = arith.addf %591, %592 : vector<2x128xf32>
    %594 = arith.mulf %587, %545 : vector<2x128xf32>
    %595 = arith.mulf %582, %588 : vector<2x128xf32>
    %596 = arith.addf %594, %595 : vector<2x128xf32>
    %597 = math.tanh %596 : vector<2x128xf32>
    %598 = arith.mulf %593, %597 : vector<2x128xf32>
    %599 = vector.extract_strided_slice %33 {offsets = [22, 0], sizes = [2, 512], strides = [1, 1]} : vector<24x512xf32> to vector<2x512xf32>
    %cst_178 = arith.constant dense<0.000000e+00> : vector<2x512xf32>
    %600 = tpu.matmul %572, %3, %cst_178 {dimension_numbers = #tpu.dot_dimension_numbers<[1], [0], [0], [1], [0, 0, 1, 1], [], []>} : vector<2x128xf32>, vector<128x512xf32>, vector<2x512xf32> -> vector<2x512xf32>
    %601 = arith.addf %599, %600 : vector<2x512xf32>
    %602 = math.tanh %601 : vector<2x512xf32>
    %603 = vector.extract_strided_slice %602 {offsets = [0, 0], sizes = [2, 128], strides = [1, 1]} : vector<2x512xf32> to vector<2x128xf32>
    %cst_179 = arith.constant 5.000000e-01 : f32
    %604 = vector.broadcast %cst_179 : f32 to vector<2x128xf32>
    %605 = arith.mulf %604, %603 : vector<2x128xf32>
    %cst_180 = arith.constant 5.000000e-01 : f32
    %606 = vector.broadcast %cst_180 : f32 to vector<2x128xf32>
    %607 = arith.addf %605, %606 : vector<2x128xf32>
    %608 = vector.extract_strided_slice %602 {offsets = [0, 128], sizes = [2, 128], strides = [1, 1]} : vector<2x512xf32> to vector<2x128xf32>
    %cst_181 = arith.constant 5.000000e-01 : f32
    %609 = vector.broadcast %cst_181 : f32 to vector<2x128xf32>
    %610 = arith.mulf %609, %608 : vector<2x128xf32>
    %cst_182 = arith.constant 5.000000e-01 : f32
    %611 = vector.broadcast %cst_182 : f32 to vector<2x128xf32>
    %612 = arith.addf %610, %611 : vector<2x128xf32>
    %613 = vector.extract_strided_slice %602 {offsets = [0, 256], sizes = [2, 128], strides = [1, 1]} : vector<2x512xf32> to vector<2x128xf32>
    %614 = vector.extract_strided_slice %602 {offsets = [0, 384], sizes = [2, 128], strides = [1, 1]} : vector<2x512xf32> to vector<2x128xf32>
    %cst_183 = arith.constant 5.000000e-01 : f32
    %615 = vector.broadcast %cst_183 : f32 to vector<2x128xf32>
    %616 = arith.mulf %615, %614 : vector<2x128xf32>
    %cst_184 = arith.constant 5.000000e-01 : f32
    %617 = vector.broadcast %cst_184 : f32 to vector<2x128xf32>
    %618 = arith.addf %616, %617 : vector<2x128xf32>
    %619 = arith.mulf %612, %570 : vector<2x128xf32>
    %620 = arith.mulf %607, %613 : vector<2x128xf32>
    %621 = arith.addf %619, %620 : vector<2x128xf32>
    %622 = math.tanh %621 : vector<2x128xf32>
    %623 = arith.mulf %618, %622 : vector<2x128xf32>
    %624 = tpu.concatenate %623, %598 in 1 : vector<2x128xf32>, vector<2x128xf32> -> vector<2x256xf32>
    %cst_185 = arith.constant dense<0.000000e+00> : vector<2x512xf32>
    %625 = tpu.matmul %624, %4, %cst_185 {dimension_numbers = #tpu.dot_dimension_numbers<[1], [0], [0], [1], [0, 0, 1, 1], [], []>} : vector<2x256xf32>, vector<256x512xf32>, vector<2x512xf32> -> vector<2x512xf32>
    %626 = vector.broadcast %5 : vector<1x512xf32> to vector<2x512xf32>
    %627 = arith.addf %625, %626 : vector<2x512xf32>
    %628 = math.tanh %627 : vector<2x512xf32>
    %629 = vector.extract_strided_slice %628 {offsets = [0, 0], sizes = [2, 128], strides = [1, 1]} : vector<2x512xf32> to vector<2x128xf32>
    %cst_186 = arith.constant 5.000000e-01 : f32
    %630 = vector.broadcast %cst_186 : f32 to vector<2x128xf32>
    %631 = arith.mulf %630, %629 : vector<2x128xf32>
    %cst_187 = arith.constant 5.000000e-01 : f32
    %632 = vector.broadcast %cst_187 : f32 to vector<2x128xf32>
    %633 = arith.addf %631, %632 : vector<2x128xf32>
    %634 = vector.extract_strided_slice %628 {offsets = [0, 128], sizes = [2, 128], strides = [1, 1]} : vector<2x512xf32> to vector<2x128xf32>
    %cst_188 = arith.constant 5.000000e-01 : f32
    %635 = vector.broadcast %cst_188 : f32 to vector<2x128xf32>
    %636 = arith.mulf %635, %634 : vector<2x128xf32>
    %cst_189 = arith.constant 5.000000e-01 : f32
    %637 = vector.broadcast %cst_189 : f32 to vector<2x128xf32>
    %638 = arith.addf %636, %637 : vector<2x128xf32>
    %639 = vector.extract_strided_slice %628 {offsets = [0, 256], sizes = [2, 128], strides = [1, 1]} : vector<2x512xf32> to vector<2x128xf32>
    %640 = vector.extract_strided_slice %628 {offsets = [0, 384], sizes = [2, 128], strides = [1, 1]} : vector<2x512xf32> to vector<2x128xf32>
    %cst_190 = arith.constant 5.000000e-01 : f32
    %641 = vector.broadcast %cst_190 : f32 to vector<2x128xf32>
    %642 = arith.mulf %641, %640 : vector<2x128xf32>
    %cst_191 = arith.constant 5.000000e-01 : f32
    %643 = vector.broadcast %cst_191 : f32 to vector<2x128xf32>
    %644 = arith.addf %642, %643 : vector<2x128xf32>
    %645 = arith.mulf %638, %596 : vector<2x128xf32>
    %646 = arith.mulf %633, %639 : vector<2x128xf32>
    %647 = arith.addf %645, %646 : vector<2x128xf32>
    %648 = math.tanh %647 : vector<2x128xf32>
    %649 = arith.mulf %644, %648 : vector<2x128xf32>
    %c0_192 = arith.constant 0 : index
    %c0_193 = arith.constant 0 : index
    %650 = vector.load %arg9[%c0_192, %c0_193] : memref<128x8xf32, #tpu.memory_space<vmem>>, vector<128x8xf32>
    %cst_194 = arith.constant dense<0.000000e+00> : vector<2x8xf32>
    %651 = tpu.matmul %649, %650, %cst_194 {dimension_numbers = #tpu.dot_dimension_numbers<[1], [0], [0], [1], [0, 0, 1, 1], [], []>} : vector<2x128xf32>, vector<128x8xf32>, vector<2x8xf32> -> vector<2x8xf32>
    %c0_195 = arith.constant 0 : index
    %c0_196 = arith.constant 0 : index
    %652 = vector.load %arg10[%c0_195, %c0_196] : memref<1x8xf32, #tpu.memory_space<vmem>>, vector<1x8xf32>
    %653 = vector.broadcast %652 : vector<1x8xf32> to vector<2x8xf32>
    %654 = arith.addf %651, %653 : vector<2x8xf32>
    %c0_197 = arith.constant 0 : index
    %c0_198 = arith.constant 0 : index
    %655 = vector.load %arg11[%c0_197, %c0_198] : memref<2x8xf32, #tpu.memory_space<vmem>>, vector<2x8xf32>
    tpu.vector_store %arg11[%c0_197, %c0_198], %654 {strides = array<i32>} : memref<2x8xf32, #tpu.memory_space<vmem>>, vector<2x8xf32>,
    return
  }
  func.func @transform_0(%arg0: i32) -> (i32, i32) {
    %c0_i32 = arith.constant 0 : i32
    %c0_i32_0 = arith.constant 0 : i32
    %c0_i32_1 = arith.constant 0 : i32
    return %c0_i32, %c0_i32_0 : i32, i32
  }
  func.func @transform_1(%arg0: i32) -> (i32, i32, i32) {
    %c0_i32 = arith.constant 0 : i32
    %c0_i32_0 = arith.constant 0 : i32
    %c0_i32_1 = arith.constant 0 : i32
    %c0_i32_2 = arith.constant 0 : i32
    return %c0_i32, %c0_i32_0, %c0_i32_1 : i32, i32, i32
  }
  func.func @transform_2(%arg0: i32) -> (i32, i32) {
    %c0_i32 = arith.constant 0 : i32
    %c0_i32_0 = arith.constant 0 : i32
    %c0_i32_1 = arith.constant 0 : i32
    return %c0_i32, %c0_i32_0 : i32, i32
  }
  func.func @transform_3(%arg0: i32) -> (i32, i32) {
    %c0_i32 = arith.constant 0 : i32
    %c0_i32_0 = arith.constant 0 : i32
    %c0_i32_1 = arith.constant 0 : i32
    return %c0_i32, %c0_i32_0 : i32, i32
  }
  func.func @transform_4(%arg0: i32) -> (i32, i32) {
    %c0_i32 = arith.constant 0 : i32
    %c0_i32_0 = arith.constant 0 : i32
    %c0_i32_1 = arith.constant 0 : i32
    return %c0_i32, %c0_i32_0 : i32, i32
  }
  func.func @transform_5(%arg0: i32) -> (i32, i32) {
    %c0_i32 = arith.constant 0 : i32
    %c0_i32_0 = arith.constant 0 : i32
    %c0_i32_1 = arith.constant 0 : i32
    return %c0_i32, %c0_i32_0 : i32, i32
  }
  func.func @transform_6(%arg0: i32) -> (i32, i32) {
    %c0_i32 = arith.constant 0 : i32
    %c0_i32_0 = arith.constant 0 : i32
    %c0_i32_1 = arith.constant 0 : i32
    return %c0_i32, %c0_i32_0 : i32, i32
  }
  func.func @transform_7(%arg0: i32) -> (i32, i32) {
    %c0_i32 = arith.constant 0 : i32
    %c0_i32_0 = arith.constant 0 : i32
    %c0_i32_1 = arith.constant 0 : i32
    return %c0_i32, %c0_i32_0 : i32, i32
  }
  func.func @transform_8(%arg0: i32) -> (i32, i32) {
    %c0_i32 = arith.constant 0 : i32
    %c0_i32_0 = arith.constant 0 : i32
    %c0_i32_1 = arith.constant 0 : i32
    return %c0_i32, %c0_i32_0 : i32, i32
  }
  func.func @transform_9(%arg0: i32) -> (i32, i32) {
    %c0_i32 = arith.constant 0 : i32
    %c0_i32_0 = arith.constant 0 : i32
    %c0_i32_1 = arith.constant 0 : i32
    return %c0_i32, %c0_i32_0 : i32, i32
  }
  func.func @transform_10(%arg0: i32) -> (i32, i32) {
    %c0_i32 = arith.constant 0 : i32
    %c0_i32_0 = arith.constant 0 : i32
    %c0_i32_1 = arith.constant 0 : i32
    return %c0_i32, %c0_i32_0 : i32, i32
  }
}

</mosaic_0001>

<llo_original>
// kernel: tpu_custom_call.1
$region0: #{tpu_custom_call.1}
  #allocation0 [shape = 'u32[]', space=smem, size = 0x4, offset = 0x4, fixed_abs, tag = 'smem constant byte address 0x4 - core index']
  #allocation1 [shape = 'u32[72,128]{1,0:T(1,128)}', space=vmem, size = 0x9000, scoped, tag = 'internal scratch']
  %s0 = inlined_call_operand.vmem [shape: f32[32,4], index: 0, kind: input, shape index: {}]
  %s1 = inlined_call_operand.vmem [shape: f32[3,4,14], index: 1, kind: input, shape index: {}]
  %s2 = inlined_call_operand.vmem [shape: f32[1,14], index: 2, kind: input, shape index: {}]
  %s3 = inlined_call_operand.vmem [shape: f32[14,512], index: 3, kind: input, shape index: {}]
  %s4 = inlined_call_operand.hbm [shape: f32[128,512], index: 4, kind: input, shape index: {}]
  %s5 = inlined_call_operand.vmem [shape: f32[1,512], index: 5, kind: input, shape index: {}]
  %s6 = inlined_call_operand.hbm [shape: f32[256,512], index: 6, kind: input, shape index: {}]
  %s7 = inlined_call_operand.vmem [shape: f32[1,512], index: 7, kind: input, shape index: {}]
  %s8 = inlined_call_operand.vmem [shape: f32[128,8], index: 8, kind: input, shape index: {}]
  %s9 = inlined_call_operand.vmem [shape: f32[1,8], index: 9, kind: input, shape index: {}]
  %s10 = inlined_call_operand.hbm [shape: f32[2,8], index: 10, kind: output, shape index: {}]
  %s11 = sld [smem:[#allocation0]]
  $region58: #{tpu_custom_call.1} parent=0
    _
  %s13 = ssub.s32 1, %s11
  %s14 = scalar_select 0, %s13, %s11
  $region1: #{tpu_custom_call.1} parent=0
    #allocation2 [shape = 'u8[262144]{0}', space=vmem, size = 0x40000, scoped, tag = 'input window, operand 4, single buffered']
    #allocation3 [shape = 's32[1]{0}', space=sflag, size = 0x4, scoped, tag = 'scoped memory for tpu_custom_call.1']
    #allocation4 [shape = 's32[1]{0}', space=sflag, size = 0x4, scoped, tag = 'scoped memory for tpu_custom_call.1']
    #allocation5 [shape = 'u8[524288]{0}', space=vmem, size = 0x80000, scoped, tag = 'input window, operand 6, single buffered']
    #allocation6 [shape = 's32[1]{0}', space=sflag, size = 0x4, scoped, tag = 'scoped memory for tpu_custom_call.1']
    #allocation7 [shape = 'u8[1024]{0}', space=vmem, size = 0x400, scoped, tag = 'output window, operand 0, single buffered']
    %15 = vsyncpa [#allocation3], 0
    %16 = vsyncpa [#allocation6], 0
    %17 = vsyncpa [#allocation4], 0
    // Predicated region
    $region2: #{tpu_custom_call.1} parent=1 // pred_check
      _
    $region3: #{tpu_custom_call.1} parent=1 // pred_check_branch
      %19 = sbr.rel (0) target = $region5
    $region4: #{tpu_custom_call.1} parent=1 // pred_region
      _
    $region5: #{tpu_custom_call.1} parent=1 // pred_fallthru
      _
    // Predicated region
    $region6: #{tpu_custom_call.1} parent=1 // pred_check
      _
    $region7: #{tpu_custom_call.1} parent=1 // pred_check_branch
      %21 = sbr.rel (0) target = $region9
    $region8: #{tpu_custom_call.1} parent=1 // pred_region
      _
    $region9: #{tpu_custom_call.1} parent=1 // pred_fallthru
      _
    // Predicated region
    $region10: #{tpu_custom_call.1} parent=1 // pred_check
      _
    $region11: #{tpu_custom_call.1} parent=1 // pred_check_branch
      %23 = sbr.rel (0) target = $region13
    $region12: #{tpu_custom_call.1} parent=1 // pred_region
      _
    $region13: #{tpu_custom_call.1} parent=1 // pred_fallthru
      _
    // Predicated region
    $region14: #{tpu_custom_call.1} parent=1 // pred_check
      _
    $region15: #{tpu_custom_call.1} parent=1 // pred_check_branch
      %25 = sbr.rel (0) target = $region17
    $region16: #{tpu_custom_call.1} parent=1 // pred_region
      _
    $region17: #{tpu_custom_call.1} parent=1 // pred_fallthru
      _
    // Predicated region
    $region18: #{tpu_custom_call.1} parent=1 // pred_check
      _
    $region19: #{tpu_custom_call.1} parent=1 // pred_check_branch
      %27 = sbr.rel (0) target = $region21
    $region20: #{tpu_custom_call.1} parent=1 // pred_region
      %29 = vsyncadd [#allocation3], 0
      %s30 = sshll.u32 %s4, 4
      %s31 = int_to_ptr.hbm [resolvable:$true] %s30
      %s32 = sshll.u32 [#allocation2], 4
      %s33 = int_to_ptr.vmem [resolvable:$true] %s32
      %38 = dma.hbm_to_vmem [thread:$0]  %s31, 8192, %s33, [#allocation3], 512, 512, 32
    $region21: #{tpu_custom_call.1} parent=1 // pred_fallthru
      _
    // Predicated region
    $region22: #{tpu_custom_call.1} parent=1 // pred_check
      _
    $region23: #{tpu_custom_call.1} parent=1 // pred_check_branch
      %40 = sbr.rel (0) target = $region25
    $region24: #{tpu_custom_call.1} parent=1 // pred_region
      _
    $region25: #{tpu_custom_call.1} parent=1 // pred_fallthru
      _
    // Predicated region
    $region26: #{tpu_custom_call.1} parent=1 // pred_check
      _
    $region27: #{tpu_custom_call.1} parent=1 // pred_check_branch
      %42 = sbr.rel (0) target = $region29
    $region28: #{tpu_custom_call.1} parent=1 // pred_region
      %44 = vsyncadd [#allocation6], 0
      %s45 = sshll.u32 %s6, 4
      %s46 = int_to_ptr.hbm [resolvable:$true] %s45
      %s47 = sshll.u32 [#allocation5], 4
      %s48 = int_to_ptr.vmem [resolvable:$true] %s47
      %53 = dma.hbm_to_vmem [thread:$0]  %s46, 16384, %s48, [#allocation6], 512, 512, 32
    $region29: #{tpu_custom_call.1} parent=1 // pred_fallthru
      _
    // Predicated region
    $region30: #{tpu_custom_call.1} parent=1 // pred_check
      _
    $region31: #{tpu_custom_call.1} parent=1 // pred_check_branch
      %55 = sbr.rel (0) target = $region33
    $region32: #{tpu_custom_call.1} parent=1 // pred_region
      _
    $region33: #{tpu_custom_call.1} parent=1 // pred_fallthru
      _
    // Predicated region
    $region34: #{tpu_custom_call.1} parent=1 // pred_check
      _
    $region35: #{tpu_custom_call.1} parent=1 // pred_check_branch
      %57 = sbr.rel (0) target = $region37
    $region36: #{tpu_custom_call.1} parent=1 // pred_region
      _
    $region37: #{tpu_custom_call.1} parent=1 // pred_fallthru
      _
    // Predicated region
    $region38: #{tpu_custom_call.1} parent=1 // pred_check
      _
    $region39: #{tpu_custom_call.1} parent=1 // pred_check_branch
      %59 = sbr.rel (0) target = $region41
    $region40: #{tpu_custom_call.1} parent=1 // pred_region
      _
    $region41: #{tpu_custom_call.1} parent=1 // pred_fallthru
      _
    // Predicated region
    $region42: #{tpu_custom_call.1} parent=1 // pred_check
      _
    $region43: #{tpu_custom_call.1} parent=1 // pred_check_branch
      %61 = sbr.rel (0) target = $region45
    $region44: #{tpu_custom_call.1} parent=1 // pred_region
      %63 = dma.done [#allocation3], 8192
    $region45: #{tpu_custom_call.1} parent=1 // pred_fallthru
      _
    // Predicated region
    $region46: #{tpu_custom_call.1} parent=1 // pred_check
      _
    $region47: #{tpu_custom_call.1} parent=1 // pred_check_branch
      %65 = sbr.rel (0) target = $region49
    $region48: #{tpu_custom_call.1} parent=1 // pred_region
      %67 = dma.done [#allocation6], 16384
    $region49: #{tpu_custom_call.1} parent=1 // pred_fallthru
      _
    %v68 = vld [vmem:[%s0] sm:$0xff]
    %v69 = vld [vmem:[%s0 + $0x8] sm:$0xff]
    %v70 = vld [vmem:[%s0 + $0x10] sm:$0xff]
    %v71 = vld [vmem:[%s0 + $0x18] sm:$0xff]
    %v72 = vld [vmem:[%s1] sm:$0xf]
    %v73 = vld [vmem:[%s1 + $0x4] sm:$0xf]
    %v74 = vld [vmem:[%s1 + $0x8] sm:$0xf]
    %v75 = vld [vmem:[%s2] sm:$0x1]
    %v76 = vld [vmem:[#allocation2] sm:$0xff]
    %v77 = vld [vmem:[#allocation2 + $0x8] sm:$0xff]
    %v78 = vld [vmem:[#allocation2 + $0x10] sm:$0xff]
    %v79 = vld [vmem:[#allocation2 + $0x18] sm:$0xff]
    %v80 = vld [vmem:[#allocation2 + $0x20] sm:$0xff]
    %v81 = vld [vmem:[#allocation2 + $0x28] sm:$0xff]
    %v82 = vld [vmem:[#allocation2 + $0x30] sm:$0xff]
    %v83 = vld [vmem:[#allocation2 + $0x38] sm:$0xff]
    %v84 = vld [vmem:[#allocation2 + $0x40] sm:$0xff]
    %v85 = vld [vmem:[#allocation2 + $0x48] sm:$0xff]
    %v86 = vld [vmem:[#allocation2 + $0x50] sm:$0xff]
    %v87 = vld [vmem:[#allocation2 + $0x58] sm:$0xff]
    %v88 = vld [vmem:[#allocation2 + $0x60] sm:$0xff]
    %v89 = vld [vmem:[#allocation2 + $0x68] sm:$0xff]
    %v90 = vld [vmem:[#allocation2 + $0x70] sm:$0xff]
    %v91 = vld [vmem:[#allocation2 + $0x78] sm:$0xff]
    %v92 = vld [vmem:[#allocation2 + $0x80] sm:$0xff]
    %v93 = vld [vmem:[#allocation2 + $0x88] sm:$0xff]
    %v94 = vld [vmem:[#allocation2 + $0x90] sm:$0xff]
    %v95 = vld [vmem:[#allocation2 + $0x98] sm:$0xff]
    %v96 = vld [vmem:[#allocation2 + $0xa0] sm:$0xff]
    %v97 = vld [vmem:[#allocation2 + $0xa8] sm:$0xff]
    %v98 = vld [vmem:[#allocation2 + $0xb0] sm:$0xff]
    %v99 = vld [vmem:[#allocation2 + $0xb8] sm:$0xff]
    %v100 = vld [vmem:[#allocation2 + $0xc0] sm:$0xff]
    %v101 = vld [vmem:[#allocation2 + $0xc8] sm:$0xff]
    %v102 = vld [vmem:[#allocation2 + $0xd0] sm:$0xff]
    %v103 = vld [vmem:[#allocation2 + $0xd8] sm:$0xff]
    %v104 = vld [vmem:[#allocation2 + $0xe0] sm:$0xff]
    %v105 = vld [vmem:[#allocation2 + $0xe8] sm:$0xff]
    %v106 = vld [vmem:[#allocation2 + $0xf0] sm:$0xff]
    %v107 = vld [vmem:[#allocation2 + $0xf8] sm:$0xff]
    %v108 = vld [vmem:[#allocation2 + $0x100] sm:$0xff]
    %v109 = vld [vmem:[#allocation2 + $0x108] sm:$0xff]
    %v110 = vld [vmem:[#allocation2 + $0x110] sm:$0xff]
    %v111 = vld [vmem:[#allocation2 + $0x118] sm:$0xff]
    %v112 = vld [vmem:[#allocation2 + $0x120] sm:$0xff]
    %v113 = vld [vmem:[#allocation2 + $0x128] sm:$0xff]
    %v114 = vld [vmem:[#allocation2 + $0x130] sm:$0xff]
    %v115 = vld [vmem:[#allocation2 + $0x138] sm:$0xff]
    %v116 = vld [vmem:[#allocation2 + $0x140] sm:$0xff]
    %v117 = vld [vmem:[#allocation2 + $0x148] sm:$0xff]
    %v118 = vld [vmem:[#allocation2 + $0x150] sm:$0xff]
    %v119 = vld [vmem:[#allocation2 + $0x158] sm:$0xff]
    %v120 = vld [vmem:[#allocation2 + $0x160] sm:$0xff]
    %v121 = vld [vmem:[#allocation2 + $0x168] sm:$0xff]
    %v122 = vld [vmem:[#allocation2 + $0x170] sm:$0xff]
    %v123 = vld [vmem:[#allocation2 + $0x178] sm:$0xff]
    %v124 = vld [vmem:[#allocation2 + $0x180] sm:$0xff]
    %v125 = vld [vmem:[#allocation2 + $0x188] sm:$0xff]
    %v126 = vld [vmem:[#allocation2 + $0x190] sm:$0xff]
    %v127 = vld [vmem:[#allocation2 + $0x198] sm:$0xff]
    %v128 = vld [vmem:[#allocation2 + $0x1a0] sm:$0xff]
    %v129 = vld [vmem:[#allocation2 + $0x1a8] sm:$0xff]
    %v130 = vld [vmem:[#allocation2 + $0x1b0] sm:$0xff]
    %v131 = vld [vmem:[#allocation2 + $0x1b8] sm:$0xff]
    %v132 = vld [vmem:[#allocation2 + $0x1c0] sm:$0xff]
    %v133 = vld [vmem:[#allocation2 + $0x1c8] sm:$0xff]
    %v134 = vld [vmem:[#allocation2 + $0x1d0] sm:$0xff]
    %v135 = vld [vmem:[#allocation2 + $0x1d8] sm:$0xff]
    %v136 = vld [vmem:[#allocation2 + $0x1e0] sm:$0xff]
    %v137 = vld [vmem:[#allocation2 + $0x1e8] sm:$0xff]
    %v138 = vld [vmem:[#allocation2 + $0x1f0] sm:$0xff]
    %v139 = vld [vmem:[#allocation2 + $0x1f8] sm:$0xff]
    %v140 = vld [vmem:[#allocation5] sm:$0xff]
    %v141 = vld [vmem:[#allocation5 + $0x8] sm:$0xff]
    %v142 = vld [vmem:[#allocation5 + $0x10] sm:$0xff]
    %v143 = vld [vmem:[#allocation5 + $0x18] sm:$0xff]
    %v144 = vld [vmem:[#allocation5 + $0x20] sm:$0xff]
    %v145 = vld [vmem:[#allocation5 + $0x28] sm:$0xff]
    %v146 = vld [vmem:[#allocation5 + $0x30] sm:$0xff]
    %v147 = vld [vmem:[#allocation5 + $0x38] sm:$0xff]
    %v148 = vld [vmem:[#allocation5 + $0x40] sm:$0xff]
    %v149 = vld [vmem:[#allocation5 + $0x48] sm:$0xff]
    %v150 = vld [vmem:[#allocation5 + $0x50] sm:$0xff]
    %v151 = vld [vmem:[#allocation5 + $0x58] sm:$0xff]
    %v152 = vld [vmem:[#allocation5 + $0x60] sm:$0xff]
    %v153 = vld [vmem:[#allocation5 + $0x68] sm:$0xff]
    %v154 = vld [vmem:[#allocation5 + $0x70] sm:$0xff]
    %v155 = vld [vmem:[#allocation5 + $0x78] sm:$0xff]
    %v156 = vld [vmem:[#allocation5 + $0x80] sm:$0xff]
    %v157 = vld [vmem:[#allocation5 + $0x88] sm:$0xff]
    %v158 = vld [vmem:[#allocation5 + $0x90] sm:$0xff]
    %v159 = vld [vmem:[#allocation5 + $0x98] sm:$0xff]
    %v160 = vld [vmem:[#allocation5 + $0xa0] sm:$0xff]
    %v161 = vld [vmem:[#allocation5 + $0xa8] sm:$0xff]
    %v162 = vld [vmem:[#allocation5 + $0xb0] sm:$0xff]
    %v163 = vld [vmem:[#allocation5 + $0xb8] sm:$0xff]
    %v164 = vld [vmem:[#allocation5 + $0xc0] sm:$0xff]
    %v165 = vld [vmem:[#allocation5 + $0xc8] sm:$0xff]
    %v166 = vld [vmem:[#allocation5 + $0xd0] sm:$0xff]
    %v167 = vld [vmem:[#allocation5 + $0xd8] sm:$0xff]
    %v168 = vld [vmem:[#allocation5 + $0xe0] sm:$0xff]
    %v169 = vld [vmem:[#allocation5 + $0xe8] sm:$0xff]
    %v170 = vld [vmem:[#allocation5 + $0xf0] sm:$0xff]
    %v171 = vld [vmem:[#allocation5 + $0xf8] sm:$0xff]
    %v172 = vld [vmem:[#allocation5 + $0x100] sm:$0xff]
    %v173 = vld [vmem:[#allocation5 + $0x108] sm:$0xff]
    %v174 = vld [vmem:[#allocation5 + $0x110] sm:$0xff]
    %v175 = vld [vmem:[#allocation5 + $0x118] sm:$0xff]
    %v176 = vld [vmem:[#allocation5 + $0x120] sm:$0xff]
    %v177 = vld [vmem:[#allocation5 + $0x128] sm:$0xff]
    %v178 = vld [vmem:[#allocation5 + $0x130] sm:$0xff]
    %v179 = vld [vmem:[#allocation5 + $0x138] sm:$0xff]
    %v180 = vld [vmem:[#allocation5 + $0x140] sm:$0xff]
    %v181 = vld [vmem:[#allocation5 + $0x148] sm:$0xff]
    %v182 = vld [vmem:[#allocation5 + $0x150] sm:$0xff]
    %v183 = vld [vmem:[#allocation5 + $0x158] sm:$0xff]
    %v184 = vld [vmem:[#allocation5 + $0x160] sm:$0xff]
    %v185 = vld [vmem:[#allocation5 + $0x168] sm:$0xff]
    %v186 = vld [vmem:[#allocation5 + $0x170] sm:$0xff]
    %v187 = vld [vmem:[#allocation5 + $0x178] sm:$0xff]
    %v188 = vld [vmem:[#allocation5 + $0x180] sm:$0xff]
    %v189 = vld [vmem:[#allocation5 + $0x188] sm:$0xff]
    %v190 = vld [vmem:[#allocation5 + $0x190] sm:$0xff]
    %v191 = vld [vmem:[#allocation5 + $0x198] sm:$0xff]
    %v192 = vld [vmem:[#allocation5 + $0x1a0] sm:$0xff]
    %v193 = vld [vmem:[#allocation5 + $0x1a8] sm:$0xff]
    %v194 = vld [vmem:[#allocation5 + $0x1b0] sm:$0xff]
    %v195 = vld [vmem:[#allocation5 + $0x1b8] sm:$0xff]
    %v196 = vld [vmem:[#allocation5 + $0x1c0] sm:$0xff]
    %v197 = vld [vmem:[#allocation5 + $0x1c8] sm:$0xff]
    %v198 = vld [vmem:[#allocation5 + $0x1d0] sm:$0xff]
    %v199 = vld [vmem:[#allocation5 + $0x1d8] sm:$0xff]
    %v200 = vld [vmem:[#allocation5 + $0x1e0] sm:$0xff]
    %v201 = vld [vmem:[#allocation5 + $0x1e8] sm:$0xff]
    %v202 = vld [vmem:[#allocation5 + $0x1f0] sm:$0xff]
    %v203 = vld [vmem:[#allocation5 + $0x1f8] sm:$0xff]
    %v204 = vld [vmem:[#allocation5 + $0x200] sm:$0xff]
    %v205 = vld [vmem:[#allocation5 + $0x208] sm:$0xff]
    %v206 = vld [vmem:[#allocation5 + $0x210] sm:$0xff]
    %v207 = vld [vmem:[#allocation5 + $0x218] sm:$0xff]
    %v208 = vld [vmem:[#allocation5 + $0x220] sm:$0xff]
    %v209 = vld [vmem:[#allocation5 + $0x228] sm:$0xff]
    %v210 = vld [vmem:[#allocation5 + $0x230] sm:$0xff]
    %v211 = vld [vmem:[#allocation5 + $0x238] sm:$0xff]
    %v212 = vld [vmem:[#allocation5 + $0x240] sm:$0xff]
    %v213 = vld [vmem:[#allocation5 + $0x248] sm:$0xff]
    %v214 = vld [vmem:[#allocation5 + $0x250] sm:$0xff]
    %v215 = vld [vmem:[#allocation5 + $0x258] sm:$0xff]
    %v216 = vld [vmem:[#allocation5 + $0x260] sm:$0xff]
    %v217 = vld [vmem:[#allocation5 + $0x268] sm:$0xff]
    %v218 = vld [vmem:[#allocation5 + $0x270] sm:$0xff]
    %v219 = vld [vmem:[#allocation5 + $0x278] sm:$0xff]
    %v220 = vld [vmem:[#allocation5 + $0x280] sm:$0xff]
    %v221 = vld [vmem:[#allocation5 + $0x288] sm:$0xff]
    %v222 = vld [vmem:[#allocation5 + $0x290] sm:$0xff]
    %v223 = vld [vmem:[#allocation5 + $0x298] sm:$0xff]
    %v224 = vld [vmem:[#allocation5 + $0x2a0] sm:$0xff]
    %v225 = vld [vmem:[#allocation5 + $0x2a8] sm:$0xff]
    %v226 = vld [vmem:[#allocation5 + $0x2b0] sm:$0xff]
    %v227 = vld [vmem:[#allocation5 + $0x2b8] sm:$0xff]
    %v228 = vld [vmem:[#allocation5 + $0x2c0] sm:$0xff]
    %v229 = vld [vmem:[#allocation5 + $0x2c8] sm:$0xff]
    %v230 = vld [vmem:[#allocation5 + $0x2d0] sm:$0xff]
    %v231 = vld [vmem:[#allocation5 + $0x2d8] sm:$0xff]
    %v232 = vld [vmem:[#allocation5 + $0x2e0] sm:$0xff]
    %v233 = vld [vmem:[#allocation5 + $0x2e8] sm:$0xff]
    %v234 = vld [vmem:[#allocation5 + $0x2f0] sm:$0xff]
    %v235 = vld [vmem:[#allocation5 + $0x2f8] sm:$0xff]
    %v236 = vld [vmem:[#allocation5 + $0x300] sm:$0xff]
    %v237 = vld [vmem:[#allocation5 + $0x308] sm:$0xff]
    %v238 = vld [vmem:[#allocation5 + $0x310] sm:$0xff]
    %v239 = vld [vmem:[#allocation5 + $0x318] sm:$0xff]
    %v240 = vld [vmem:[#allocation5 + $0x320] sm:$0xff]
    %v241 = vld [vmem:[#allocation5 + $0x328] sm:$0xff]
    %v242 = vld [vmem:[#allocation5 + $0x330] sm:$0xff]
    %v243 = vld [vmem:[#allocation5 + $0x338] sm:$0xff]
    %v244 = vld [vmem:[#allocation5 + $0x340] sm:$0xff]
    %v245 = vld [vmem:[#allocation5 + $0x348] sm:$0xff]
    %v246 = vld [vmem:[#allocation5 + $0x350] sm:$0xff]
    %v247 = vld [vmem:[#allocation5 + $0x358] sm:$0xff]
    %v248 = vld [vmem:[#allocation5 + $0x360] sm:$0xff]
    %v249 = vld [vmem:[#allocation5 + $0x368] sm:$0xff]
    %v250 = vld [vmem:[#allocation5 + $0x370] sm:$0xff]
    %v251 = vld [vmem:[#allocation5 + $0x378] sm:$0xff]
    %v252 = vld [vmem:[#allocation5 + $0x380] sm:$0xff]
    %v253 = vld [vmem:[#allocation5 + $0x388] sm:$0xff]
    %v254 = vld [vmem:[#allocation5 + $0x390] sm:$0xff]
    %v255 = vld [vmem:[#allocation5 + $0x398] sm:$0xff]
    %v256 = vld [vmem:[#allocation5 + $0x3a0] sm:$0xff]
    %v257 = vld [vmem:[#allocation5 + $0x3a8] sm:$0xff]
    %v258 = vld [vmem:[#allocation5 + $0x3b0] sm:$0xff]
    %v259 = vld [vmem:[#allocation5 + $0x3b8] sm:$0xff]
    %v260 = vld [vmem:[#allocation5 + $0x3c0] sm:$0xff]
    %v261 = vld [vmem:[#allocation5 + $0x3c8] sm:$0xff]
    %v262 = vld [vmem:[#allocation5 + $0x3d0] sm:$0xff]
    %v263 = vld [vmem:[#allocation5 + $0x3d8] sm:$0xff]
    %v264 = vld [vmem:[#allocation5 + $0x3e0] sm:$0xff]
    %v265 = vld [vmem:[#allocation5 + $0x3e8] sm:$0xff]
    %v266 = vld [vmem:[#allocation5 + $0x3f0] sm:$0xff]
    %v267 = vld [vmem:[#allocation5 + $0x3f8] sm:$0xff]
    %v268 = vld [vmem:[%s7] sm:$0xf]
    %vm273 = vcmask 1045504
    %v274 = vrot.slane %v68, 2
    %v275 = vrot.slane %v69, 2
    %v276 = vsel %vm273, %v274, %v275
    %v277 = vrot.slane %v70, 2
    %v278 = vsel %vm273, %v275, %v277
    %v279 = vrot.slane %v71, 2
    %v280 = vsel %vm273, %v277, %v279
    %vm281 = vcmask 31744
    %v282 = vsel %vm281, %v276, 0
    %v284 = vsel %vm281, %v278, 0
    %v286 = vsel %vm281, %v280, 0
    %v288 = vsel %vm281, %v279, 0
    %vm290 = vcmask 1043456
    %v292 = vsel %vm290, %v73, 0
    %294 = vmatpush.msra.mxu0 0.0
    %295 = vmatpush.msra.mxu0 0.0
    %296 = vmatpush.msra.mxu0 0.0
    %297 = vmatpush.msra.mxu0 0.0
    %298 = vmatpush.msra.mxu0 0.0
    %299 = vmatpush.msra.mxu0 0.0
    %300 = vmatpush.msra.mxu0 0.0
    %301 = vmatpush.msra.mxu0 0.0
    %302 = vmatpush.msra.mxu0 0.0
    %303 = vmatpush.msra.mxu0 0.0
    %304 = vmatpush.msra.mxu0 0.0
    %305 = vmatpush.msra.mxu0 0.0
    %306 = vmatpush.msra.mxu0 0.0
    %307 = vmatpush.msra.mxu0 0.0
    %308 = vmatpush.msra.mxu0 0.0
    %309 = vmatpush.msra.mxu0 %v292
    %310 = vmatmul.f32.gmra.mxu0 %v282
    %v311 = vpop.f32.mrf.mxu0
    %v312 = vadd.f32 0.0, %v311
    %313 = vmatmul.f32.gmra.mxu0 %v284
    %v314 = vpop.f32.mrf.mxu0
    %v315 = vadd.f32 0.0, %v314
    %316 = vmatmul.f32.gmra.mxu0 %v286
    %v317 = vpop.f32.mrf.mxu0
    %v318 = vadd.f32 0.0, %v317
    %319 = vmatmul.f32.gmra.mxu0 %v288
    %v320 = vpop.f32.mrf.mxu0
    %v321 = vadd.f32 0.0, %v320
    %322 = vdwg.mxu0
    %v323 = vsel %vm281, %v68, 0
    %v325 = vsel %vm281, %v69, 0
    %v327 = vsel %vm281, %v70, 0
    %v329 = vsel %vm281, %v71, 0
    %v332 = vsel %vm290, %v72, 0
    %334 = vmatpush.msra.mxu0 0.0
    %335 = vmatpush.msra.mxu0 0.0
    %336 = vmatpush.msra.mxu0 0.0
    %337 = vmatpush.msra.mxu0 0.0
    %338 = vmatpush.msra.mxu0 0.0
    %339 = vmatpush.msra.mxu0 0.0
    %340 = vmatpush.msra.mxu0 0.0
    %341 = vmatpush.msra.mxu0 0.0
    %342 = vmatpush.msra.mxu0 0.0
    %343 = vmatpush.msra.mxu0 0.0
    %344 = vmatpush.msra.mxu0 0.0
    %345 = vmatpush.msra.mxu0 0.0
    %346 = vmatpush.msra.mxu0 0.0
    %347 = vmatpush.msra.mxu0 0.0
    %348 = vmatpush.msra.mxu0 0.0
    %349 = vmatpush.msra.mxu0 %v332
    %350 = vmatmul.f32.gmra.mxu0 %v323
    %v351 = vpop.f32.mrf.mxu0
    %v352 = vadd.f32 %v312, %v351
    %353 = vmatmul.f32.gmra.mxu0 %v325
    %v354 = vpop.f32.mrf.mxu0
    %v355 = vadd.f32 %v315, %v354
    %356 = vmatmul.f32.gmra.mxu0 %v327
    %v357 = vpop.f32.mrf.mxu0
    %v358 = vadd.f32 %v318, %v357
    %359 = vmatmul.f32.gmra.mxu0 %v329
    %v360 = vpop.f32.mrf.mxu0
    %v361 = vadd.f32 %v321, %v360
    %362 = vdwg.mxu0
    %v363 = vrot.slane %v68, 4
    %v364 = vrot.slane %v69, 4
    %v365 = vsel %vm290, %v363, %v364
    %v366 = vrot.slane %v70, 4
    %v367 = vsel %vm290, %v364, %v366
    %v368 = vrot.slane %v71, 4
    %v369 = vsel %vm290, %v366, %v368
    %v370 = vsel %vm281, %v365, 0
    %v372 = vsel %vm281, %v367, 0
    %v374 = vsel %vm281, %v369, 0
    %v376 = vsel %vm281, %v368, 0
    %v379 = vsel %vm290, %v74, 0
    %381 = vmatpush.msra.mxu0 0.0
    %382 = vmatpush.msra.mxu0 0.0
    %383 = vmatpush.msra.mxu0 0.0
    %384 = vmatpush.msra.mxu0 0.0
    %385 = vmatpush.msra.mxu0 0.0
    %386 = vmatpush.msra.mxu0 0.0
    %387 = vmatpush.msra.mxu0 0.0
    %388 = vmatpush.msra.mxu0 0.0
    %389 = vmatpush.msra.mxu0 0.0
    %390 = vmatpush.msra.mxu0 0.0
    %391 = vmatpush.msra.mxu0 0.0
    %392 = vmatpush.msra.mxu0 0.0
    %393 = vmatpush.msra.mxu0 0.0
    %394 = vmatpush.msra.mxu0 0.0
    %395 = vmatpush.msra.mxu0 0.0
    %396 = vmatpush.msra.mxu0 %v379
    %397 = vmatmul.f32.gmra.mxu0 %v370
    %v398 = vpop.f32.mrf.mxu0
    %v399 = vadd.f32 0.0, %v398
    %400 = vmatmul.f32.gmra.mxu0 %v372
    %v401 = vpop.f32.mrf.mxu0
    %v402 = vadd.f32 0.0, %v401
    %403 = vmatmul.f32.gmra.mxu0 %v374
    %v404 = vpop.f32.mrf.mxu0
    %v405 = vadd.f32 0.0, %v404
    %406 = vmatmul.f32.gmra.mxu0 %v376
    %v407 = vpop.f32.mrf.mxu0
    %v408 = vadd.f32 0.0, %v407
    %409 = vdwg.mxu0
    %v410 = vadd.f32 %v352, %v399
    %v411 = vadd.f32 %v355, %v402
    %v412 = vadd.f32 %v358, %v405
    %v413 = vadd.f32 %v361, %v408
    %v415 = vperm.slane %v75, 0
    %v417 = vadd.f32 %v410, %v415
    %v418 = vadd.f32 %v411, %v415
    %v419 = vadd.f32 %v412, %v415
    %v420 = vadd.f32 %v413, %v415
    %v421 = vmax.f32 %v417, 0.0
    %v422 = vmax.f32 %v418, 0.0
    %v423 = vmax.f32 %v419, 0.0
    %v424 = vmax.f32 %v420, 0.0
    %v429 = vrot.slane %v421, 2
    %v430 = vrot.slane %v422, 2
    %v431 = vsel %vm273, %v429, %v430
    %v432 = vrot.slane %v423, 2
    %v433 = vsel %vm273, %v430, %v432
    %v434 = vrot.slane %v424, 2
    %v435 = vsel %vm273, %v432, %v434
    %v439 = vmax.f32 %v421, %v431
    %v440 = vmax.f32 %v422, %v433
    %v441 = vmax.f32 %v423, %v435
    %v442 = vrot.slane %v421, 4
    %v443 = vrot.slane %v422, 4
    %v444 = vsel %vm290, %v442, %v443
    %v445 = vrot.slane %v423, 4
    %v446 = vsel %vm290, %v443, %v445
    %v447 = vrot.slane %v424, 4
    %v448 = vsel %vm290, %v445, %v447
    %v452 = vmax.f32 %v439, %v444
    %v453 = vmax.f32 %v440, %v446
    %v454 = vmax.f32 %v441, %v448
    %v455 = vld [vmem:[%s3] sm:$0xff]
    %v456 = vld [vmem:[%s3 + $0x8] sm:$0xff]
    %v457 = vld [vmem:[%s3 + $0x10] sm:$0xff]
    %v458 = vld [vmem:[%s3 + $0x18] sm:$0xff]
    %v459 = vld [vmem:[%s3 + $0x20] sm:$0x3f]
    %v460 = vld [vmem:[%s3 + $0x28] sm:$0x3f]
    %v461 = vld [vmem:[%s3 + $0x30] sm:$0x3f]
    %v462 = vld [vmem:[%s3 + $0x38] sm:$0x3f]
    %v463 = vld [vmem:[%s5] sm:$0xf]
    %v465 = vperm.slane %v463, 0
    %v466 = vperm.slane %v463, 1
    %v467 = vperm.slane %v463, 2
    %v468 = vperm.slane %v463, 3
    %vm473 = vcmask 113664
    %v475 = vsel %vm473, %v452, 0
    %v478 = vsel %vm473, %v453, 0
    %v481 = vsel %vm473, %v454, 0
    %v484 = vsel %vm273, %v459, 0
    %v487 = vsel %vm273, %v460, 0
    %v490 = vsel %vm273, %v461, 0
    %v493 = vsel %vm273, %v462, 0
    %495 = vmatpush.msra.mxu0 0.0
    %496 = vmatpush.msra.mxu0 0.0
    %497 = vmatpush.msra.mxu0 0.0
    %498 = vmatpush.msra.mxu0 0.0
    %499 = vmatpush.msra.mxu0 0.0
    %500 = vmatpush.msra.mxu0 0.0
    %501 = vmatpush.msra.mxu0 0.0
    %502 = vmatpush.msra.mxu0 0.0
    %503 = vmatpush.msra.mxu0 0.0
    %504 = vmatpush.msra.mxu0 0.0
    %505 = vmatpush.msra.mxu0 0.0
    %506 = vmatpush.msra.mxu0 0.0
    %507 = vmatpush.msra.mxu0 0.0
    %508 = vmatpush.msra.mxu0 0.0
    %509 = vmatpush.msra.mxu0 %v484
    %510 = vmatpush.msra.mxu0 %v455
    %511 = vmatmul.f32.gmra.mxu0 %v475
    %v512 = vpop.f32.mrf.mxu0
    %v513 = vadd.f32 %v465, %v512
    %514 = vmatmul.f32.gmra.mxu0 %v478
    %v515 = vpop.f32.mrf.mxu0
    %v516 = vadd.f32 %v465, %v515
    %517 = vmatmul.f32.gmra.mxu0 %v481
    %v518 = vpop.f32.mrf.mxu0
    %v519 = vadd.f32 %v465, %v518
    %520 = vdwg.mxu0
    %521 = vmatpush.msra.mxu0 0.0
    %522 = vmatpush.msra.mxu0 0.0
    %523 = vmatpush.msra.mxu0 0.0
    %524 = vmatpush.msra.mxu0 0.0
    %525 = vmatpush.msra.mxu0 0.0
    %526 = vmatpush.msra.mxu0 0.0
    %527 = vmatpush.msra.mxu0 0.0
    %528 = vmatpush.msra.mxu0 0.0
    %529 = vmatpush.msra.mxu0 0.0
    %530 = vmatpush.msra.mxu0 0.0
    %531 = vmatpush.msra.mxu0 0.0
    %532 = vmatpush.msra.mxu0 0.0
    %533 = vmatpush.msra.mxu0 0.0
    %534 = vmatpush.msra.mxu0 0.0
    %535 = vmatpush.msra.mxu0 %v487
    %536 = vmatpush.msra.mxu0 %v456
    %537 = vmatmul.f32.gmra.mxu0 %v475
    %v538 = vpop.f32.mrf.mxu0
    %v539 = vadd.f32 %v466, %v538
    %540 = vmatmul.f32.gmra.mxu0 %v478
    %v541 = vpop.f32.mrf.mxu0
    %v542 = vadd.f32 %v466, %v541
    %543 = vmatmul.f32.gmra.mxu0 %v481
    %v544 = vpop.f32.mrf.mxu0
    %v545 = vadd.f32 %v466, %v544
    %546 = vdwg.mxu0
    %547 = vmatpush.msra.mxu0 0.0
    %548 = vmatpush.msra.mxu0 0.0
    %549 = vmatpush.msra.mxu0 0.0
    %550 = vmatpush.msra.mxu0 0.0
    %551 = vmatpush.msra.mxu0 0.0
    %552 = vmatpush.msra.mxu0 0.0
    %553 = vmatpush.msra.mxu0 0.0
    %554 = vmatpush.msra.mxu0 0.0
    %555 = vmatpush.msra.mxu0 0.0
    %556 = vmatpush.msra.mxu0 0.0
    %557 = vmatpush.msra.mxu0 0.0
    %558 = vmatpush.msra.mxu0 0.0
    %559 = vmatpush.msra.mxu0 0.0
    %560 = vmatpush.msra.mxu0 0.0
    %561 = vmatpush.msra.mxu0 %v490
    %562 = vmatpush.msra.mxu0 %v457
    %563 = vmatmul.f32.gmra.mxu0 %v475
    %v564 = vpop.f32.mrf.mxu0
    %v565 = vadd.f32 %v467, %v564
    %566 = vmatmul.f32.gmra.mxu0 %v478
    %v567 = vpop.f32.mrf.mxu0
    %v568 = vadd.f32 %v467, %v567
    %569 = vmatmul.f32.gmra.mxu0 %v481
    %v570 = vpop.f32.mrf.mxu0
    %v571 = vadd.f32 %v467, %v570
    %572 = vdwg.mxu0
    %573 = vmatpush.msra.mxu0 0.0
    %574 = vmatpush.msra.mxu0 0.0
    %575 = vmatpush.msra.mxu0 0.0
    %576 = vmatpush.msra.mxu0 0.0
    %577 = vmatpush.msra.mxu0 0.0
    %578 = vmatpush.msra.mxu0 0.0
    %579 = vmatpush.msra.mxu0 0.0
    %580 = vmatpush.msra.mxu0 0.0
    %581 = vmatpush.msra.mxu0 0.0
    %582 = vmatpush.msra.mxu0 0.0
    %583 = vmatpush.msra.mxu0 0.0
    %584 = vmatpush.msra.mxu0 0.0
    %585 = vmatpush.msra.mxu0 0.0
    %586 = vmatpush.msra.mxu0 0.0
    %587 = vmatpush.msra.mxu0 %v493
    %588 = vmatpush.msra.mxu0 %v458
    %589 = vmatmul.f32.gmra.mxu0 %v475
    %v590 = vpop.f32.mrf.mxu0
    %v591 = vadd.f32 %v468, %v590
    %592 = vmatmul.f32.gmra.mxu0 %v478
    %v593 = vpop.f32.mrf.mxu0
    %v594 = vadd.f32 %v468, %v593
    %595 = vmatmul.f32.gmra.mxu0 %v481
    %v596 = vpop.f32.mrf.mxu0
    %v597 = vadd.f32 %v468, %v596
    %598 = vdwg.mxu0
    %599 = vmatpush.msra.mxu0 %v136
    %600 = vmatpush.msra.mxu0 %v132
    %601 = vmatpush.msra.mxu0 %v128
    %602 = vmatpush.msra.mxu0 %v124
    %603 = vmatpush.msra.mxu0 %v120
    %604 = vmatpush.msra.mxu0 %v116
    %605 = vmatpush.msra.mxu0 %v112
    %606 = vmatpush.msra.mxu0 %v108
    %607 = vmatpush.msra.mxu0 %v104
    %608 = vmatpush.msra.mxu0 %v100
    %609 = vmatpush.msra.mxu0 %v96
    %610 = vmatpush.msra.mxu0 %v92
    %611 = vmatpush.msra.mxu0 %v88
    %612 = vmatpush.msra.mxu0 %v84
    %613 = vmatpush.msra.mxu0 %v80
    %614 = vmatpush.msra.mxu0 %v76
    %615 = vmatmul.f32.gmra.mxu0 0.0
    %v616 = vpop.f32.mrf.mxu0
    %v617 = vadd.f32 0.0, %v616
    %618 = vdwg.mxu0
    %619 = vmatpush.msra.mxu0 %v137
    %620 = vmatpush.msra.mxu0 %v133
    %621 = vmatpush.msra.mxu0 %v129
    %622 = vmatpush.msra.mxu0 %v125
    %623 = vmatpush.msra.mxu0 %v121
    %624 = vmatpush.msra.mxu0 %v117
    %625 = vmatpush.msra.mxu0 %v113
    %626 = vmatpush.msra.mxu0 %v109
    %627 = vmatpush.msra.mxu0 %v105
    %628 = vmatpush.msra.mxu0 %v101
    %629 = vmatpush.msra.mxu0 %v97
    %630 = vmatpush.msra.mxu0 %v93
    %631 = vmatpush.msra.mxu0 %v89
    %632 = vmatpush.msra.mxu0 %v85
    %633 = vmatpush.msra.mxu0 %v81
    %634 = vmatpush.msra.mxu0 %v77
    %635 = vmatmul.f32.gmra.mxu0 0.0
    %v636 = vpop.f32.mrf.mxu0
    %v637 = vadd.f32 0.0, %v636
    %638 = vdwg.mxu0
    %639 = vmatpush.msra.mxu0 %v138
    %640 = vmatpush.msra.mxu0 %v134
    %641 = vmatpush.msra.mxu0 %v130
    %642 = vmatpush.msra.mxu0 %v126
    %643 = vmatpush.msra.mxu0 %v122
    %644 = vmatpush.msra.mxu0 %v118
    %645 = vmatpush.msra.mxu0 %v114
    %646 = vmatpush.msra.mxu0 %v110
    %647 = vmatpush.msra.mxu0 %v106
    %648 = vmatpush.msra.mxu0 %v102
    %649 = vmatpush.msra.mxu0 %v98
    %650 = vmatpush.msra.mxu0 %v94
    %651 = vmatpush.msra.mxu0 %v90
    %652 = vmatpush.msra.mxu0 %v86
    %653 = vmatpush.msra.mxu0 %v82
    %654 = vmatpush.msra.mxu0 %v78
    %655 = vmatmul.f32.gmra.mxu0 0.0
    %v656 = vpop.f32.mrf.mxu0
    %v657 = vadd.f32 0.0, %v656
    %658 = vdwg.mxu0
    %659 = vmatpush.msra.mxu0 %v139
    %660 = vmatpush.msra.mxu0 %v135
    %661 = vmatpush.msra.mxu0 %v131
    %662 = vmatpush.msra.mxu0 %v127
    %663 = vmatpush.msra.mxu0 %v123
    %664 = vmatpush.msra.mxu0 %v119
    %665 = vmatpush.msra.mxu0 %v115
    %666 = vmatpush.msra.mxu0 %v111
    %667 = vmatpush.msra.mxu0 %v107
    %668 = vmatpush.msra.mxu0 %v103
    %669 = vmatpush.msra.mxu0 %v99
    %670 = vmatpush.msra.mxu0 %v95
    %671 = vmatpush.msra.mxu0 %v91
    %672 = vmatpush.msra.mxu0 %v87
    %673 = vmatpush.msra.mxu0 %v83
    %674 = vmatpush.msra.mxu0 %v79
    %675 = vmatmul.f32.gmra.mxu0 0.0
    %v676 = vpop.f32.mrf.mxu0
    %v677 = vadd.f32 0.0, %v676
    %678 = vdwg.mxu0
    %v679 = vadd.f32 %v513, %v617
    %v680 = vadd.f32 %v539, %v637
    %v681 = vadd.f32 %v565, %v657
    %v682 = vadd.f32 %v591, %v677
    %v683 = vtanh.pop %v679
    %v684 = vtanh.pop %v680
    %v685 = vtanh.pop %v681
    %v686 = vtanh.pop %v682
    %v687 = vmul.f32 %v683, 0.5
    %v688 = vadd.f32 %v687, 0.5
    %v689 = vmul.f32 %v684, 0.5
    %v690 = vadd.f32 %v689, 0.5
    %v691 = vmul.f32 %v686, 0.5
    %v692 = vadd.f32 %v691, 0.5
    %v693 = vmul.f32 %v690, 0.0
    %v694 = vmul.f32 %v688, %v685
    %v695 = vadd.f32 %v693, %v694
    %v696 = vtanh.pop %v695
    %v697 = vmul.f32 %v692, %v696
    %v699 = vperm.slane %v268, 0
    %v700 = vperm.slane %v268, 1
    %v701 = vperm.slane %v268, 2
    %v702 = vperm.slane %v268, 3
    %707 = vmatpush.msra.mxu0 %v200
    %708 = vmatpush.msra.mxu0 %v196
    %709 = vmatpush.msra.mxu0 %v192
    %710 = vmatpush.msra.mxu0 %v188
    %711 = vmatpush.msra.mxu0 %v184
    %712 = vmatpush.msra.mxu0 %v180
    %713 = vmatpush.msra.mxu0 %v176
    %714 = vmatpush.msra.mxu0 %v172
    %715 = vmatpush.msra.mxu0 %v168
    %716 = vmatpush.msra.mxu0 %v164
    %717 = vmatpush.msra.mxu0 %v160
    %718 = vmatpush.msra.mxu0 %v156
    %719 = vmatpush.msra.mxu0 %v152
    %720 = vmatpush.msra.mxu0 %v148
    %721 = vmatpush.msra.mxu0 %v144
    %722 = vmatpush.msra.mxu0 %v140
    %723 = vmatmul.f32.gmra.mxu0 %v697
    %v724 = vpop.f32.mrf.mxu0
    %v725 = vadd.f32 %v699, %v724
    %726 = vdwg.mxu0
    %727 = vmatpush.msra.mxu0 %v264
    %728 = vmatpush.msra.mxu0 %v260
    %729 = vmatpush.msra.mxu0 %v256
    %730 = vmatpush.msra.mxu0 %v252
    %731 = vmatpush.msra.mxu0 %v248
    %732 = vmatpush.msra.mxu0 %v244
    %733 = vmatpush.msra.mxu0 %v240
    %734 = vmatpush.msra.mxu0 %v236
    %735 = vmatpush.msra.mxu0 %v232
    %736 = vmatpush.msra.mxu0 %v228
    %737 = vmatpush.msra.mxu0 %v224
    %738 = vmatpush.msra.mxu0 %v220
    %739 = vmatpush.msra.mxu0 %v216
    %740 = vmatpush.msra.mxu0 %v212
    %741 = vmatpush.msra.mxu0 %v208
    %742 = vmatpush.msra.mxu0 %v204
    %743 = vmatmul.f32.gmra.mxu0 0.0
    %v744 = vpop.f32.mrf.mxu0
    %v745 = vadd.f32 %v725, %v744
    %746 = vdwg.mxu0
    %747 = vmatpush.msra.mxu0 %v201
    %748 = vmatpush.msra.mxu0 %v197
    %749 = vmatpush.msra.mxu0 %v193
    %750 = vmatpush.msra.mxu0 %v189
    %751 = vmatpush.msra.mxu0 %v185
    %752 = vmatpush.msra.mxu0 %v181
    %753 = vmatpush.msra.mxu0 %v177
    %754 = vmatpush.msra.mxu0 %v173
    %755 = vmatpush.msra.mxu0 %v169
    %756 = vmatpush.msra.mxu0 %v165
    %757 = vmatpush.msra.mxu0 %v161
    %758 = vmatpush.msra.mxu0 %v157
    %759 = vmatpush.msra.mxu0 %v153
    %760 = vmatpush.msra.mxu0 %v149
    %761 = vmatpush.msra.mxu0 %v145
    %762 = vmatpush.msra.mxu0 %v141
    %763 = vmatmul.f32.gmra.mxu0 %v697
    %v764 = vpop.f32.mrf.mxu0
    %v765 = vadd.f32 %v700, %v764
    %766 = vdwg.mxu0
    %767 = vmatpush.msra.mxu0 %v265
    %768 = vmatpush.msra.mxu0 %v261
    %769 = vmatpush.msra.mxu0 %v257
    %770 = vmatpush.msra.mxu0 %v253
    %771 = vmatpush.msra.mxu0 %v249
    %772 = vmatpush.msra.mxu0 %v245
    %773 = vmatpush.msra.mxu0 %v241
    %774 = vmatpush.msra.mxu0 %v237
    %775 = vmatpush.msra.mxu0 %v233
    %776 = vmatpush.msra.mxu0 %v229
    %777 = vmatpush.msra.mxu0 %v225
    %778 = vmatpush.msra.mxu0 %v221
    %779 = vmatpush.msra.mxu0 %v217
    %780 = vmatpush.msra.mxu0 %v213
    %781 = vmatpush.msra.mxu0 %v209
    %782 = vmatpush.msra.mxu0 %v205
    %783 = vmatmul.f32.gmra.mxu0 0.0
    %v784 = vpop.f32.mrf.mxu0
    %v785 = vadd.f32 %v765, %v784
    %786 = vdwg.mxu0
    %787 = vmatpush.msra.mxu0 %v202
    %788 = vmatpush.msra.mxu0 %v198
    %789 = vmatpush.msra.mxu0 %v194
    %790 = vmatpush.msra.mxu0 %v190
    %791 = vmatpush.msra.mxu0 %v186
    %792 = vmatpush.msra.mxu0 %v182
    %793 = vmatpush.msra.mxu0 %v178
    %794 = vmatpush.msra.mxu0 %v174
    %795 = vmatpush.msra.mxu0 %v170
    %796 = vmatpush.msra.mxu0 %v166
    %797 = vmatpush.msra.mxu0 %v162
    %798 = vmatpush.msra.mxu0 %v158
    %799 = vmatpush.msra.mxu0 %v154
    %800 = vmatpush.msra.mxu0 %v150
    %801 = vmatpush.msra.mxu0 %v146
    %802 = vmatpush.msra.mxu0 %v142
    %803 = vmatmul.f32.gmra.mxu0 %v697
    %v804 = vpop.f32.mrf.mxu0
    %v805 = vadd.f32 %v701, %v804
    %806 = vdwg.mxu0
    %807 = vmatpush.msra.mxu0 %v266
    %808 = vmatpush.msra.mxu0 %v262
    %809 = vmatpush.msra.mxu0 %v258
    %810 = vmatpush.msra.mxu0 %v254
    %811 = vmatpush.msra.mxu0 %v250
    %812 = vmatpush.msra.mxu0 %v246
    %813 = vmatpush.msra.mxu0 %v242
    %814 = vmatpush.msra.mxu0 %v238
    %815 = vmatpush.msra.mxu0 %v234
    %816 = vmatpush.msra.mxu0 %v230
    %817 = vmatpush.msra.mxu0 %v226
    %818 = vmatpush.msra.mxu0 %v222
    %819 = vmatpush.msra.mxu0 %v218
    %820 = vmatpush.msra.mxu0 %v214
    %821 = vmatpush.msra.mxu0 %v210
    %822 = vmatpush.msra.mxu0 %v206
    %823 = vmatmul.f32.gmra.mxu0 0.0
    %v824 = vpop.f32.mrf.mxu0
    %v825 = vadd.f32 %v805, %v824
    %826 = vdwg.mxu0
    %827 = vmatpush.msra.mxu0 %v203
    %828 = vmatpush.msra.mxu0 %v199
    %829 = vmatpush.msra.mxu0 %v195
    %830 = vmatpush.msra.mxu0 %v191
    %831 = vmatpush.msra.mxu0 %v187
    %832 = vmatpush.msra.mxu0 %v183
    %833 = vmatpush.msra.mxu0 %v179
    %834 = vmatpush.msra.mxu0 %v175
    %835 = vmatpush.msra.mxu0 %v171
    %836 = vmatpush.msra.mxu0 %v167
    %837 = vmatpush.msra.mxu0 %v163
    %838 = vmatpush.msra.mxu0 %v159
    %839 = vmatpush.msra.mxu0 %v155
    %840 = vmatpush.msra.mxu0 %v151
    %841 = vmatpush.msra.mxu0 %v147
    %842 = vmatpush.msra.mxu0 %v143
    %843 = vmatmul.f32.gmra.mxu0 %v697
    %v844 = vpop.f32.mrf.mxu0
    %v845 = vadd.f32 %v702, %v844
    %846 = vdwg.mxu0
    %847 = vmatpush.msra.mxu0 %v267
    %848 = vmatpush.msra.mxu0 %v263
    %849 = vmatpush.msra.mxu0 %v259
    %850 = vmatpush.msra.mxu0 %v255
    %851 = vmatpush.msra.mxu0 %v251
    %852 = vmatpush.msra.mxu0 %v247
    %853 = vmatpush.msra.mxu0 %v243
    %854 = vmatpush.msra.mxu0 %v239
    %855 = vmatpush.msra.mxu0 %v235
    %856 = vmatpush.msra.mxu0 %v231
    %857 = vmatpush.msra.mxu0 %v227
    %858 = vmatpush.msra.mxu0 %v223
    %859 = vmatpush.msra.mxu0 %v219
    %860 = vmatpush.msra.mxu0 %v215
    %861 = vmatpush.msra.mxu0 %v211
    %862 = vmatpush.msra.mxu0 %v207
    %863 = vmatmul.f32.gmra.mxu0 0.0
    %v864 = vpop.f32.mrf.mxu0
    %v865 = vadd.f32 %v845, %v864
    %866 = vdwg.mxu0
    %v867 = vtanh.pop %v745
    %v868 = vtanh.pop %v785
    %v869 = vtanh.pop %v825
    %v870 = vtanh.pop %v865
    %v871 = vmul.f32 %v867, 0.5
    %v872 = vadd.f32 %v871, 0.5
    %v873 = vmul.f32 %v868, 0.5
    %v874 = vadd.f32 %v873, 0.5
    %v875 = vmul.f32 %v870, 0.5
    %v876 = vadd.f32 %v875, 0.5
    %v877 = vmul.f32 %v874, 0.0
    %v878 = vmul.f32 %v872, %v869
    %v879 = vadd.f32 %v877, %v878
    %v880 = vtanh.pop %v879
    %v881 = vmul.f32 %v876, %v880
    %882 = vmatpush.msra.mxu0 %v136
    %883 = vmatpush.msra.mxu0 %v132
    %884 = vmatpush.msra.mxu0 %v128
    %885 = vmatpush.msra.mxu0 %v124
    %886 = vmatpush.msra.mxu0 %v120
    %887 = vmatpush.msra.mxu0 %v116
    %888 = vmatpush.msra.mxu0 %v112
    %889 = vmatpush.msra.mxu0 %v108
    %890 = vmatpush.msra.mxu0 %v104
    %891 = vmatpush.msra.mxu0 %v100
    %892 = vmatpush.msra.mxu0 %v96
    %893 = vmatpush.msra.mxu0 %v92
    %894 = vmatpush.msra.mxu0 %v88
    %895 = vmatpush.msra.mxu0 %v84
    %896 = vmatpush.msra.mxu0 %v80
    %897 = vmatpush.msra.mxu0 %v76
    %898 = vmatmul.f32.gmra.mxu0 %v697
    %v899 = vpop.f32.mrf.mxu0
    %v900 = vadd.f32 0.0, %v899
    %901 = vdwg.mxu0
    %902 = vmatpush.msra.mxu0 %v137
    %903 = vmatpush.msra.mxu0 %v133
    %904 = vmatpush.msra.mxu0 %v129
    %905 = vmatpush.msra.mxu0 %v125
    %906 = vmatpush.msra.mxu0 %v121
    %907 = vmatpush.msra.mxu0 %v117
    %908 = vmatpush.msra.mxu0 %v113
    %909 = vmatpush.msra.mxu0 %v109
    %910 = vmatpush.msra.mxu0 %v105
    %911 = vmatpush.msra.mxu0 %v101
    %912 = vmatpush.msra.mxu0 %v97
    %913 = vmatpush.msra.mxu0 %v93
    %914 = vmatpush.msra.mxu0 %v89
    %915 = vmatpush.msra.mxu0 %v85
    %916 = vmatpush.msra.mxu0 %v81
    %917 = vmatpush.msra.mxu0 %v77
    %918 = vmatmul.f32.gmra.mxu0 %v697
    %v919 = vpop.f32.mrf.mxu0
    %v920 = vadd.f32 0.0, %v919
    %921 = vdwg.mxu0
    %922 = vmatpush.msra.mxu0 %v138
    %923 = vmatpush.msra.mxu0 %v134
    %924 = vmatpush.msra.mxu0 %v130
    %925 = vmatpush.msra.mxu0 %v126
    %926 = vmatpush.msra.mxu0 %v122
    %927 = vmatpush.msra.mxu0 %v118
    %928 = vmatpush.msra.mxu0 %v114
    %929 = vmatpush.msra.mxu0 %v110
    %930 = vmatpush.msra.mxu0 %v106
    %931 = vmatpush.msra.mxu0 %v102
    %932 = vmatpush.msra.mxu0 %v98
    %933 = vmatpush.msra.mxu0 %v94
    %934 = vmatpush.msra.mxu0 %v90
    %935 = vmatpush.msra.mxu0 %v86
    %936 = vmatpush.msra.mxu0 %v82
    %937 = vmatpush.msra.mxu0 %v78
    %938 = vmatmul.f32.gmra.mxu0 %v697
    %v939 = vpop.f32.mrf.mxu0
    %v940 = vadd.f32 0.0, %v939
    %941 = vdwg.mxu0
    %942 = vmatpush.msra.mxu0 %v139
    %943 = vmatpush.msra.mxu0 %v135
    %944 = vmatpush.msra.mxu0 %v131
    %945 = vmatpush.msra.mxu0 %v127
    %946 = vmatpush.msra.mxu0 %v123
    %947 = vmatpush.msra.mxu0 %v119
    %948 = vmatpush.msra.mxu0 %v115
    %949 = vmatpush.msra.mxu0 %v111
    %950 = vmatpush.msra.mxu0 %v107
    %951 = vmatpush.msra.mxu0 %v103
    %952 = vmatpush.msra.mxu0 %v99
    %953 = vmatpush.msra.mxu0 %v95
    %954 = vmatpush.msra.mxu0 %v91
    %955 = vmatpush.msra.mxu0 %v87
    %956 = vmatpush.msra.mxu0 %v83
    %957 = vmatpush.msra.mxu0 %v79
    %958 = vmatmul.f32.gmra.mxu0 %v697
    %v959 = vpop.f32.mrf.mxu0
    %v960 = vadd.f32 0.0, %v959
    %961 = vdwg.mxu0
    %v966 = vrot.slane %v900, 6
    %v967 = vrot.slane %v920, 6
    %v968 = vrot.slane %v940, 6
    %v969 = vrot.slane %v960, 6
    %v974 = vadd.f32 %v513, %v966
    %v975 = vadd.f32 %v539, %v967
    %v976 = vadd.f32 %v565, %v968
    %v977 = vadd.f32 %v591, %v969
    %v978 = vtanh.pop %v974
    %v979 = vtanh.pop %v975
    %v980 = vtanh.pop %v976
    %v981 = vtanh.pop %v977
    %v982 = vmul.f32 %v978, 0.5
    %v983 = vadd.f32 %v982, 0.5
    %v984 = vmul.f32 %v979, 0.5
    %v985 = vadd.f32 %v984, 0.5
    %v986 = vmul.f32 %v981, 0.5
    %v987 = vadd.f32 %v986, 0.5
    %v989 = vrot.slane %v695, 6
    %v991 = vmul.f32 %v985, %v989
    %v992 = vmul.f32 %v983, %v980
    %v993 = vadd.f32 %v991, %v992
    %v994 = vtanh.pop %v993
    %v995 = vmul.f32 %v987, %v994
    %v997 = vrot.slane %v881, 6
    %v999 = vrot.slane %v995, 2
    %v1000 = vrot.slane %v997, 2
    %1003 = vmatpush.msra.mxu0 %v200
    %1004 = vmatpush.msra.mxu0 %v196
    %1005 = vmatpush.msra.mxu0 %v192
    %1006 = vmatpush.msra.mxu0 %v188
    %1007 = vmatpush.msra.mxu0 %v184
    %1008 = vmatpush.msra.mxu0 %v180
    %1009 = vmatpush.msra.mxu0 %v176
    %1010 = vmatpush.msra.mxu0 %v172
    %1011 = vmatpush.msra.mxu0 %v168
    %1012 = vmatpush.msra.mxu0 %v164
    %1013 = vmatpush.msra.mxu0 %v160
    %1014 = vmatpush.msra.mxu0 %v156
    %1015 = vmatpush.msra.mxu0 %v152
    %1016 = vmatpush.msra.mxu0 %v148
    %1017 = vmatpush.msra.mxu0 %v144
    %1018 = vmatpush.msra.mxu0 %v140
    %1019 = vmatmul.f32.gmra.mxu0 %v999
    %v1020 = vpop.f32.mrf.mxu0
    %v1021 = vadd.f32 %v699, %v1020
    %1022 = vdwg.mxu0
    %1023 = vmatpush.msra.mxu0 %v264
    %1024 = vmatpush.msra.mxu0 %v260
    %1025 = vmatpush.msra.mxu0 %v256
    %1026 = vmatpush.msra.mxu0 %v252
    %1027 = vmatpush.msra.mxu0 %v248
    %1028 = vmatpush.msra.mxu0 %v244
    %1029 = vmatpush.msra.mxu0 %v240
    %1030 = vmatpush.msra.mxu0 %v236
    %1031 = vmatpush.msra.mxu0 %v232
    %1032 = vmatpush.msra.mxu0 %v228
    %1033 = vmatpush.msra.mxu0 %v224
    %1034 = vmatpush.msra.mxu0 %v220
    %1035 = vmatpush.msra.mxu0 %v216
    %1036 = vmatpush.msra.mxu0 %v212
    %1037 = vmatpush.msra.mxu0 %v208
    %1038 = vmatpush.msra.mxu0 %v204
    %1039 = vmatmul.f32.gmra.mxu0 %v1000
    %v1040 = vpop.f32.mrf.mxu0
    %v1041 = vadd.f32 %v1021, %v1040
    %1042 = vdwg.mxu0
    %1043 = vmatpush.msra.mxu0 %v201
    %1044 = vmatpush.msra.mxu0 %v197
    %1045 = vmatpush.msra.mxu0 %v193
    %1046 = vmatpush.msra.mxu0 %v189
    %1047 = vmatpush.msra.mxu0 %v185
    %1048 = vmatpush.msra.mxu0 %v181
    %1049 = vmatpush.msra.mxu0 %v177
    %1050 = vmatpush.msra.mxu0 %v173
    %1051 = vmatpush.msra.mxu0 %v169
    %1052 = vmatpush.msra.mxu0 %v165
    %1053 = vmatpush.msra.mxu0 %v161
    %1054 = vmatpush.msra.mxu0 %v157
    %1055 = vmatpush.msra.mxu0 %v153
    %1056 = vmatpush.msra.mxu0 %v149
    %1057 = vmatpush.msra.mxu0 %v145
    %1058 = vmatpush.msra.mxu0 %v141
    %1059 = vmatmul.f32.gmra.mxu0 %v999
    %v1060 = vpop.f32.mrf.mxu0
    %v1061 = vadd.f32 %v700, %v1060
    %1062 = vdwg.mxu0
    %1063 = vmatpush.msra.mxu0 %v265
    %1064 = vmatpush.msra.mxu0 %v261
    %1065 = vmatpush.msra.mxu0 %v257
    %1066 = vmatpush.msra.mxu0 %v253
    %1067 = vmatpush.msra.mxu0 %v249
    %1068 = vmatpush.msra.mxu0 %v245
    %1069 = vmatpush.msra.mxu0 %v241
    %1070 = vmatpush.msra.mxu0 %v237
    %1071 = vmatpush.msra.mxu0 %v233
    %1072 = vmatpush.msra.mxu0 %v229
    %1073 = vmatpush.msra.mxu0 %v225
    %1074 = vmatpush.msra.mxu0 %v221
    %1075 = vmatpush.msra.mxu0 %v217
    %1076 = vmatpush.msra.mxu0 %v213
    %1077 = vmatpush.msra.mxu0 %v209
    %1078 = vmatpush.msra.mxu0 %v205
    %1079 = vmatmul.f32.gmra.mxu0 %v1000
    %v1080 = vpop.f32.mrf.mxu0
    %v1081 = vadd.f32 %v1061, %v1080
    %1082 = vdwg.mxu0
    %1083 = vmatpush.msra.mxu0 %v202
    %1084 = vmatpush.msra.mxu0 %v198
    %1085 = vmatpush.msra.mxu0 %v194
    %1086 = vmatpush.msra.mxu0 %v190
    %1087 = vmatpush.msra.mxu0 %v186
    %1088 = vmatpush.msra.mxu0 %v182
    %1089 = vmatpush.msra.mxu0 %v178
    %1090 = vmatpush.msra.mxu0 %v174
    %1091 = vmatpush.msra.mxu0 %v170
    %1092 = vmatpush.msra.mxu0 %v166
    %1093 = vmatpush.msra.mxu0 %v162
    %1094 = vmatpush.msra.mxu0 %v158
    %1095 = vmatpush.msra.mxu0 %v154
    %1096 = vmatpush.msra.mxu0 %v150
    %1097 = vmatpush.msra.mxu0 %v146
    %1098 = vmatpush.msra.mxu0 %v142
    %1099 = vmatmul.f32.gmra.mxu0 %v999
    %v1100 = vpop.f32.mrf.mxu0
    %v1101 = vadd.f32 %v701, %v1100
    %1102 = vdwg.mxu0
    %1103 = vmatpush.msra.mxu0 %v266
    %1104 = vmatpush.msra.mxu0 %v262
    %1105 = vmatpush.msra.mxu0 %v258
    %1106 = vmatpush.msra.mxu0 %v254
    %1107 = vmatpush.msra.mxu0 %v250
    %1108 = vmatpush.msra.mxu0 %v246
    %1109 = vmatpush.msra.mxu0 %v242
    %1110 = vmatpush.msra.mxu0 %v238
    %1111 = vmatpush.msra.mxu0 %v234
    %1112 = vmatpush.msra.mxu0 %v230
    %1113 = vmatpush.msra.mxu0 %v226
    %1114 = vmatpush.msra.mxu0 %v222
    %1115 = vmatpush.msra.mxu0 %v218
    %1116 = vmatpush.msra.mxu0 %v214
    %1117 = vmatpush.msra.mxu0 %v210
    %1118 = vmatpush.msra.mxu0 %v206
    %1119 = vmatmul.f32.gmra.mxu0 %v1000
    %v1120 = vpop.f32.mrf.mxu0
    %v1121 = vadd.f32 %v1101, %v1120
    %1122 = vdwg.mxu0
    %1123 = vmatpush.msra.mxu0 %v203
    %1124 = vmatpush.msra.mxu0 %v199
    %1125 = vmatpush.msra.mxu0 %v195
    %1126 = vmatpush.msra.mxu0 %v191
    %1127 = vmatpush.msra.mxu0 %v187
    %1128 = vmatpush.msra.mxu0 %v183
    %1129 = vmatpush.msra.mxu0 %v179
    %1130 = vmatpush.msra.mxu0 %v175
    %1131 = vmatpush.msra.mxu0 %v171
    %1132 = vmatpush.msra.mxu0 %v167
    %1133 = vmatpush.msra.mxu0 %v163
    %1134 = vmatpush.msra.mxu0 %v159
    %1135 = vmatpush.msra.mxu0 %v155
    %1136 = vmatpush.msra.mxu0 %v151
    %1137 = vmatpush.msra.mxu0 %v147
    %1138 = vmatpush.msra.mxu0 %v143
    %1139 = vmatmul.f32.gmra.mxu0 %v999
    %v1140 = vpop.f32.mrf.mxu0
    %v1141 = vadd.f32 %v702, %v1140
    %1142 = vdwg.mxu0
    %1143 = vmatpush.msra.mxu0 %v267
    %1144 = vmatpush.msra.mxu0 %v263
    %1145 = vmatpush.msra.mxu0 %v259
    %1146 = vmatpush.msra.mxu0 %v255
    %1147 = vmatpush.msra.mxu0 %v251
    %1148 = vmatpush.msra.mxu0 %v247
    %1149 = vmatpush.msra.mxu0 %v243
    %1150 = vmatpush.msra.mxu0 %v239
    %1151 = vmatpush.msra.mxu0 %v235
    %1152 = vmatpush.msra.mxu0 %v231
    %1153 = vmatpush.msra.mxu0 %v227
    %1154 = vmatpush.msra.mxu0 %v223
    %1155 = vmatpush.msra.mxu0 %v219
    %1156 = vmatpush.msra.mxu0 %v215
    %1157 = vmatpush.msra.mxu0 %v211
    %1158 = vmatpush.msra.mxu0 %v207
    %1159 = vmatmul.f32.gmra.mxu0 %v1000
    %v1160 = vpop.f32.mrf.mxu0
    %v1161 = vadd.f32 %v1141, %v1160
    %1162 = vdwg.mxu0
    %v1163 = vtanh.pop %v1041
    %v1164 = vtanh.pop %v1081
    %v1165 = vtanh.pop %v1121
    %v1166 = vtanh.pop %v1161
    %v1167 = vmul.f32 %v1163, 0.5
    %v1168 = vadd.f32 %v1167, 0.5
    %v1169 = vmul.f32 %v1164, 0.5
    %v1170 = vadd.f32 %v1169, 0.5
    %v1171 = vmul.f32 %v1166, 0.5
    %v1172 = vadd.f32 %v1171, 0.5
    %v1173 = vmul.f32 %v1170, %v879
    %v1174 = vmul.f32 %v1168, %v1165
    %v1175 = vadd.f32 %v1173, %v1174
    %v1176 = vtanh.pop %v1175
    %v1177 = vmul.f32 %v1172, %v1176
    %1178 = vmatpush.msra.mxu0 %v136
    %1179 = vmatpush.msra.mxu0 %v132
    %1180 = vmatpush.msra.mxu0 %v128
    %1181 = vmatpush.msra.mxu0 %v124
    %1182 = vmatpush.msra.mxu0 %v120
    %1183 = vmatpush.msra.mxu0 %v116
    %1184 = vmatpush.msra.mxu0 %v112
    %1185 = vmatpush.msra.mxu0 %v108
    %1186 = vmatpush.msra.mxu0 %v104
    %1187 = vmatpush.msra.mxu0 %v100
    %1188 = vmatpush.msra.mxu0 %v96
    %1189 = vmatpush.msra.mxu0 %v92
    %1190 = vmatpush.msra.mxu0 %v88
    %1191 = vmatpush.msra.mxu0 %v84
    %1192 = vmatpush.msra.mxu0 %v80
    %1193 = vmatpush.msra.mxu0 %v76
    %1194 = vmatmul.f32.gmra.mxu0 %v999
    %v1195 = vpop.f32.mrf.mxu0
    %v1196 = vadd.f32 0.0, %v1195
    %1197 = vdwg.mxu0
    %1198 = vmatpush.msra.mxu0 %v137
    %1199 = vmatpush.msra.mxu0 %v133
    %1200 = vmatpush.msra.mxu0 %v129
    %1201 = vmatpush.msra.mxu0 %v125
    %1202 = vmatpush.msra.mxu0 %v121
    %1203 = vmatpush.msra.mxu0 %v117
    %1204 = vmatpush.msra.mxu0 %v113
    %1205 = vmatpush.msra.mxu0 %v109
    %1206 = vmatpush.msra.mxu0 %v105
    %1207 = vmatpush.msra.mxu0 %v101
    %1208 = vmatpush.msra.mxu0 %v97
    %1209 = vmatpush.msra.mxu0 %v93
    %1210 = vmatpush.msra.mxu0 %v89
    %1211 = vmatpush.msra.mxu0 %v85
    %1212 = vmatpush.msra.mxu0 %v81
    %1213 = vmatpush.msra.mxu0 %v77
    %1214 = vmatmul.f32.gmra.mxu0 %v999
    %v1215 = vpop.f32.mrf.mxu0
    %v1216 = vadd.f32 0.0, %v1215
    %1217 = vdwg.mxu0
    %1218 = vmatpush.msra.mxu0 %v138
    %1219 = vmatpush.msra.mxu0 %v134
    %1220 = vmatpush.msra.mxu0 %v130
    %1221 = vmatpush.msra.mxu0 %v126
    %1222 = vmatpush.msra.mxu0 %v122
    %1223 = vmatpush.msra.mxu0 %v118
    %1224 = vmatpush.msra.mxu0 %v114
    %1225 = vmatpush.msra.mxu0 %v110
    %1226 = vmatpush.msra.mxu0 %v106
    %1227 = vmatpush.msra.mxu0 %v102
    %1228 = vmatpush.msra.mxu0 %v98
    %1229 = vmatpush.msra.mxu0 %v94
    %1230 = vmatpush.msra.mxu0 %v90
    %1231 = vmatpush.msra.mxu0 %v86
    %1232 = vmatpush.msra.mxu0 %v82
    %1233 = vmatpush.msra.mxu0 %v78
    %1234 = vmatmul.f32.gmra.mxu0 %v999
    %v1235 = vpop.f32.mrf.mxu0
    %v1236 = vadd.f32 0.0, %v1235
    %1237 = vdwg.mxu0
    %1238 = vmatpush.msra.mxu0 %v139
    %1239 = vmatpush.msra.mxu0 %v135
    %1240 = vmatpush.msra.mxu0 %v131
    %1241 = vmatpush.msra.mxu0 %v127
    %1242 = vmatpush.msra.mxu0 %v123
    %1243 = vmatpush.msra.mxu0 %v119
    %1244 = vmatpush.msra.mxu0 %v115
    %1245 = vmatpush.msra.mxu0 %v111
    %1246 = vmatpush.msra.mxu0 %v107
    %1247 = vmatpush.msra.mxu0 %v103
    %1248 = vmatpush.msra.mxu0 %v99
    %1249 = vmatpush.msra.mxu0 %v95
    %1250 = vmatpush.msra.mxu0 %v91
    %1251 = vmatpush.msra.mxu0 %v87
    %1252 = vmatpush.msra.mxu0 %v83
    %1253 = vmatpush.msra.mxu0 %v79
    %1254 = vmatmul.f32.gmra.mxu0 %v999
    %v1255 = vpop.f32.mrf.mxu0
    %v1256 = vadd.f32 0.0, %v1255
    %1257 = vdwg.mxu0
    %v1262 = vrot.slane %v1196, 4
    %v1263 = vrot.slane %v1216, 4
    %v1264 = vrot.slane %v1236, 4
    %v1265 = vrot.slane %v1256, 4
    %v1270 = vadd.f32 %v513, %v1262
    %v1271 = vadd.f32 %v539, %v1263
    %v1272 = vadd.f32 %v565, %v1264
    %v1273 = vadd.f32 %v591, %v1265
    %v1274 = vtanh.pop %v1270
    %v1275 = vtanh.pop %v1271
    %v1276 = vtanh.pop %v1272
    %v1277 = vtanh.pop %v1273
    %v1278 = vmul.f32 %v1274, 0.5
    %v1279 = vadd.f32 %v1278, 0.5
    %v1280 = vmul.f32 %v1275, 0.5
    %v1281 = vadd.f32 %v1280, 0.5
    %v1282 = vmul.f32 %v1277, 0.5
    %v1283 = vadd.f32 %v1282, 0.5
    %v1285 = vrot.slane %v993, 6
    %v1287 = vmul.f32 %v1281, %v1285
    %v1288 = vmul.f32 %v1279, %v1276
    %v1289 = vadd.f32 %v1287, %v1288
    %v1290 = vtanh.pop %v1289
    %v1291 = vmul.f32 %v1283, %v1290
    %v1293 = vrot.slane %v1177, 4
    %v1295 = vrot.slane %v1291, 4
    %v1296 = vrot.slane %v1293, 4
    %1299 = vmatpush.msra.mxu0 %v200
    %1300 = vmatpush.msra.mxu0 %v196
    %1301 = vmatpush.msra.mxu0 %v192
    %1302 = vmatpush.msra.mxu0 %v188
    %1303 = vmatpush.msra.mxu0 %v184
    %1304 = vmatpush.msra.mxu0 %v180
    %1305 = vmatpush.msra.mxu0 %v176
    %1306 = vmatpush.msra.mxu0 %v172
    %1307 = vmatpush.msra.mxu0 %v168
    %1308 = vmatpush.msra.mxu0 %v164
    %1309 = vmatpush.msra.mxu0 %v160
    %1310 = vmatpush.msra.mxu0 %v156
    %1311 = vmatpush.msra.mxu0 %v152
    %1312 = vmatpush.msra.mxu0 %v148
    %1313 = vmatpush.msra.mxu0 %v144
    %1314 = vmatpush.msra.mxu0 %v140
    %1315 = vmatmul.f32.gmra.mxu0 %v1295
    %v1316 = vpop.f32.mrf.mxu0
    %v1317 = vadd.f32 %v699, %v1316
    %1318 = vdwg.mxu0
    %1319 = vmatpush.msra.mxu0 %v264
    %1320 = vmatpush.msra.mxu0 %v260
    %1321 = vmatpush.msra.mxu0 %v256
    %1322 = vmatpush.msra.mxu0 %v252
    %1323 = vmatpush.msra.mxu0 %v248
    %1324 = vmatpush.msra.mxu0 %v244
    %1325 = vmatpush.msra.mxu0 %v240
    %1326 = vmatpush.msra.mxu0 %v236
    %1327 = vmatpush.msra.mxu0 %v232
    %1328 = vmatpush.msra.mxu0 %v228
    %1329 = vmatpush.msra.mxu0 %v224
    %1330 = vmatpush.msra.mxu0 %v220
    %1331 = vmatpush.msra.mxu0 %v216
    %1332 = vmatpush.msra.mxu0 %v212
    %1333 = vmatpush.msra.mxu0 %v208
    %1334 = vmatpush.msra.mxu0 %v204
    %1335 = vmatmul.f32.gmra.mxu0 %v1296
    %v1336 = vpop.f32.mrf.mxu0
    %v1337 = vadd.f32 %v1317, %v1336
    %1338 = vdwg.mxu0
    %1339 = vmatpush.msra.mxu0 %v201
    %1340 = vmatpush.msra.mxu0 %v197
    %1341 = vmatpush.msra.mxu0 %v193
    %1342 = vmatpush.msra.mxu0 %v189
    %1343 = vmatpush.msra.mxu0 %v185
    %1344 = vmatpush.msra.mxu0 %v181
    %1345 = vmatpush.msra.mxu0 %v177
    %1346 = vmatpush.msra.mxu0 %v173
    %1347 = vmatpush.msra.mxu0 %v169
    %1348 = vmatpush.msra.mxu0 %v165
    %1349 = vmatpush.msra.mxu0 %v161
    %1350 = vmatpush.msra.mxu0 %v157
    %1351 = vmatpush.msra.mxu0 %v153
    %1352 = vmatpush.msra.mxu0 %v149
    %1353 = vmatpush.msra.mxu0 %v145
    %1354 = vmatpush.msra.mxu0 %v141
    %1355 = vmatmul.f32.gmra.mxu0 %v1295
    %v1356 = vpop.f32.mrf.mxu0
    %v1357 = vadd.f32 %v700, %v1356
    %1358 = vdwg.mxu0
    %1359 = vmatpush.msra.mxu0 %v265
    %1360 = vmatpush.msra.mxu0 %v261
    %1361 = vmatpush.msra.mxu0 %v257
    %1362 = vmatpush.msra.mxu0 %v253
    %1363 = vmatpush.msra.mxu0 %v249
    %1364 = vmatpush.msra.mxu0 %v245
    %1365 = vmatpush.msra.mxu0 %v241
    %1366 = vmatpush.msra.mxu0 %v237
    %1367 = vmatpush.msra.mxu0 %v233
    %1368 = vmatpush.msra.mxu0 %v229
    %1369 = vmatpush.msra.mxu0 %v225
    %1370 = vmatpush.msra.mxu0 %v221
    %1371 = vmatpush.msra.mxu0 %v217
    %1372 = vmatpush.msra.mxu0 %v213
    %1373 = vmatpush.msra.mxu0 %v209
    %1374 = vmatpush.msra.mxu0 %v205
    %1375 = vmatmul.f32.gmra.mxu0 %v1296
    %v1376 = vpop.f32.mrf.mxu0
    %v1377 = vadd.f32 %v1357, %v1376
    %1378 = vdwg.mxu0
    %1379 = vmatpush.msra.mxu0 %v202
    %1380 = vmatpush.msra.mxu0 %v198
    %1381 = vmatpush.msra.mxu0 %v194
    %1382 = vmatpush.msra.mxu0 %v190
    %1383 = vmatpush.msra.mxu0 %v186
    %1384 = vmatpush.msra.mxu0 %v182
    %1385 = vmatpush.msra.mxu0 %v178
    %1386 = vmatpush.msra.mxu0 %v174
    %1387 = vmatpush.msra.mxu0 %v170
    %1388 = vmatpush.msra.mxu0 %v166
    %1389 = vmatpush.msra.mxu0 %v162
    %1390 = vmatpush.msra.mxu0 %v158
    %1391 = vmatpush.msra.mxu0 %v154
    %1392 = vmatpush.msra.mxu0 %v150
    %1393 = vmatpush.msra.mxu0 %v146
    %1394 = vmatpush.msra.mxu0 %v142
    %1395 = vmatmul.f32.gmra.mxu0 %v1295
    %v1396 = vpop.f32.mrf.mxu0
    %v1397 = vadd.f32 %v701, %v1396
    %1398 = vdwg.mxu0
    %1399 = vmatpush.msra.mxu0 %v266
    %1400 = vmatpush.msra.mxu0 %v262
    %1401 = vmatpush.msra.mxu0 %v258
    %1402 = vmatpush.msra.mxu0 %v254
    %1403 = vmatpush.msra.mxu0 %v250
    %1404 = vmatpush.msra.mxu0 %v246
    %1405 = vmatpush.msra.mxu0 %v242
    %1406 = vmatpush.msra.mxu0 %v238
    %1407 = vmatpush.msra.mxu0 %v234
    %1408 = vmatpush.msra.mxu0 %v230
    %1409 = vmatpush.msra.mxu0 %v226
    %1410 = vmatpush.msra.mxu0 %v222
    %1411 = vmatpush.msra.mxu0 %v218
    %1412 = vmatpush.msra.mxu0 %v214
    %1413 = vmatpush.msra.mxu0 %v210
    %1414 = vmatpush.msra.mxu0 %v206
    %1415 = vmatmul.f32.gmra.mxu0 %v1296
    %v1416 = vpop.f32.mrf.mxu0
    %v1417 = vadd.f32 %v1397, %v1416
    %1418 = vdwg.mxu0
    %1419 = vmatpush.msra.mxu0 %v203
    %1420 = vmatpush.msra.mxu0 %v199
    %1421 = vmatpush.msra.mxu0 %v195
    %1422 = vmatpush.msra.mxu0 %v191
    %1423 = vmatpush.msra.mxu0 %v187
    %1424 = vmatpush.msra.mxu0 %v183
    %1425 = vmatpush.msra.mxu0 %v179
    %1426 = vmatpush.msra.mxu0 %v175
    %1427 = vmatpush.msra.mxu0 %v171
    %1428 = vmatpush.msra.mxu0 %v167
    %1429 = vmatpush.msra.mxu0 %v163
    %1430 = vmatpush.msra.mxu0 %v159
    %1431 = vmatpush.msra.mxu0 %v155
    %1432 = vmatpush.msra.mxu0 %v151
    %1433 = vmatpush.msra.mxu0 %v147
    %1434 = vmatpush.msra.mxu0 %v143
    %1435 = vmatmul.f32.gmra.mxu0 %v1295
    %v1436 = vpop.f32.mrf.mxu0
    %v1437 = vadd.f32 %v702, %v1436
    %1438 = vdwg.mxu0
    %1439 = vmatpush.msra.mxu0 %v267
    %1440 = vmatpush.msra.mxu0 %v263
    %1441 = vmatpush.msra.mxu0 %v259
    %1442 = vmatpush.msra.mxu0 %v255
    %1443 = vmatpush.msra.mxu0 %v251
    %1444 = vmatpush.msra.mxu0 %v247
    %1445 = vmatpush.msra.mxu0 %v243
    %1446 = vmatpush.msra.mxu0 %v239
    %1447 = vmatpush.msra.mxu0 %v235
    %1448 = vmatpush.msra.mxu0 %v231
    %1449 = vmatpush.msra.mxu0 %v227
    %1450 = vmatpush.msra.mxu0 %v223
    %1451 = vmatpush.msra.mxu0 %v219
    %1452 = vmatpush.msra.mxu0 %v215
    %1453 = vmatpush.msra.mxu0 %v211
    %1454 = vmatpush.msra.mxu0 %v207
    %1455 = vmatmul.f32.gmra.mxu0 %v1296
    %v1456 = vpop.f32.mrf.mxu0
    %v1457 = vadd.f32 %v1437, %v1456
    %1458 = vdwg.mxu0
    %v1459 = vtanh.pop %v1337
    %v1460 = vtanh.pop %v1377
    %v1461 = vtanh.pop %v1417
    %v1462 = vtanh.pop %v1457
    %v1463 = vmul.f32 %v1459, 0.5
    %v1464 = vadd.f32 %v1463, 0.5
    %v1465 = vmul.f32 %v1460, 0.5
    %v1466 = vadd.f32 %v1465, 0.5
    %v1467 = vmul.f32 %v1462, 0.5
    %v1468 = vadd.f32 %v1467, 0.5
    %v1469 = vmul.f32 %v1466, %v1175
    %v1470 = vmul.f32 %v1464, %v1461
    %v1471 = vadd.f32 %v1469, %v1470
    %v1472 = vtanh.pop %v1471
    %v1473 = vmul.f32 %v1468, %v1472
    %1474 = vmatpush.msra.mxu0 %v136
    %1475 = vmatpush.msra.mxu0 %v132
    %1476 = vmatpush.msra.mxu0 %v128
    %1477 = vmatpush.msra.mxu0 %v124
    %1478 = vmatpush.msra.mxu0 %v120
    %1479 = vmatpush.msra.mxu0 %v116
    %1480 = vmatpush.msra.mxu0 %v112
    %1481 = vmatpush.msra.mxu0 %v108
    %1482 = vmatpush.msra.mxu0 %v104
    %1483 = vmatpush.msra.mxu0 %v100
    %1484 = vmatpush.msra.mxu0 %v96
    %1485 = vmatpush.msra.mxu0 %v92
    %1486 = vmatpush.msra.mxu0 %v88
    %1487 = vmatpush.msra.mxu0 %v84
    %1488 = vmatpush.msra.mxu0 %v80
    %1489 = vmatpush.msra.mxu0 %v76
    %1490 = vmatmul.f32.gmra.mxu0 %v1295
    %v1491 = vpop.f32.mrf.mxu0
    %v1492 = vadd.f32 0.0, %v1491
    %1493 = vdwg.mxu0
    %1494 = vmatpush.msra.mxu0 %v137
    %1495 = vmatpush.msra.mxu0 %v133
    %1496 = vmatpush.msra.mxu0 %v129
    %1497 = vmatpush.msra.mxu0 %v125
    %1498 = vmatpush.msra.mxu0 %v121
    %1499 = vmatpush.msra.mxu0 %v117
    %1500 = vmatpush.msra.mxu0 %v113
    %1501 = vmatpush.msra.mxu0 %v109
    %1502 = vmatpush.msra.mxu0 %v105
    %1503 = vmatpush.msra.mxu0 %v101
    %1504 = vmatpush.msra.mxu0 %v97
    %1505 = vmatpush.msra.mxu0 %v93
    %1506 = vmatpush.msra.mxu0 %v89
    %1507 = vmatpush.msra.mxu0 %v85
    %1508 = vmatpush.msra.mxu0 %v81
    %1509 = vmatpush.msra.mxu0 %v77
    %1510 = vmatmul.f32.gmra.mxu0 %v1295
    %v1511 = vpop.f32.mrf.mxu0
    %v1512 = vadd.f32 0.0, %v1511
    %1513 = vdwg.mxu0
    %1514 = vmatpush.msra.mxu0 %v138
    %1515 = vmatpush.msra.mxu0 %v134
    %1516 = vmatpush.msra.mxu0 %v130
    %1517 = vmatpush.msra.mxu0 %v126
    %1518 = vmatpush.msra.mxu0 %v122
    %1519 = vmatpush.msra.mxu0 %v118
    %1520 = vmatpush.msra.mxu0 %v114
    %1521 = vmatpush.msra.mxu0 %v110
    %1522 = vmatpush.msra.mxu0 %v106
    %1523 = vmatpush.msra.mxu0 %v102
    %1524 = vmatpush.msra.mxu0 %v98
    %1525 = vmatpush.msra.mxu0 %v94
    %1526 = vmatpush.msra.mxu0 %v90
    %1527 = vmatpush.msra.mxu0 %v86
    %1528 = vmatpush.msra.mxu0 %v82
    %1529 = vmatpush.msra.mxu0 %v78
    %1530 = vmatmul.f32.gmra.mxu0 %v1295
    %v1531 = vpop.f32.mrf.mxu0
    %v1532 = vadd.f32 0.0, %v1531
    %1533 = vdwg.mxu0
    %1534 = vmatpush.msra.mxu0 %v139
    %1535 = vmatpush.msra.mxu0 %v135
    %1536 = vmatpush.msra.mxu0 %v131
    %1537 = vmatpush.msra.mxu0 %v127
    %1538 = vmatpush.msra.mxu0 %v123
    %1539 = vmatpush.msra.mxu0 %v119
    %1540 = vmatpush.msra.mxu0 %v115
    %1541 = vmatpush.msra.mxu0 %v111
    %1542 = vmatpush.msra.mxu0 %v107
    %1543 = vmatpush.msra.mxu0 %v103
    %1544 = vmatpush.msra.mxu0 %v99
    %1545 = vmatpush.msra.mxu0 %v95
    %1546 = vmatpush.msra.mxu0 %v91
    %1547 = vmatpush.msra.mxu0 %v87
    %1548 = vmatpush.msra.mxu0 %v83
    %1549 = vmatpush.msra.mxu0 %v79
    %1550 = vmatmul.f32.gmra.mxu0 %v1295
    %v1551 = vpop.f32.mrf.mxu0
    %v1552 = vadd.f32 0.0, %v1551
    %1553 = vdwg.mxu0
    %v1558 = vrot.slane %v1492, 2
    %v1559 = vrot.slane %v1512, 2
    %v1560 = vrot.slane %v1532, 2
    %v1561 = vrot.slane %v1552, 2
    %v1566 = vadd.f32 %v513, %v1558
    %v1567 = vadd.f32 %v539, %v1559
    %v1568 = vadd.f32 %v565, %v1560
    %v1569 = vadd.f32 %v591, %v1561
    %v1570 = vtanh.pop %v1566
    %v1571 = vtanh.pop %v1567
    %v1572 = vtanh.pop %v1568
    %v1573 = vtanh.pop %v1569
    %v1574 = vmul.f32 %v1570, 0.5
    %v1575 = vadd.f32 %v1574, 0.5
    %v1576 = vmul.f32 %v1571, 0.5
    %v1577 = vadd.f32 %v1576, 0.5
    %v1578 = vmul.f32 %v1573, 0.5
    %v1579 = vadd.f32 %v1578, 0.5
    %v1581 = vrot.slane %v1289, 6
    %v1583 = vmul.f32 %v1577, %v1581
    %v1584 = vmul.f32 %v1575, %v1572
    %v1585 = vadd.f32 %v1583, %v1584
    %v1586 = vtanh.pop %v1585
    %v1587 = vmul.f32 %v1579, %v1586
    %v1589 = vrot.slane %v1473, 2
    %v1591 = vrot.slane %v1587, 6
    %v1592 = vrot.slane %v1589, 6
    %1595 = vmatpush.msra.mxu0 %v200
    %1596 = vmatpush.msra.mxu0 %v196
    %1597 = vmatpush.msra.mxu0 %v192
    %1598 = vmatpush.msra.mxu0 %v188
    %1599 = vmatpush.msra.mxu0 %v184
    %1600 = vmatpush.msra.mxu0 %v180
    %1601 = vmatpush.msra.mxu0 %v176
    %1602 = vmatpush.msra.mxu0 %v172
    %1603 = vmatpush.msra.mxu0 %v168
    %1604 = vmatpush.msra.mxu0 %v164
    %1605 = vmatpush.msra.mxu0 %v160
    %1606 = vmatpush.msra.mxu0 %v156
    %1607 = vmatpush.msra.mxu0 %v152
    %1608 = vmatpush.msra.mxu0 %v148
    %1609 = vmatpush.msra.mxu0 %v144
    %1610 = vmatpush.msra.mxu0 %v140
    %1611 = vmatmul.f32.gmra.mxu0 %v1591
    %v1612 = vpop.f32.mrf.mxu0
    %v1613 = vadd.f32 %v699, %v1612
    %1614 = vdwg.mxu0
    %1615 = vmatpush.msra.mxu0 %v264
    %1616 = vmatpush.msra.mxu0 %v260
    %1617 = vmatpush.msra.mxu0 %v256
    %1618 = vmatpush.msra.mxu0 %v252
    %1619 = vmatpush.msra.mxu0 %v248
    %1620 = vmatpush.msra.mxu0 %v244
    %1621 = vmatpush.msra.mxu0 %v240
    %1622 = vmatpush.msra.mxu0 %v236
    %1623 = vmatpush.msra.mxu0 %v232
    %1624 = vmatpush.msra.mxu0 %v228
    %1625 = vmatpush.msra.mxu0 %v224
    %1626 = vmatpush.msra.mxu0 %v220
    %1627 = vmatpush.msra.mxu0 %v216
    %1628 = vmatpush.msra.mxu0 %v212
    %1629 = vmatpush.msra.mxu0 %v208
    %1630 = vmatpush.msra.mxu0 %v204
    %1631 = vmatmul.f32.gmra.mxu0 %v1592
    %v1632 = vpop.f32.mrf.mxu0
    %v1633 = vadd.f32 %v1613, %v1632
    %1634 = vdwg.mxu0
    %1635 = vmatpush.msra.mxu0 %v201
    %1636 = vmatpush.msra.mxu0 %v197
    %1637 = vmatpush.msra.mxu0 %v193
    %1638 = vmatpush.msra.mxu0 %v189
    %1639 = vmatpush.msra.mxu0 %v185
    %1640 = vmatpush.msra.mxu0 %v181
    %1641 = vmatpush.msra.mxu0 %v177
    %1642 = vmatpush.msra.mxu0 %v173
    %1643 = vmatpush.msra.mxu0 %v169
    %1644 = vmatpush.msra.mxu0 %v165
    %1645 = vmatpush.msra.mxu0 %v161
    %1646 = vmatpush.msra.mxu0 %v157
    %1647 = vmatpush.msra.mxu0 %v153
    %1648 = vmatpush.msra.mxu0 %v149
    %1649 = vmatpush.msra.mxu0 %v145
    %1650 = vmatpush.msra.mxu0 %v141
    %1651 = vmatmul.f32.gmra.mxu0 %v1591
    %v1652 = vpop.f32.mrf.mxu0
    %v1653 = vadd.f32 %v700, %v1652
    %1654 = vdwg.mxu0
    %1655 = vmatpush.msra.mxu0 %v265
    %1656 = vmatpush.msra.mxu0 %v261
    %1657 = vmatpush.msra.mxu0 %v257
    %1658 = vmatpush.msra.mxu0 %v253
    %1659 = vmatpush.msra.mxu0 %v249
    %1660 = vmatpush.msra.mxu0 %v245
    %1661 = vmatpush.msra.mxu0 %v241
    %1662 = vmatpush.msra.mxu0 %v237
    %1663 = vmatpush.msra.mxu0 %v233
    %1664 = vmatpush.msra.mxu0 %v229
    %1665 = vmatpush.msra.mxu0 %v225
    %1666 = vmatpush.msra.mxu0 %v221
    %1667 = vmatpush.msra.mxu0 %v217
    %1668 = vmatpush.msra.mxu0 %v213
    %1669 = vmatpush.msra.mxu0 %v209
    %1670 = vmatpush.msra.mxu0 %v205
    %1671 = vmatmul.f32.gmra.mxu0 %v1592
    %v1672 = vpop.f32.mrf.mxu0
    %v1673 = vadd.f32 %v1653, %v1672
    %1674 = vdwg.mxu0
    %1675 = vmatpush.msra.mxu0 %v202
    %1676 = vmatpush.msra.mxu0 %v198
    %1677 = vmatpush.msra.mxu0 %v194
    %1678 = vmatpush.msra.mxu0 %v190
    %1679 = vmatpush.msra.mxu0 %v186
    %1680 = vmatpush.msra.mxu0 %v182
    %1681 = vmatpush.msra.mxu0 %v178
    %1682 = vmatpush.msra.mxu0 %v174
    %1683 = vmatpush.msra.mxu0 %v170
    %1684 = vmatpush.msra.mxu0 %v166
    %1685 = vmatpush.msra.mxu0 %v162
    %1686 = vmatpush.msra.mxu0 %v158
    %1687 = vmatpush.msra.mxu0 %v154
    %1688 = vmatpush.msra.mxu0 %v150
    %1689 = vmatpush.msra.mxu0 %v146
    %1690 = vmatpush.msra.mxu0 %v142
    %1691 = vmatmul.f32.gmra.mxu0 %v1591
    %v1692 = vpop.f32.mrf.mxu0
    %v1693 = vadd.f32 %v701, %v1692
    %1694 = vdwg.mxu0
    %1695 = vmatpush.msra.mxu0 %v266
    %1696 = vmatpush.msra.mxu0 %v262
    %1697 = vmatpush.msra.mxu0 %v258
    %1698 = vmatpush.msra.mxu0 %v254
    %1699 = vmatpush.msra.mxu0 %v250
    %1700 = vmatpush.msra.mxu0 %v246
    %1701 = vmatpush.msra.mxu0 %v242
    %1702 = vmatpush.msra.mxu0 %v238
    %1703 = vmatpush.msra.mxu0 %v234
    %1704 = vmatpush.msra.mxu0 %v230
    %1705 = vmatpush.msra.mxu0 %v226
    %1706 = vmatpush.msra.mxu0 %v222
    %1707 = vmatpush.msra.mxu0 %v218
    %1708 = vmatpush.msra.mxu0 %v214
    %1709 = vmatpush.msra.mxu0 %v210
    %1710 = vmatpush.msra.mxu0 %v206
    %1711 = vmatmul.f32.gmra.mxu0 %v1592
    %v1712 = vpop.f32.mrf.mxu0
    %v1713 = vadd.f32 %v1693, %v1712
    %1714 = vdwg.mxu0
    %1715 = vmatpush.msra.mxu0 %v203
    %1716 = vmatpush.msra.mxu0 %v199
    %1717 = vmatpush.msra.mxu0 %v195
    %1718 = vmatpush.msra.mxu0 %v191
    %1719 = vmatpush.msra.mxu0 %v187
    %1720 = vmatpush.msra.mxu0 %v183
    %1721 = vmatpush.msra.mxu0 %v179
    %1722 = vmatpush.msra.mxu0 %v175
    %1723 = vmatpush.msra.mxu0 %v171
    %1724 = vmatpush.msra.mxu0 %v167
    %1725 = vmatpush.msra.mxu0 %v163
    %1726 = vmatpush.msra.mxu0 %v159
    %1727 = vmatpush.msra.mxu0 %v155
    %1728 = vmatpush.msra.mxu0 %v151
    %1729 = vmatpush.msra.mxu0 %v147
    %1730 = vmatpush.msra.mxu0 %v143
    %1731 = vmatmul.f32.gmra.mxu0 %v1591
    %v1732 = vpop.f32.mrf.mxu0
    %v1733 = vadd.f32 %v702, %v1732
    %1734 = vdwg.mxu0
    %1735 = vmatpush.msra.mxu0 %v267
    %1736 = vmatpush.msra.mxu0 %v263
    %1737 = vmatpush.msra.mxu0 %v259
    %1738 = vmatpush.msra.mxu0 %v255
    %1739 = vmatpush.msra.mxu0 %v251
    %1740 = vmatpush.msra.mxu0 %v247
    %1741 = vmatpush.msra.mxu0 %v243
    %1742 = vmatpush.msra.mxu0 %v239
    %1743 = vmatpush.msra.mxu0 %v235
    %1744 = vmatpush.msra.mxu0 %v231
    %1745 = vmatpush.msra.mxu0 %v227
    %1746 = vmatpush.msra.mxu0 %v223
    %1747 = vmatpush.msra.mxu0 %v219
    %1748 = vmatpush.msra.mxu0 %v215
    %1749 = vmatpush.msra.mxu0 %v211
    %1750 = vmatpush.msra.mxu0 %v207
    %1751 = vmatmul.f32.gmra.mxu0 %v1592
    %v1752 = vpop.f32.mrf.mxu0
    %v1753 = vadd.f32 %v1733, %v1752
    %1754 = vdwg.mxu0
    %v1755 = vtanh.pop %v1633
    %v1756 = vtanh.pop %v1673
    %v1757 = vtanh.pop %v1713
    %v1758 = vtanh.pop %v1753
    %v1759 = vmul.f32 %v1755, 0.5
    %v1760 = vadd.f32 %v1759, 0.5
    %v1761 = vmul.f32 %v1756, 0.5
    %v1762 = vadd.f32 %v1761, 0.5
    %v1763 = vmul.f32 %v1758, 0.5
    %v1764 = vadd.f32 %v1763, 0.5
    %v1765 = vmul.f32 %v1762, %v1471
    %v1766 = vmul.f32 %v1760, %v1757
    %v1767 = vadd.f32 %v1765, %v1766
    %v1768 = vtanh.pop %v1767
    %v1769 = vmul.f32 %v1764, %v1768
    %1770 = vmatpush.msra.mxu0 %v136
    %1771 = vmatpush.msra.mxu0 %v132
    %1772 = vmatpush.msra.mxu0 %v128
    %1773 = vmatpush.msra.mxu0 %v124
    %1774 = vmatpush.msra.mxu0 %v120
    %1775 = vmatpush.msra.mxu0 %v116
    %1776 = vmatpush.msra.mxu0 %v112
    %1777 = vmatpush.msra.mxu0 %v108
    %1778 = vmatpush.msra.mxu0 %v104
    %1779 = vmatpush.msra.mxu0 %v100
    %1780 = vmatpush.msra.mxu0 %v96
    %1781 = vmatpush.msra.mxu0 %v92
    %1782 = vmatpush.msra.mxu0 %v88
    %1783 = vmatpush.msra.mxu0 %v84
    %1784 = vmatpush.msra.mxu0 %v80
    %1785 = vmatpush.msra.mxu0 %v76
    %1786 = vmatmul.f32.gmra.mxu0 %v1591
    %v1787 = vpop.f32.mrf.mxu0
    %v1788 = vadd.f32 0.0, %v1787
    %1789 = vdwg.mxu0
    %1790 = vmatpush.msra.mxu0 %v137
    %1791 = vmatpush.msra.mxu0 %v133
    %1792 = vmatpush.msra.mxu0 %v129
    %1793 = vmatpush.msra.mxu0 %v125
    %1794 = vmatpush.msra.mxu0 %v121
    %1795 = vmatpush.msra.mxu0 %v117
    %1796 = vmatpush.msra.mxu0 %v113
    %1797 = vmatpush.msra.mxu0 %v109
    %1798 = vmatpush.msra.mxu0 %v105
    %1799 = vmatpush.msra.mxu0 %v101
    %1800 = vmatpush.msra.mxu0 %v97
    %1801 = vmatpush.msra.mxu0 %v93
    %1802 = vmatpush.msra.mxu0 %v89
    %1803 = vmatpush.msra.mxu0 %v85
    %1804 = vmatpush.msra.mxu0 %v81
    %1805 = vmatpush.msra.mxu0 %v77
    %1806 = vmatmul.f32.gmra.mxu0 %v1591
    %v1807 = vpop.f32.mrf.mxu0
    %v1808 = vadd.f32 0.0, %v1807
    %1809 = vdwg.mxu0
    %1810 = vmatpush.msra.mxu0 %v138
    %1811 = vmatpush.msra.mxu0 %v134
    %1812 = vmatpush.msra.mxu0 %v130
    %1813 = vmatpush.msra.mxu0 %v126
    %1814 = vmatpush.msra.mxu0 %v122
    %1815 = vmatpush.msra.mxu0 %v118
    %1816 = vmatpush.msra.mxu0 %v114
    %1817 = vmatpush.msra.mxu0 %v110
    %1818 = vmatpush.msra.mxu0 %v106
    %1819 = vmatpush.msra.mxu0 %v102
    %1820 = vmatpush.msra.mxu0 %v98
    %1821 = vmatpush.msra.mxu0 %v94
    %1822 = vmatpush.msra.mxu0 %v90
    %1823 = vmatpush.msra.mxu0 %v86
    %1824 = vmatpush.msra.mxu0 %v82
    %1825 = vmatpush.msra.mxu0 %v78
    %1826 = vmatmul.f32.gmra.mxu0 %v1591
    %v1827 = vpop.f32.mrf.mxu0
    %v1828 = vadd.f32 0.0, %v1827
    %1829 = vdwg.mxu0
    %1830 = vmatpush.msra.mxu0 %v139
    %1831 = vmatpush.msra.mxu0 %v135
    %1832 = vmatpush.msra.mxu0 %v131
    %1833 = vmatpush.msra.mxu0 %v127
    %1834 = vmatpush.msra.mxu0 %v123
    %1835 = vmatpush.msra.mxu0 %v119
    %1836 = vmatpush.msra.mxu0 %v115
    %1837 = vmatpush.msra.mxu0 %v111
    %1838 = vmatpush.msra.mxu0 %v107
    %1839 = vmatpush.msra.mxu0 %v103
    %1840 = vmatpush.msra.mxu0 %v99
    %1841 = vmatpush.msra.mxu0 %v95
    %1842 = vmatpush.msra.mxu0 %v91
    %1843 = vmatpush.msra.mxu0 %v87
    %1844 = vmatpush.msra.mxu0 %v83
    %1845 = vmatpush.msra.mxu0 %v79
    %1846 = vmatmul.f32.gmra.mxu0 %v1591
    %v1847 = vpop.f32.mrf.mxu0
    %v1848 = vadd.f32 0.0, %v1847
    %1849 = vdwg.mxu0
    %v1850 = vadd.f32 %v516, %v1788
    %v1851 = vadd.f32 %v542, %v1808
    %v1852 = vadd.f32 %v568, %v1828
    %v1853 = vadd.f32 %v594, %v1848
    %v1854 = vtanh.pop %v1850
    %v1855 = vtanh.pop %v1851
    %v1856 = vtanh.pop %v1852
    %v1857 = vtanh.pop %v1853
    %v1858 = vmul.f32 %v1854, 0.5
    %v1859 = vadd.f32 %v1858, 0.5
    %v1860 = vmul.f32 %v1855, 0.5
    %v1861 = vadd.f32 %v1860, 0.5
    %v1862 = vmul.f32 %v1857, 0.5
    %v1863 = vadd.f32 %v1862, 0.5
    %v1865 = vrot.slane %v1585, 6
    %v1867 = vmul.f32 %v1861, %v1865
    %v1868 = vmul.f32 %v1859, %v1856
    %v1869 = vadd.f32 %v1867, %v1868
    %v1870 = vtanh.pop %v1869
    %v1871 = vmul.f32 %v1863, %v1870
    %1872 = vmatpush.msra.mxu0 %v200
    %1873 = vmatpush.msra.mxu0 %v196
    %1874 = vmatpush.msra.mxu0 %v192
    %1875 = vmatpush.msra.mxu0 %v188
    %1876 = vmatpush.msra.mxu0 %v184
    %1877 = vmatpush.msra.mxu0 %v180
    %1878 = vmatpush.msra.mxu0 %v176
    %1879 = vmatpush.msra.mxu0 %v172
    %1880 = vmatpush.msra.mxu0 %v168
    %1881 = vmatpush.msra.mxu0 %v164
    %1882 = vmatpush.msra.mxu0 %v160
    %1883 = vmatpush.msra.mxu0 %v156
    %1884 = vmatpush.msra.mxu0 %v152
    %1885 = vmatpush.msra.mxu0 %v148
    %1886 = vmatpush.msra.mxu0 %v144
    %1887 = vmatpush.msra.mxu0 %v140
    %1888 = vmatmul.f32.gmra.mxu0 %v1871
    %v1889 = vpop.f32.mrf.mxu0
    %v1890 = vadd.f32 %v699, %v1889
    %1891 = vdwg.mxu0
    %1892 = vmatpush.msra.mxu0 %v264
    %1893 = vmatpush.msra.mxu0 %v260
    %1894 = vmatpush.msra.mxu0 %v256
    %1895 = vmatpush.msra.mxu0 %v252
    %1896 = vmatpush.msra.mxu0 %v248
    %1897 = vmatpush.msra.mxu0 %v244
    %1898 = vmatpush.msra.mxu0 %v240
    %1899 = vmatpush.msra.mxu0 %v236
    %1900 = vmatpush.msra.mxu0 %v232
    %1901 = vmatpush.msra.mxu0 %v228
    %1902 = vmatpush.msra.mxu0 %v224
    %1903 = vmatpush.msra.mxu0 %v220
    %1904 = vmatpush.msra.mxu0 %v216
    %1905 = vmatpush.msra.mxu0 %v212
    %1906 = vmatpush.msra.mxu0 %v208
    %1907 = vmatpush.msra.mxu0 %v204
    %1908 = vmatmul.f32.gmra.mxu0 %v1769
    %v1909 = vpop.f32.mrf.mxu0
    %v1910 = vadd.f32 %v1890, %v1909
    %1911 = vdwg.mxu0
    %1912 = vmatpush.msra.mxu0 %v201
    %1913 = vmatpush.msra.mxu0 %v197
    %1914 = vmatpush.msra.mxu0 %v193
    %1915 = vmatpush.msra.mxu0 %v189
    %1916 = vmatpush.msra.mxu0 %v185
    %1917 = vmatpush.msra.mxu0 %v181
    %1918 = vmatpush.msra.mxu0 %v177
    %1919 = vmatpush.msra.mxu0 %v173
    %1920 = vmatpush.msra.mxu0 %v169
    %1921 = vmatpush.msra.mxu0 %v165
    %1922 = vmatpush.msra.mxu0 %v161
    %1923 = vmatpush.msra.mxu0 %v157
    %1924 = vmatpush.msra.mxu0 %v153
    %1925 = vmatpush.msra.mxu0 %v149
    %1926 = vmatpush.msra.mxu0 %v145
    %1927 = vmatpush.msra.mxu0 %v141
    %1928 = vmatmul.f32.gmra.mxu0 %v1871
    %v1929 = vpop.f32.mrf.mxu0
    %v1930 = vadd.f32 %v700, %v1929
    %1931 = vdwg.mxu0
    %1932 = vmatpush.msra.mxu0 %v265
    %1933 = vmatpush.msra.mxu0 %v261
    %1934 = vmatpush.msra.mxu0 %v257
    %1935 = vmatpush.msra.mxu0 %v253
    %1936 = vmatpush.msra.mxu0 %v249
    %1937 = vmatpush.msra.mxu0 %v245
    %1938 = vmatpush.msra.mxu0 %v241
    %1939 = vmatpush.msra.mxu0 %v237
    %1940 = vmatpush.msra.mxu0 %v233
    %1941 = vmatpush.msra.mxu0 %v229
    %1942 = vmatpush.msra.mxu0 %v225
    %1943 = vmatpush.msra.mxu0 %v221
    %1944 = vmatpush.msra.mxu0 %v217
    %1945 = vmatpush.msra.mxu0 %v213
    %1946 = vmatpush.msra.mxu0 %v209
    %1947 = vmatpush.msra.mxu0 %v205
    %1948 = vmatmul.f32.gmra.mxu0 %v1769
    %v1949 = vpop.f32.mrf.mxu0
    %v1950 = vadd.f32 %v1930, %v1949
    %1951 = vdwg.mxu0
    %1952 = vmatpush.msra.mxu0 %v202
    %1953 = vmatpush.msra.mxu0 %v198
    %1954 = vmatpush.msra.mxu0 %v194
    %1955 = vmatpush.msra.mxu0 %v190
    %1956 = vmatpush.msra.mxu0 %v186
    %1957 = vmatpush.msra.mxu0 %v182
    %1958 = vmatpush.msra.mxu0 %v178
    %1959 = vmatpush.msra.mxu0 %v174
    %1960 = vmatpush.msra.mxu0 %v170
    %1961 = vmatpush.msra.mxu0 %v166
    %1962 = vmatpush.msra.mxu0 %v162
    %1963 = vmatpush.msra.mxu0 %v158
    %1964 = vmatpush.msra.mxu0 %v154
    %1965 = vmatpush.msra.mxu0 %v150
    %1966 = vmatpush.msra.mxu0 %v146
    %1967 = vmatpush.msra.mxu0 %v142
    %1968 = vmatmul.f32.gmra.mxu0 %v1871
    %v1969 = vpop.f32.mrf.mxu0
    %v1970 = vadd.f32 %v701, %v1969
    %1971 = vdwg.mxu0
    %1972 = vmatpush.msra.mxu0 %v266
    %1973 = vmatpush.msra.mxu0 %v262
    %1974 = vmatpush.msra.mxu0 %v258
    %1975 = vmatpush.msra.mxu0 %v254
    %1976 = vmatpush.msra.mxu0 %v250
    %1977 = vmatpush.msra.mxu0 %v246
    %1978 = vmatpush.msra.mxu0 %v242
    %1979 = vmatpush.msra.mxu0 %v238
    %1980 = vmatpush.msra.mxu0 %v234
    %1981 = vmatpush.msra.mxu0 %v230
    %1982 = vmatpush.msra.mxu0 %v226
    %1983 = vmatpush.msra.mxu0 %v222
    %1984 = vmatpush.msra.mxu0 %v218
    %1985 = vmatpush.msra.mxu0 %v214
    %1986 = vmatpush.msra.mxu0 %v210
    %1987 = vmatpush.msra.mxu0 %v206
    %1988 = vmatmul.f32.gmra.mxu0 %v1769
    %v1989 = vpop.f32.mrf.mxu0
    %v1990 = vadd.f32 %v1970, %v1989
    %1991 = vdwg.mxu0
    %1992 = vmatpush.msra.mxu0 %v203
    %1993 = vmatpush.msra.mxu0 %v199
    %1994 = vmatpush.msra.mxu0 %v195
    %1995 = vmatpush.msra.mxu0 %v191
    %1996 = vmatpush.msra.mxu0 %v187
    %1997 = vmatpush.msra.mxu0 %v183
    %1998 = vmatpush.msra.mxu0 %v179
    %1999 = vmatpush.msra.mxu0 %v175
    %2000 = vmatpush.msra.mxu0 %v171
    %2001 = vmatpush.msra.mxu0 %v167
    %2002 = vmatpush.msra.mxu0 %v163
    %2003 = vmatpush.msra.mxu0 %v159
    %2004 = vmatpush.msra.mxu0 %v155
    %2005 = vmatpush.msra.mxu0 %v151
    %2006 = vmatpush.msra.mxu0 %v147
    %2007 = vmatpush.msra.mxu0 %v143
    %2008 = vmatmul.f32.gmra.mxu0 %v1871
    %v2009 = vpop.f32.mrf.mxu0
    %v2010 = vadd.f32 %v702, %v2009
    %2011 = vdwg.mxu0
    %2012 = vmatpush.msra.mxu0 %v267
    %2013 = vmatpush.msra.mxu0 %v263
    %2014 = vmatpush.msra.mxu0 %v259
    %2015 = vmatpush.msra.mxu0 %v255
    %2016 = vmatpush.msra.mxu0 %v251
    %2017 = vmatpush.msra.mxu0 %v247
    %2018 = vmatpush.msra.mxu0 %v243
    %2019 = vmatpush.msra.mxu0 %v239
    %2020 = vmatpush.msra.mxu0 %v235
    %2021 = vmatpush.msra.mxu0 %v231
    %2022 = vmatpush.msra.mxu0 %v227
    %2023 = vmatpush.msra.mxu0 %v223
    %2024 = vmatpush.msra.mxu0 %v219
    %2025 = vmatpush.msra.mxu0 %v215
    %2026 = vmatpush.msra.mxu0 %v211
    %2027 = vmatpush.msra.mxu0 %v207
    %2028 = vmatmul.f32.gmra.mxu0 %v1769
    %v2029 = vpop.f32.mrf.mxu0
    %v2030 = vadd.f32 %v2010, %v2029
    %2031 = vdwg.mxu0
    %v2032 = vtanh.pop %v1910
    %v2033 = vtanh.pop %v1950
    %v2034 = vtanh.pop %v1990
    %v2035 = vtanh.pop %v2030
    %v2036 = vmul.f32 %v2032, 0.5
    %v2037 = vadd.f32 %v2036, 0.5
    %v2038 = vmul.f32 %v2033, 0.5
    %v2039 = vadd.f32 %v2038, 0.5
    %v2040 = vmul.f32 %v2035, 0.5
    %v2041 = vadd.f32 %v2040, 0.5
    %v2042 = vmul.f32 %v2039, %v1767
    %v2043 = vmul.f32 %v2037, %v2034
    %v2044 = vadd.f32 %v2042, %v2043
    %v2045 = vtanh.pop %v2044
    %v2046 = vmul.f32 %v2041, %v2045
    %2047 = vmatpush.msra.mxu0 %v136
    %2048 = vmatpush.msra.mxu0 %v132
    %2049 = vmatpush.msra.mxu0 %v128
    %2050 = vmatpush.msra.mxu0 %v124
    %2051 = vmatpush.msra.mxu0 %v120
    %2052 = vmatpush.msra.mxu0 %v116
    %2053 = vmatpush.msra.mxu0 %v112
    %2054 = vmatpush.msra.mxu0 %v108
    %2055 = vmatpush.msra.mxu0 %v104
    %2056 = vmatpush.msra.mxu0 %v100
    %2057 = vmatpush.msra.mxu0 %v96
    %2058 = vmatpush.msra.mxu0 %v92
    %2059 = vmatpush.msra.mxu0 %v88
    %2060 = vmatpush.msra.mxu0 %v84
    %2061 = vmatpush.msra.mxu0 %v80
    %2062 = vmatpush.msra.mxu0 %v76
    %2063 = vmatmul.f32.gmra.mxu0 %v1871
    %v2064 = vpop.f32.mrf.mxu0
    %v2065 = vadd.f32 0.0, %v2064
    %2066 = vdwg.mxu0
    %2067 = vmatpush.msra.mxu0 %v137
    %2068 = vmatpush.msra.mxu0 %v133
    %2069 = vmatpush.msra.mxu0 %v129
    %2070 = vmatpush.msra.mxu0 %v125
    %2071 = vmatpush.msra.mxu0 %v121
    %2072 = vmatpush.msra.mxu0 %v117
    %2073 = vmatpush.msra.mxu0 %v113
    %2074 = vmatpush.msra.mxu0 %v109
    %2075 = vmatpush.msra.mxu0 %v105
    %2076 = vmatpush.msra.mxu0 %v101
    %2077 = vmatpush.msra.mxu0 %v97
    %2078 = vmatpush.msra.mxu0 %v93
    %2079 = vmatpush.msra.mxu0 %v89
    %2080 = vmatpush.msra.mxu0 %v85
    %2081 = vmatpush.msra.mxu0 %v81
    %2082 = vmatpush.msra.mxu0 %v77
    %2083 = vmatmul.f32.gmra.mxu0 %v1871
    %v2084 = vpop.f32.mrf.mxu0
    %v2085 = vadd.f32 0.0, %v2084
    %2086 = vdwg.mxu0
    %2087 = vmatpush.msra.mxu0 %v138
    %2088 = vmatpush.msra.mxu0 %v134
    %2089 = vmatpush.msra.mxu0 %v130
    %2090 = vmatpush.msra.mxu0 %v126
    %2091 = vmatpush.msra.mxu0 %v122
    %2092 = vmatpush.msra.mxu0 %v118
    %2093 = vmatpush.msra.mxu0 %v114
    %2094 = vmatpush.msra.mxu0 %v110
    %2095 = vmatpush.msra.mxu0 %v106
    %2096 = vmatpush.msra.mxu0 %v102
    %2097 = vmatpush.msra.mxu0 %v98
    %2098 = vmatpush.msra.mxu0 %v94
    %2099 = vmatpush.msra.mxu0 %v90
    %2100 = vmatpush.msra.mxu0 %v86
    %2101 = vmatpush.msra.mxu0 %v82
    %2102 = vmatpush.msra.mxu0 %v78
    %2103 = vmatmul.f32.gmra.mxu0 %v1871
    %v2104 = vpop.f32.mrf.mxu0
    %v2105 = vadd.f32 0.0, %v2104
    %2106 = vdwg.mxu0
    %2107 = vmatpush.msra.mxu0 %v139
    %2108 = vmatpush.msra.mxu0 %v135
    %2109 = vmatpush.msra.mxu0 %v131
    %2110 = vmatpush.msra.mxu0 %v127
    %2111 = vmatpush.msra.mxu0 %v123
    %2112 = vmatpush.msra.mxu0 %v119
    %2113 = vmatpush.msra.mxu0 %v115
    %2114 = vmatpush.msra.mxu0 %v111
    %2115 = vmatpush.msra.mxu0 %v107
    %2116 = vmatpush.msra.mxu0 %v103
    %2117 = vmatpush.msra.mxu0 %v99
    %2118 = vmatpush.msra.mxu0 %v95
    %2119 = vmatpush.msra.mxu0 %v91
    %2120 = vmatpush.msra.mxu0 %v87
    %2121 = vmatpush.msra.mxu0 %v83
    %2122 = vmatpush.msra.mxu0 %v79
    %2123 = vmatmul.f32.gmra.mxu0 %v1871
    %v2124 = vpop.f32.mrf.mxu0
    %v2125 = vadd.f32 0.0, %v2124
    %2126 = vdwg.mxu0
    %v2131 = vrot.slane %v2065, 6
    %v2132 = vrot.slane %v2085, 6
    %v2133 = vrot.slane %v2105, 6
    %v2134 = vrot.slane %v2125, 6
    %v2139 = vadd.f32 %v516, %v2131
    %v2140 = vadd.f32 %v542, %v2132
    %v2141 = vadd.f32 %v568, %v2133
    %v2142 = vadd.f32 %v594, %v2134
    %v2143 = vtanh.pop %v2139
    %v2144 = vtanh.pop %v2140
    %v2145 = vtanh.pop %v2141
    %v2146 = vtanh.pop %v2142
    %v2147 = vmul.f32 %v2143, 0.5
    %v2148 = vadd.f32 %v2147, 0.5
    %v2149 = vmul.f32 %v2144, 0.5
    %v2150 = vadd.f32 %v2149, 0.5
    %v2151 = vmul.f32 %v2146, 0.5
    %v2152 = vadd.f32 %v2151, 0.5
    %v2154 = vrot.slane %v1869, 6
    %v2156 = vmul.f32 %v2150, %v2154
    %v2157 = vmul.f32 %v2148, %v2145
    %v2158 = vadd.f32 %v2156, %v2157
    %v2159 = vtanh.pop %v2158
    %v2160 = vmul.f32 %v2152, %v2159
    %v2162 = vrot.slane %v2046, 6
    %v2164 = vrot.slane %v2160, 2
    %v2165 = vrot.slane %v2162, 2
    %2168 = vmatpush.msra.mxu0 %v200
    %2169 = vmatpush.msra.mxu0 %v196
    %2170 = vmatpush.msra.mxu0 %v192
    %2171 = vmatpush.msra.mxu0 %v188
    %2172 = vmatpush.msra.mxu0 %v184
    %2173 = vmatpush.msra.mxu0 %v180
    %2174 = vmatpush.msra.mxu0 %v176
    %2175 = vmatpush.msra.mxu0 %v172
    %2176 = vmatpush.msra.mxu0 %v168
    %2177 = vmatpush.msra.mxu0 %v164
    %2178 = vmatpush.msra.mxu0 %v160
    %2179 = vmatpush.msra.mxu0 %v156
    %2180 = vmatpush.msra.mxu0 %v152
    %2181 = vmatpush.msra.mxu0 %v148
    %2182 = vmatpush.msra.mxu0 %v144
    %2183 = vmatpush.msra.mxu0 %v140
    %2184 = vmatmul.f32.gmra.mxu0 %v2164
    %v2185 = vpop.f32.mrf.mxu0
    %v2186 = vadd.f32 %v699, %v2185
    %2187 = vdwg.mxu0
    %2188 = vmatpush.msra.mxu0 %v264
    %2189 = vmatpush.msra.mxu0 %v260
    %2190 = vmatpush.msra.mxu0 %v256
    %2191 = vmatpush.msra.mxu0 %v252
    %2192 = vmatpush.msra.mxu0 %v248
    %2193 = vmatpush.msra.mxu0 %v244
    %2194 = vmatpush.msra.mxu0 %v240
    %2195 = vmatpush.msra.mxu0 %v236
    %2196 = vmatpush.msra.mxu0 %v232
    %2197 = vmatpush.msra.mxu0 %v228
    %2198 = vmatpush.msra.mxu0 %v224
    %2199 = vmatpush.msra.mxu0 %v220
    %2200 = vmatpush.msra.mxu0 %v216
    %2201 = vmatpush.msra.mxu0 %v212
    %2202 = vmatpush.msra.mxu0 %v208
    %2203 = vmatpush.msra.mxu0 %v204
    %2204 = vmatmul.f32.gmra.mxu0 %v2165
    %v2205 = vpop.f32.mrf.mxu0
    %v2206 = vadd.f32 %v2186, %v2205
    %2207 = vdwg.mxu0
    %2208 = vmatpush.msra.mxu0 %v201
    %2209 = vmatpush.msra.mxu0 %v197
    %2210 = vmatpush.msra.mxu0 %v193
    %2211 = vmatpush.msra.mxu0 %v189
    %2212 = vmatpush.msra.mxu0 %v185
    %2213 = vmatpush.msra.mxu0 %v181
    %2214 = vmatpush.msra.mxu0 %v177
    %2215 = vmatpush.msra.mxu0 %v173
    %2216 = vmatpush.msra.mxu0 %v169
    %2217 = vmatpush.msra.mxu0 %v165
    %2218 = vmatpush.msra.mxu0 %v161
    %2219 = vmatpush.msra.mxu0 %v157
    %2220 = vmatpush.msra.mxu0 %v153
    %2221 = vmatpush.msra.mxu0 %v149
    %2222 = vmatpush.msra.mxu0 %v145
    %2223 = vmatpush.msra.mxu0 %v141
    %2224 = vmatmul.f32.gmra.mxu0 %v2164
    %v2225 = vpop.f32.mrf.mxu0
    %v2226 = vadd.f32 %v700, %v2225
    %2227 = vdwg.mxu0
    %2228 = vmatpush.msra.mxu0 %v265
    %2229 = vmatpush.msra.mxu0 %v261
    %2230 = vmatpush.msra.mxu0 %v257
    %2231 = vmatpush.msra.mxu0 %v253
    %2232 = vmatpush.msra.mxu0 %v249
    %2233 = vmatpush.msra.mxu0 %v245
    %2234 = vmatpush.msra.mxu0 %v241
    %2235 = vmatpush.msra.mxu0 %v237
    %2236 = vmatpush.msra.mxu0 %v233
    %2237 = vmatpush.msra.mxu0 %v229
    %2238 = vmatpush.msra.mxu0 %v225
    %2239 = vmatpush.msra.mxu0 %v221
    %2240 = vmatpush.msra.mxu0 %v217
    %2241 = vmatpush.msra.mxu0 %v213
    %2242 = vmatpush.msra.mxu0 %v209
    %2243 = vmatpush.msra.mxu0 %v205
    %2244 = vmatmul.f32.gmra.mxu0 %v2165
    %v2245 = vpop.f32.mrf.mxu0
    %v2246 = vadd.f32 %v2226, %v2245
    %2247 = vdwg.mxu0
    %2248 = vmatpush.msra.mxu0 %v202
    %2249 = vmatpush.msra.mxu0 %v198
    %2250 = vmatpush.msra.mxu0 %v194
    %2251 = vmatpush.msra.mxu0 %v190
    %2252 = vmatpush.msra.mxu0 %v186
    %2253 = vmatpush.msra.mxu0 %v182
    %2254 = vmatpush.msra.mxu0 %v178
    %2255 = vmatpush.msra.mxu0 %v174
    %2256 = vmatpush.msra.mxu0 %v170
    %2257 = vmatpush.msra.mxu0 %v166
    %2258 = vmatpush.msra.mxu0 %v162
    %2259 = vmatpush.msra.mxu0 %v158
    %2260 = vmatpush.msra.mxu0 %v154
    %2261 = vmatpush.msra.mxu0 %v150
    %2262 = vmatpush.msra.mxu0 %v146
    %2263 = vmatpush.msra.mxu0 %v142
    %2264 = vmatmul.f32.gmra.mxu0 %v2164
    %v2265 = vpop.f32.mrf.mxu0
    %v2266 = vadd.f32 %v701, %v2265
    %2267 = vdwg.mxu0
    %2268 = vmatpush.msra.mxu0 %v266
    %2269 = vmatpush.msra.mxu0 %v262
    %2270 = vmatpush.msra.mxu0 %v258
    %2271 = vmatpush.msra.mxu0 %v254
    %2272 = vmatpush.msra.mxu0 %v250
    %2273 = vmatpush.msra.mxu0 %v246
    %2274 = vmatpush.msra.mxu0 %v242
    %2275 = vmatpush.msra.mxu0 %v238
    %2276 = vmatpush.msra.mxu0 %v234
    %2277 = vmatpush.msra.mxu0 %v230
    %2278 = vmatpush.msra.mxu0 %v226
    %2279 = vmatpush.msra.mxu0 %v222
    %2280 = vmatpush.msra.mxu0 %v218
    %2281 = vmatpush.msra.mxu0 %v214
    %2282 = vmatpush.msra.mxu0 %v210
    %2283 = vmatpush.msra.mxu0 %v206
    %2284 = vmatmul.f32.gmra.mxu0 %v2165
    %v2285 = vpop.f32.mrf.mxu0
    %v2286 = vadd.f32 %v2266, %v2285
    %2287 = vdwg.mxu0
    %2288 = vmatpush.msra.mxu0 %v203
    %2289 = vmatpush.msra.mxu0 %v199
    %2290 = vmatpush.msra.mxu0 %v195
    %2291 = vmatpush.msra.mxu0 %v191
    %2292 = vmatpush.msra.mxu0 %v187
    %2293 = vmatpush.msra.mxu0 %v183
    %2294 = vmatpush.msra.mxu0 %v179
    %2295 = vmatpush.msra.mxu0 %v175
    %2296 = vmatpush.msra.mxu0 %v171
    %2297 = vmatpush.msra.mxu0 %v167
    %2298 = vmatpush.msra.mxu0 %v163
    %2299 = vmatpush.msra.mxu0 %v159
    %2300 = vmatpush.msra.mxu0 %v155
    %2301 = vmatpush.msra.mxu0 %v151
    %2302 = vmatpush.msra.mxu0 %v147
    %2303 = vmatpush.msra.mxu0 %v143
    %2304 = vmatmul.f32.gmra.mxu0 %v2164
    %v2305 = vpop.f32.mrf.mxu0
    %v2306 = vadd.f32 %v702, %v2305
    %2307 = vdwg.mxu0
    %2308 = vmatpush.msra.mxu0 %v267
    %2309 = vmatpush.msra.mxu0 %v263
    %2310 = vmatpush.msra.mxu0 %v259
    %2311 = vmatpush.msra.mxu0 %v255
    %2312 = vmatpush.msra.mxu0 %v251
    %2313 = vmatpush.msra.mxu0 %v247
    %2314 = vmatpush.msra.mxu0 %v243
    %2315 = vmatpush.msra.mxu0 %v239
    %2316 = vmatpush.msra.mxu0 %v235
    %2317 = vmatpush.msra.mxu0 %v231
    %2318 = vmatpush.msra.mxu0 %v227
    %2319 = vmatpush.msra.mxu0 %v223
    %2320 = vmatpush.msra.mxu0 %v219
    %2321 = vmatpush.msra.mxu0 %v215
    %2322 = vmatpush.msra.mxu0 %v211
    %2323 = vmatpush.msra.mxu0 %v207
    %2324 = vmatmul.f32.gmra.mxu0 %v2165
    %v2325 = vpop.f32.mrf.mxu0
    %v2326 = vadd.f32 %v2306, %v2325
    %2327 = vdwg.mxu0
    %v2328 = vtanh.pop %v2206
    %v2329 = vtanh.pop %v2246
    %v2330 = vtanh.pop %v2286
    %v2331 = vtanh.pop %v2326
    %v2332 = vmul.f32 %v2328, 0.5
    %v2333 = vadd.f32 %v2332, 0.5
    %v2334 = vmul.f32 %v2329, 0.5
    %v2335 = vadd.f32 %v2334, 0.5
    %v2336 = vmul.f32 %v2331, 0.5
    %v2337 = vadd.f32 %v2336, 0.5
    %v2338 = vmul.f32 %v2335, %v2044
    %v2339 = vmul.f32 %v2333, %v2330
    %v2340 = vadd.f32 %v2338, %v2339
    %v2341 = vtanh.pop %v2340
    %v2342 = vmul.f32 %v2337, %v2341
    %2343 = vmatpush.msra.mxu0 %v136
    %2344 = vmatpush.msra.mxu0 %v132
    %2345 = vmatpush.msra.mxu0 %v128
    %2346 = vmatpush.msra.mxu0 %v124
    %2347 = vmatpush.msra.mxu0 %v120
    %2348 = vmatpush.msra.mxu0 %v116
    %2349 = vmatpush.msra.mxu0 %v112
    %2350 = vmatpush.msra.mxu0 %v108
    %2351 = vmatpush.msra.mxu0 %v104
    %2352 = vmatpush.msra.mxu0 %v100
    %2353 = vmatpush.msra.mxu0 %v96
    %2354 = vmatpush.msra.mxu0 %v92
    %2355 = vmatpush.msra.mxu0 %v88
    %2356 = vmatpush.msra.mxu0 %v84
    %2357 = vmatpush.msra.mxu0 %v80
    %2358 = vmatpush.msra.mxu0 %v76
    %2359 = vmatmul.f32.gmra.mxu0 %v2164
    %v2360 = vpop.f32.mrf.mxu0
    %v2361 = vadd.f32 0.0, %v2360
    %2362 = vdwg.mxu0
    %2363 = vmatpush.msra.mxu0 %v137
    %2364 = vmatpush.msra.mxu0 %v133
    %2365 = vmatpush.msra.mxu0 %v129
    %2366 = vmatpush.msra.mxu0 %v125
    %2367 = vmatpush.msra.mxu0 %v121
    %2368 = vmatpush.msra.mxu0 %v117
    %2369 = vmatpush.msra.mxu0 %v113
    %2370 = vmatpush.msra.mxu0 %v109
    %2371 = vmatpush.msra.mxu0 %v105
    %2372 = vmatpush.msra.mxu0 %v101
    %2373 = vmatpush.msra.mxu0 %v97
    %2374 = vmatpush.msra.mxu0 %v93
    %2375 = vmatpush.msra.mxu0 %v89
    %2376 = vmatpush.msra.mxu0 %v85
    %2377 = vmatpush.msra.mxu0 %v81
    %2378 = vmatpush.msra.mxu0 %v77
    %2379 = vmatmul.f32.gmra.mxu0 %v2164
    %v2380 = vpop.f32.mrf.mxu0
    %v2381 = vadd.f32 0.0, %v2380
    %2382 = vdwg.mxu0
    %2383 = vmatpush.msra.mxu0 %v138
    %2384 = vmatpush.msra.mxu0 %v134
    %2385 = vmatpush.msra.mxu0 %v130
    %2386 = vmatpush.msra.mxu0 %v126
    %2387 = vmatpush.msra.mxu0 %v122
    %2388 = vmatpush.msra.mxu0 %v118
    %2389 = vmatpush.msra.mxu0 %v114
    %2390 = vmatpush.msra.mxu0 %v110
    %2391 = vmatpush.msra.mxu0 %v106
    %2392 = vmatpush.msra.mxu0 %v102
    %2393 = vmatpush.msra.mxu0 %v98
    %2394 = vmatpush.msra.mxu0 %v94
    %2395 = vmatpush.msra.mxu0 %v90
    %2396 = vmatpush.msra.mxu0 %v86
    %2397 = vmatpush.msra.mxu0 %v82
    %2398 = vmatpush.msra.mxu0 %v78
    %2399 = vmatmul.f32.gmra.mxu0 %v2164
    %v2400 = vpop.f32.mrf.mxu0
    %v2401 = vadd.f32 0.0, %v2400
    %2402 = vdwg.mxu0
    %2403 = vmatpush.msra.mxu0 %v139
    %2404 = vmatpush.msra.mxu0 %v135
    %2405 = vmatpush.msra.mxu0 %v131
    %2406 = vmatpush.msra.mxu0 %v127
    %2407 = vmatpush.msra.mxu0 %v123
    %2408 = vmatpush.msra.mxu0 %v119
    %2409 = vmatpush.msra.mxu0 %v115
    %2410 = vmatpush.msra.mxu0 %v111
    %2411 = vmatpush.msra.mxu0 %v107
    %2412 = vmatpush.msra.mxu0 %v103
    %2413 = vmatpush.msra.mxu0 %v99
    %2414 = vmatpush.msra.mxu0 %v95
    %2415 = vmatpush.msra.mxu0 %v91
    %2416 = vmatpush.msra.mxu0 %v87
    %2417 = vmatpush.msra.mxu0 %v83
    %2418 = vmatpush.msra.mxu0 %v79
    %2419 = vmatmul.f32.gmra.mxu0 %v2164
    %v2420 = vpop.f32.mrf.mxu0
    %v2421 = vadd.f32 0.0, %v2420
    %2422 = vdwg.mxu0
    %v2427 = vrot.slane %v2361, 4
    %v2428 = vrot.slane %v2381, 4
    %v2429 = vrot.slane %v2401, 4
    %v2430 = vrot.slane %v2421, 4
    %v2435 = vadd.f32 %v516, %v2427
    %v2436 = vadd.f32 %v542, %v2428
    %v2437 = vadd.f32 %v568, %v2429
    %v2438 = vadd.f32 %v594, %v2430
    %v2439 = vtanh.pop %v2435
    %v2440 = vtanh.pop %v2436
    %v2441 = vtanh.pop %v2437
    %v2442 = vtanh.pop %v2438
    %v2443 = vmul.f32 %v2439, 0.5
    %v2444 = vadd.f32 %v2443, 0.5
    %v2445 = vmul.f32 %v2440, 0.5
    %v2446 = vadd.f32 %v2445, 0.5
    %v2447 = vmul.f32 %v2442, 0.5
    %v2448 = vadd.f32 %v2447, 0.5
    %v2450 = vrot.slane %v2158, 6
    %v2452 = vmul.f32 %v2446, %v2450
    %v2453 = vmul.f32 %v2444, %v2441
    %v2454 = vadd.f32 %v2452, %v2453
    %v2455 = vtanh.pop %v2454
    %v2456 = vmul.f32 %v2448, %v2455
    %v2458 = vrot.slane %v2342, 4
    %v2460 = vrot.slane %v2456, 4
    %v2461 = vrot.slane %v2458, 4
    %2464 = vmatpush.msra.mxu0 %v200
    %2465 = vmatpush.msra.mxu0 %v196
    %2466 = vmatpush.msra.mxu0 %v192
    %2467 = vmatpush.msra.mxu0 %v188
    %2468 = vmatpush.msra.mxu0 %v184
    %2469 = vmatpush.msra.mxu0 %v180
    %2470 = vmatpush.msra.mxu0 %v176
    %2471 = vmatpush.msra.mxu0 %v172
    %2472 = vmatpush.msra.mxu0 %v168
    %2473 = vmatpush.msra.mxu0 %v164
    %2474 = vmatpush.msra.mxu0 %v160
    %2475 = vmatpush.msra.mxu0 %v156
    %2476 = vmatpush.msra.mxu0 %v152
    %2477 = vmatpush.msra.mxu0 %v148
    %2478 = vmatpush.msra.mxu0 %v144
    %2479 = vmatpush.msra.mxu0 %v140
    %2480 = vmatmul.f32.gmra.mxu0 %v2460
    %v2481 = vpop.f32.mrf.mxu0
    %v2482 = vadd.f32 %v699, %v2481
    %2483 = vdwg.mxu0
    %2484 = vmatpush.msra.mxu0 %v264
    %2485 = vmatpush.msra.mxu0 %v260
    %2486 = vmatpush.msra.mxu0 %v256
    %2487 = vmatpush.msra.mxu0 %v252
    %2488 = vmatpush.msra.mxu0 %v248
    %2489 = vmatpush.msra.mxu0 %v244
    %2490 = vmatpush.msra.mxu0 %v240
    %2491 = vmatpush.msra.mxu0 %v236
    %2492 = vmatpush.msra.mxu0 %v232
    %2493 = vmatpush.msra.mxu0 %v228
    %2494 = vmatpush.msra.mxu0 %v224
    %2495 = vmatpush.msra.mxu0 %v220
    %2496 = vmatpush.msra.mxu0 %v216
    %2497 = vmatpush.msra.mxu0 %v212
    %2498 = vmatpush.msra.mxu0 %v208
    %2499 = vmatpush.msra.mxu0 %v204
    %2500 = vmatmul.f32.gmra.mxu0 %v2461
    %v2501 = vpop.f32.mrf.mxu0
    %v2502 = vadd.f32 %v2482, %v2501
    %2503 = vdwg.mxu0
    %2504 = vmatpush.msra.mxu0 %v201
    %2505 = vmatpush.msra.mxu0 %v197
    %2506 = vmatpush.msra.mxu0 %v193
    %2507 = vmatpush.msra.mxu0 %v189
    %2508 = vmatpush.msra.mxu0 %v185
    %2509 = vmatpush.msra.mxu0 %v181
    %2510 = vmatpush.msra.mxu0 %v177
    %2511 = vmatpush.msra.mxu0 %v173
    %2512 = vmatpush.msra.mxu0 %v169
    %2513 = vmatpush.msra.mxu0 %v165
    %2514 = vmatpush.msra.mxu0 %v161
    %2515 = vmatpush.msra.mxu0 %v157
    %2516 = vmatpush.msra.mxu0 %v153
    %2517 = vmatpush.msra.mxu0 %v149
    %2518 = vmatpush.msra.mxu0 %v145
    %2519 = vmatpush.msra.mxu0 %v141
    %2520 = vmatmul.f32.gmra.mxu0 %v2460
    %v2521 = vpop.f32.mrf.mxu0
    %v2522 = vadd.f32 %v700, %v2521
    %2523 = vdwg.mxu0
    %2524 = vmatpush.msra.mxu0 %v265
    %2525 = vmatpush.msra.mxu0 %v261
    %2526 = vmatpush.msra.mxu0 %v257
    %2527 = vmatpush.msra.mxu0 %v253
    %2528 = vmatpush.msra.mxu0 %v249
    %2529 = vmatpush.msra.mxu0 %v245
    %2530 = vmatpush.msra.mxu0 %v241
    %2531 = vmatpush.msra.mxu0 %v237
    %2532 = vmatpush.msra.mxu0 %v233
    %2533 = vmatpush.msra.mxu0 %v229
    %2534 = vmatpush.msra.mxu0 %v225
    %2535 = vmatpush.msra.mxu0 %v221
    %2536 = vmatpush.msra.mxu0 %v217
    %2537 = vmatpush.msra.mxu0 %v213
    %2538 = vmatpush.msra.mxu0 %v209
    %2539 = vmatpush.msra.mxu0 %v205
    %2540 = vmatmul.f32.gmra.mxu0 %v2461
    %v2541 = vpop.f32.mrf.mxu0
    %v2542 = vadd.f32 %v2522, %v2541
    %2543 = vdwg.mxu0
    %2544 = vmatpush.msra.mxu0 %v202
    %2545 = vmatpush.msra.mxu0 %v198
    %2546 = vmatpush.msra.mxu0 %v194
    %2547 = vmatpush.msra.mxu0 %v190
    %2548 = vmatpush.msra.mxu0 %v186
    %2549 = vmatpush.msra.mxu0 %v182
    %2550 = vmatpush.msra.mxu0 %v178
    %2551 = vmatpush.msra.mxu0 %v174
    %2552 = vmatpush.msra.mxu0 %v170
    %2553 = vmatpush.msra.mxu0 %v166
    %2554 = vmatpush.msra.mxu0 %v162
    %2555 = vmatpush.msra.mxu0 %v158
    %2556 = vmatpush.msra.mxu0 %v154
    %2557 = vmatpush.msra.mxu0 %v150
    %2558 = vmatpush.msra.mxu0 %v146
    %2559 = vmatpush.msra.mxu0 %v142
    %2560 = vmatmul.f32.gmra.mxu0 %v2460
    %v2561 = vpop.f32.mrf.mxu0
    %v2562 = vadd.f32 %v701, %v2561
    %2563 = vdwg.mxu0
    %2564 = vmatpush.msra.mxu0 %v266
    %2565 = vmatpush.msra.mxu0 %v262
    %2566 = vmatpush.msra.mxu0 %v258
    %2567 = vmatpush.msra.mxu0 %v254
    %2568 = vmatpush.msra.mxu0 %v250
    %2569 = vmatpush.msra.mxu0 %v246
    %2570 = vmatpush.msra.mxu0 %v242
    %2571 = vmatpush.msra.mxu0 %v238
    %2572 = vmatpush.msra.mxu0 %v234
    %2573 = vmatpush.msra.mxu0 %v230
    %2574 = vmatpush.msra.mxu0 %v226
    %2575 = vmatpush.msra.mxu0 %v222
    %2576 = vmatpush.msra.mxu0 %v218
    %2577 = vmatpush.msra.mxu0 %v214
    %2578 = vmatpush.msra.mxu0 %v210
    %2579 = vmatpush.msra.mxu0 %v206
    %2580 = vmatmul.f32.gmra.mxu0 %v2461
    %v2581 = vpop.f32.mrf.mxu0
    %v2582 = vadd.f32 %v2562, %v2581
    %2583 = vdwg.mxu0
    %2584 = vmatpush.msra.mxu0 %v203
    %2585 = vmatpush.msra.mxu0 %v199
    %2586 = vmatpush.msra.mxu0 %v195
    %2587 = vmatpush.msra.mxu0 %v191
    %2588 = vmatpush.msra.mxu0 %v187
    %2589 = vmatpush.msra.mxu0 %v183
    %2590 = vmatpush.msra.mxu0 %v179
    %2591 = vmatpush.msra.mxu0 %v175
    %2592 = vmatpush.msra.mxu0 %v171
    %2593 = vmatpush.msra.mxu0 %v167
    %2594 = vmatpush.msra.mxu0 %v163
    %2595 = vmatpush.msra.mxu0 %v159
    %2596 = vmatpush.msra.mxu0 %v155
    %2597 = vmatpush.msra.mxu0 %v151
    %2598 = vmatpush.msra.mxu0 %v147
    %2599 = vmatpush.msra.mxu0 %v143
    %2600 = vmatmul.f32.gmra.mxu0 %v2460
    %v2601 = vpop.f32.mrf.mxu0
    %v2602 = vadd.f32 %v702, %v2601
    %2603 = vdwg.mxu0
    %2604 = vmatpush.msra.mxu0 %v267
    %2605 = vmatpush.msra.mxu0 %v263
    %2606 = vmatpush.msra.mxu0 %v259
    %2607 = vmatpush.msra.mxu0 %v255
    %2608 = vmatpush.msra.mxu0 %v251
    %2609 = vmatpush.msra.mxu0 %v247
    %2610 = vmatpush.msra.mxu0 %v243
    %2611 = vmatpush.msra.mxu0 %v239
    %2612 = vmatpush.msra.mxu0 %v235
    %2613 = vmatpush.msra.mxu0 %v231
    %2614 = vmatpush.msra.mxu0 %v227
    %2615 = vmatpush.msra.mxu0 %v223
    %2616 = vmatpush.msra.mxu0 %v219
    %2617 = vmatpush.msra.mxu0 %v215
    %2618 = vmatpush.msra.mxu0 %v211
    %2619 = vmatpush.msra.mxu0 %v207
    %2620 = vmatmul.f32.gmra.mxu0 %v2461
    %v2621 = vpop.f32.mrf.mxu0
    %v2622 = vadd.f32 %v2602, %v2621
    %2623 = vdwg.mxu0
    %v2624 = vtanh.pop %v2502
    %v2625 = vtanh.pop %v2542
    %v2626 = vtanh.pop %v2582
    %v2627 = vtanh.pop %v2622
    %v2628 = vmul.f32 %v2624, 0.5
    %v2629 = vadd.f32 %v2628, 0.5
    %v2630 = vmul.f32 %v2625, 0.5
    %v2631 = vadd.f32 %v2630, 0.5
    %v2632 = vmul.f32 %v2627, 0.5
    %v2633 = vadd.f32 %v2632, 0.5
    %v2634 = vmul.f32 %v2631, %v2340
    %v2635 = vmul.f32 %v2629, %v2626
    %v2636 = vadd.f32 %v2634, %v2635
    %v2637 = vtanh.pop %v2636
    %v2638 = vmul.f32 %v2633, %v2637
    %2639 = vmatpush.msra.mxu0 %v136
    %2640 = vmatpush.msra.mxu0 %v132
    %2641 = vmatpush.msra.mxu0 %v128
    %2642 = vmatpush.msra.mxu0 %v124
    %2643 = vmatpush.msra.mxu0 %v120
    %2644 = vmatpush.msra.mxu0 %v116
    %2645 = vmatpush.msra.mxu0 %v112
    %2646 = vmatpush.msra.mxu0 %v108
    %2647 = vmatpush.msra.mxu0 %v104
    %2648 = vmatpush.msra.mxu0 %v100
    %2649 = vmatpush.msra.mxu0 %v96
    %2650 = vmatpush.msra.mxu0 %v92
    %2651 = vmatpush.msra.mxu0 %v88
    %2652 = vmatpush.msra.mxu0 %v84
    %2653 = vmatpush.msra.mxu0 %v80
    %2654 = vmatpush.msra.mxu0 %v76
    %2655 = vmatmul.f32.gmra.mxu0 %v2460
    %v2656 = vpop.f32.mrf.mxu0
    %v2657 = vadd.f32 0.0, %v2656
    %2658 = vdwg.mxu0
    %2659 = vmatpush.msra.mxu0 %v137
    %2660 = vmatpush.msra.mxu0 %v133
    %2661 = vmatpush.msra.mxu0 %v129
    %2662 = vmatpush.msra.mxu0 %v125
    %2663 = vmatpush.msra.mxu0 %v121
    %2664 = vmatpush.msra.mxu0 %v117
    %2665 = vmatpush.msra.mxu0 %v113
    %2666 = vmatpush.msra.mxu0 %v109
    %2667 = vmatpush.msra.mxu0 %v105
    %2668 = vmatpush.msra.mxu0 %v101
    %2669 = vmatpush.msra.mxu0 %v97
    %2670 = vmatpush.msra.mxu0 %v93
    %2671 = vmatpush.msra.mxu0 %v89
    %2672 = vmatpush.msra.mxu0 %v85
    %2673 = vmatpush.msra.mxu0 %v81
    %2674 = vmatpush.msra.mxu0 %v77
    %2675 = vmatmul.f32.gmra.mxu0 %v2460
    %v2676 = vpop.f32.mrf.mxu0
    %v2677 = vadd.f32 0.0, %v2676
    %2678 = vdwg.mxu0
    %2679 = vmatpush.msra.mxu0 %v138
    %2680 = vmatpush.msra.mxu0 %v134
    %2681 = vmatpush.msra.mxu0 %v130
    %2682 = vmatpush.msra.mxu0 %v126
    %2683 = vmatpush.msra.mxu0 %v122
    %2684 = vmatpush.msra.mxu0 %v118
    %2685 = vmatpush.msra.mxu0 %v114
    %2686 = vmatpush.msra.mxu0 %v110
    %2687 = vmatpush.msra.mxu0 %v106
    %2688 = vmatpush.msra.mxu0 %v102
    %2689 = vmatpush.msra.mxu0 %v98
    %2690 = vmatpush.msra.mxu0 %v94
    %2691 = vmatpush.msra.mxu0 %v90
    %2692 = vmatpush.msra.mxu0 %v86
    %2693 = vmatpush.msra.mxu0 %v82
    %2694 = vmatpush.msra.mxu0 %v78
    %2695 = vmatmul.f32.gmra.mxu0 %v2460
    %v2696 = vpop.f32.mrf.mxu0
    %v2697 = vadd.f32 0.0, %v2696
    %2698 = vdwg.mxu0
    %2699 = vmatpush.msra.mxu0 %v139
    %2700 = vmatpush.msra.mxu0 %v135
    %2701 = vmatpush.msra.mxu0 %v131
    %2702 = vmatpush.msra.mxu0 %v127
    %2703 = vmatpush.msra.mxu0 %v123
    %2704 = vmatpush.msra.mxu0 %v119
    %2705 = vmatpush.msra.mxu0 %v115
    %2706 = vmatpush.msra.mxu0 %v111
    %2707 = vmatpush.msra.mxu0 %v107
    %2708 = vmatpush.msra.mxu0 %v103
    %2709 = vmatpush.msra.mxu0 %v99
    %2710 = vmatpush.msra.mxu0 %v95
    %2711 = vmatpush.msra.mxu0 %v91
    %2712 = vmatpush.msra.mxu0 %v87
    %2713 = vmatpush.msra.mxu0 %v83
    %2714 = vmatpush.msra.mxu0 %v79
    %2715 = vmatmul.f32.gmra.mxu0 %v2460
    %v2716 = vpop.f32.mrf.mxu0
    %v2717 = vadd.f32 0.0, %v2716
    %2718 = vdwg.mxu0
    %v2723 = vrot.slane %v2657, 2
    %v2724 = vrot.slane %v2677, 2
    %v2725 = vrot.slane %v2697, 2
    %v2726 = vrot.slane %v2717, 2
    %v2731 = vadd.f32 %v516, %v2723
    %v2732 = vadd.f32 %v542, %v2724
    %v2733 = vadd.f32 %v568, %v2725
    %v2734 = vadd.f32 %v594, %v2726
    %v2735 = vtanh.pop %v2731
    %v2736 = vtanh.pop %v2732
    %v2737 = vtanh.pop %v2733
    %v2738 = vtanh.pop %v2734
    %v2739 = vmul.f32 %v2735, 0.5
    %v2740 = vadd.f32 %v2739, 0.5
    %v2741 = vmul.f32 %v2736, 0.5
    %v2742 = vadd.f32 %v2741, 0.5
    %v2743 = vmul.f32 %v2738, 0.5
    %v2744 = vadd.f32 %v2743, 0.5
    %v2746 = vrot.slane %v2454, 6
    %v2748 = vmul.f32 %v2742, %v2746
    %v2749 = vmul.f32 %v2740, %v2737
    %v2750 = vadd.f32 %v2748, %v2749
    %v2751 = vtanh.pop %v2750
    %v2752 = vmul.f32 %v2744, %v2751
    %v2754 = vrot.slane %v2638, 2
    %v2756 = vrot.slane %v2752, 6
    %v2757 = vrot.slane %v2754, 6
    %2760 = vmatpush.msra.mxu0 %v200
    %2761 = vmatpush.msra.mxu0 %v196
    %2762 = vmatpush.msra.mxu0 %v192
    %2763 = vmatpush.msra.mxu0 %v188
    %2764 = vmatpush.msra.mxu0 %v184
    %2765 = vmatpush.msra.mxu0 %v180
    %2766 = vmatpush.msra.mxu0 %v176
    %2767 = vmatpush.msra.mxu0 %v172
    %2768 = vmatpush.msra.mxu0 %v168
    %2769 = vmatpush.msra.mxu0 %v164
    %2770 = vmatpush.msra.mxu0 %v160
    %2771 = vmatpush.msra.mxu0 %v156
    %2772 = vmatpush.msra.mxu0 %v152
    %2773 = vmatpush.msra.mxu0 %v148
    %2774 = vmatpush.msra.mxu0 %v144
    %2775 = vmatpush.msra.mxu0 %v140
    %2776 = vmatmul.f32.gmra.mxu0 %v2756
    %v2777 = vpop.f32.mrf.mxu0
    %v2778 = vadd.f32 %v699, %v2777
    %2779 = vdwg.mxu0
    %2780 = vmatpush.msra.mxu0 %v264
    %2781 = vmatpush.msra.mxu0 %v260
    %2782 = vmatpush.msra.mxu0 %v256
    %2783 = vmatpush.msra.mxu0 %v252
    %2784 = vmatpush.msra.mxu0 %v248
    %2785 = vmatpush.msra.mxu0 %v244
    %2786 = vmatpush.msra.mxu0 %v240
    %2787 = vmatpush.msra.mxu0 %v236
    %2788 = vmatpush.msra.mxu0 %v232
    %2789 = vmatpush.msra.mxu0 %v228
    %2790 = vmatpush.msra.mxu0 %v224
    %2791 = vmatpush.msra.mxu0 %v220
    %2792 = vmatpush.msra.mxu0 %v216
    %2793 = vmatpush.msra.mxu0 %v212
    %2794 = vmatpush.msra.mxu0 %v208
    %2795 = vmatpush.msra.mxu0 %v204
    %2796 = vmatmul.f32.gmra.mxu0 %v2757
    %v2797 = vpop.f32.mrf.mxu0
    %v2798 = vadd.f32 %v2778, %v2797
    %2799 = vdwg.mxu0
    %2800 = vmatpush.msra.mxu0 %v201
    %2801 = vmatpush.msra.mxu0 %v197
    %2802 = vmatpush.msra.mxu0 %v193
    %2803 = vmatpush.msra.mxu0 %v189
    %2804 = vmatpush.msra.mxu0 %v185
    %2805 = vmatpush.msra.mxu0 %v181
    %2806 = vmatpush.msra.mxu0 %v177
    %2807 = vmatpush.msra.mxu0 %v173
    %2808 = vmatpush.msra.mxu0 %v169
    %2809 = vmatpush.msra.mxu0 %v165
    %2810 = vmatpush.msra.mxu0 %v161
    %2811 = vmatpush.msra.mxu0 %v157
    %2812 = vmatpush.msra.mxu0 %v153
    %2813 = vmatpush.msra.mxu0 %v149
    %2814 = vmatpush.msra.mxu0 %v145
    %2815 = vmatpush.msra.mxu0 %v141
    %2816 = vmatmul.f32.gmra.mxu0 %v2756
    %v2817 = vpop.f32.mrf.mxu0
    %v2818 = vadd.f32 %v700, %v2817
    %2819 = vdwg.mxu0
    %2820 = vmatpush.msra.mxu0 %v265
    %2821 = vmatpush.msra.mxu0 %v261
    %2822 = vmatpush.msra.mxu0 %v257
    %2823 = vmatpush.msra.mxu0 %v253
    %2824 = vmatpush.msra.mxu0 %v249
    %2825 = vmatpush.msra.mxu0 %v245
    %2826 = vmatpush.msra.mxu0 %v241
    %2827 = vmatpush.msra.mxu0 %v237
    %2828 = vmatpush.msra.mxu0 %v233
    %2829 = vmatpush.msra.mxu0 %v229
    %2830 = vmatpush.msra.mxu0 %v225
    %2831 = vmatpush.msra.mxu0 %v221
    %2832 = vmatpush.msra.mxu0 %v217
    %2833 = vmatpush.msra.mxu0 %v213
    %2834 = vmatpush.msra.mxu0 %v209
    %2835 = vmatpush.msra.mxu0 %v205
    %2836 = vmatmul.f32.gmra.mxu0 %v2757
    %v2837 = vpop.f32.mrf.mxu0
    %v2838 = vadd.f32 %v2818, %v2837
    %2839 = vdwg.mxu0
    %2840 = vmatpush.msra.mxu0 %v202
    %2841 = vmatpush.msra.mxu0 %v198
    %2842 = vmatpush.msra.mxu0 %v194
    %2843 = vmatpush.msra.mxu0 %v190
    %2844 = vmatpush.msra.mxu0 %v186
    %2845 = vmatpush.msra.mxu0 %v182
    %2846 = vmatpush.msra.mxu0 %v178
    %2847 = vmatpush.msra.mxu0 %v174
    %2848 = vmatpush.msra.mxu0 %v170
    %2849 = vmatpush.msra.mxu0 %v166
    %2850 = vmatpush.msra.mxu0 %v162
    %2851 = vmatpush.msra.mxu0 %v158
    %2852 = vmatpush.msra.mxu0 %v154
    %2853 = vmatpush.msra.mxu0 %v150
    %2854 = vmatpush.msra.mxu0 %v146
    %2855 = vmatpush.msra.mxu0 %v142
    %2856 = vmatmul.f32.gmra.mxu0 %v2756
    %v2857 = vpop.f32.mrf.mxu0
    %v2858 = vadd.f32 %v701, %v2857
    %2859 = vdwg.mxu0
    %2860 = vmatpush.msra.mxu0 %v266
    %2861 = vmatpush.msra.mxu0 %v262
    %2862 = vmatpush.msra.mxu0 %v258
    %2863 = vmatpush.msra.mxu0 %v254
    %2864 = vmatpush.msra.mxu0 %v250
    %2865 = vmatpush.msra.mxu0 %v246
    %2866 = vmatpush.msra.mxu0 %v242
    %2867 = vmatpush.msra.mxu0 %v238
    %2868 = vmatpush.msra.mxu0 %v234
    %2869 = vmatpush.msra.mxu0 %v230
    %2870 = vmatpush.msra.mxu0 %v226
    %2871 = vmatpush.msra.mxu0 %v222
    %2872 = vmatpush.msra.mxu0 %v218
    %2873 = vmatpush.msra.mxu0 %v214
    %2874 = vmatpush.msra.mxu0 %v210
    %2875 = vmatpush.msra.mxu0 %v206
    %2876 = vmatmul.f32.gmra.mxu0 %v2757
    %v2877 = vpop.f32.mrf.mxu0
    %v2878 = vadd.f32 %v2858, %v2877
    %2879 = vdwg.mxu0
    %2880 = vmatpush.msra.mxu0 %v203
    %2881 = vmatpush.msra.mxu0 %v199
    %2882 = vmatpush.msra.mxu0 %v195
    %2883 = vmatpush.msra.mxu0 %v191
    %2884 = vmatpush.msra.mxu0 %v187
    %2885 = vmatpush.msra.mxu0 %v183
    %2886 = vmatpush.msra.mxu0 %v179
    %2887 = vmatpush.msra.mxu0 %v175
    %2888 = vmatpush.msra.mxu0 %v171
    %2889 = vmatpush.msra.mxu0 %v167
    %2890 = vmatpush.msra.mxu0 %v163
    %2891 = vmatpush.msra.mxu0 %v159
    %2892 = vmatpush.msra.mxu0 %v155
    %2893 = vmatpush.msra.mxu0 %v151
    %2894 = vmatpush.msra.mxu0 %v147
    %2895 = vmatpush.msra.mxu0 %v143
    %2896 = vmatmul.f32.gmra.mxu0 %v2756
    %v2897 = vpop.f32.mrf.mxu0
    %v2898 = vadd.f32 %v702, %v2897
    %2899 = vdwg.mxu0
    %2900 = vmatpush.msra.mxu0 %v267
    %2901 = vmatpush.msra.mxu0 %v263
    %2902 = vmatpush.msra.mxu0 %v259
    %2903 = vmatpush.msra.mxu0 %v255
    %2904 = vmatpush.msra.mxu0 %v251
    %2905 = vmatpush.msra.mxu0 %v247
    %2906 = vmatpush.msra.mxu0 %v243
    %2907 = vmatpush.msra.mxu0 %v239
    %2908 = vmatpush.msra.mxu0 %v235
    %2909 = vmatpush.msra.mxu0 %v231
    %2910 = vmatpush.msra.mxu0 %v227
    %2911 = vmatpush.msra.mxu0 %v223
    %2912 = vmatpush.msra.mxu0 %v219
    %2913 = vmatpush.msra.mxu0 %v215
    %2914 = vmatpush.msra.mxu0 %v211
    %2915 = vmatpush.msra.mxu0 %v207
    %2916 = vmatmul.f32.gmra.mxu0 %v2757
    %v2917 = vpop.f32.mrf.mxu0
    %v2918 = vadd.f32 %v2898, %v2917
    %2919 = vdwg.mxu0
    %v2920 = vtanh.pop %v2798
    %v2921 = vtanh.pop %v2838
    %v2922 = vtanh.pop %v2878
    %v2923 = vtanh.pop %v2918
    %v2924 = vmul.f32 %v2920, 0.5
    %v2925 = vadd.f32 %v2924, 0.5
    %v2926 = vmul.f32 %v2921, 0.5
    %v2927 = vadd.f32 %v2926, 0.5
    %v2928 = vmul.f32 %v2923, 0.5
    %v2929 = vadd.f32 %v2928, 0.5
    %v2930 = vmul.f32 %v2927, %v2636
    %v2931 = vmul.f32 %v2925, %v2922
    %v2932 = vadd.f32 %v2930, %v2931
    %v2933 = vtanh.pop %v2932
    %v2934 = vmul.f32 %v2929, %v2933
    %2935 = vmatpush.msra.mxu0 %v136
    %2936 = vmatpush.msra.mxu0 %v132
    %2937 = vmatpush.msra.mxu0 %v128
    %2938 = vmatpush.msra.mxu0 %v124
    %2939 = vmatpush.msra.mxu0 %v120
    %2940 = vmatpush.msra.mxu0 %v116
    %2941 = vmatpush.msra.mxu0 %v112
    %2942 = vmatpush.msra.mxu0 %v108
    %2943 = vmatpush.msra.mxu0 %v104
    %2944 = vmatpush.msra.mxu0 %v100
    %2945 = vmatpush.msra.mxu0 %v96
    %2946 = vmatpush.msra.mxu0 %v92
    %2947 = vmatpush.msra.mxu0 %v88
    %2948 = vmatpush.msra.mxu0 %v84
    %2949 = vmatpush.msra.mxu0 %v80
    %2950 = vmatpush.msra.mxu0 %v76
    %2951 = vmatmul.f32.gmra.mxu0 %v2756
    %v2952 = vpop.f32.mrf.mxu0
    %v2953 = vadd.f32 0.0, %v2952
    %2954 = vdwg.mxu0
    %2955 = vmatpush.msra.mxu0 %v137
    %2956 = vmatpush.msra.mxu0 %v133
    %2957 = vmatpush.msra.mxu0 %v129
    %2958 = vmatpush.msra.mxu0 %v125
    %2959 = vmatpush.msra.mxu0 %v121
    %2960 = vmatpush.msra.mxu0 %v117
    %2961 = vmatpush.msra.mxu0 %v113
    %2962 = vmatpush.msra.mxu0 %v109
    %2963 = vmatpush.msra.mxu0 %v105
    %2964 = vmatpush.msra.mxu0 %v101
    %2965 = vmatpush.msra.mxu0 %v97
    %2966 = vmatpush.msra.mxu0 %v93
    %2967 = vmatpush.msra.mxu0 %v89
    %2968 = vmatpush.msra.mxu0 %v85
    %2969 = vmatpush.msra.mxu0 %v81
    %2970 = vmatpush.msra.mxu0 %v77
    %2971 = vmatmul.f32.gmra.mxu0 %v2756
    %v2972 = vpop.f32.mrf.mxu0
    %v2973 = vadd.f32 0.0, %v2972
    %2974 = vdwg.mxu0
    %2975 = vmatpush.msra.mxu0 %v138
    %2976 = vmatpush.msra.mxu0 %v134
    %2977 = vmatpush.msra.mxu0 %v130
    %2978 = vmatpush.msra.mxu0 %v126
    %2979 = vmatpush.msra.mxu0 %v122
    %2980 = vmatpush.msra.mxu0 %v118
    %2981 = vmatpush.msra.mxu0 %v114
    %2982 = vmatpush.msra.mxu0 %v110
    %2983 = vmatpush.msra.mxu0 %v106
    %2984 = vmatpush.msra.mxu0 %v102
    %2985 = vmatpush.msra.mxu0 %v98
    %2986 = vmatpush.msra.mxu0 %v94
    %2987 = vmatpush.msra.mxu0 %v90
    %2988 = vmatpush.msra.mxu0 %v86
    %2989 = vmatpush.msra.mxu0 %v82
    %2990 = vmatpush.msra.mxu0 %v78
    %2991 = vmatmul.f32.gmra.mxu0 %v2756
    %v2992 = vpop.f32.mrf.mxu0
    %v2993 = vadd.f32 0.0, %v2992
    %2994 = vdwg.mxu0
    %2995 = vmatpush.msra.mxu0 %v139
    %2996 = vmatpush.msra.mxu0 %v135
    %2997 = vmatpush.msra.mxu0 %v131
    %2998 = vmatpush.msra.mxu0 %v127
    %2999 = vmatpush.msra.mxu0 %v123
    %3000 = vmatpush.msra.mxu0 %v119
    %3001 = vmatpush.msra.mxu0 %v115
    %3002 = vmatpush.msra.mxu0 %v111
    %3003 = vmatpush.msra.mxu0 %v107
    %3004 = vmatpush.msra.mxu0 %v103
    %3005 = vmatpush.msra.mxu0 %v99
    %3006 = vmatpush.msra.mxu0 %v95
    %3007 = vmatpush.msra.mxu0 %v91
    %3008 = vmatpush.msra.mxu0 %v87
    %3009 = vmatpush.msra.mxu0 %v83
    %3010 = vmatpush.msra.mxu0 %v79
    %3011 = vmatmul.f32.gmra.mxu0 %v2756
    %v3012 = vpop.f32.mrf.mxu0
    %v3013 = vadd.f32 0.0, %v3012
    %3014 = vdwg.mxu0
    %v3015 = vadd.f32 %v519, %v2953
    %v3016 = vadd.f32 %v545, %v2973
    %v3017 = vadd.f32 %v571, %v2993
    %v3018 = vadd.f32 %v597, %v3013
    %v3019 = vtanh.pop %v3015
    %v3020 = vtanh.pop %v3016
    %v3021 = vtanh.pop %v3017
    %v3022 = vtanh.pop %v3018
    %v3023 = vmul.f32 %v3019, 0.5
    %v3024 = vadd.f32 %v3023, 0.5
    %v3025 = vmul.f32 %v3020, 0.5
    %v3026 = vadd.f32 %v3025, 0.5
    %v3027 = vmul.f32 %v3022, 0.5
    %v3028 = vadd.f32 %v3027, 0.5
    %v3030 = vrot.slane %v2750, 6
    %v3032 = vmul.f32 %v3026, %v3030
    %v3033 = vmul.f32 %v3024, %v3021
    %v3034 = vadd.f32 %v3032, %v3033
    %v3035 = vtanh.pop %v3034
    %v3036 = vmul.f32 %v3028, %v3035
    %3037 = vmatpush.msra.mxu0 %v200
    %3038 = vmatpush.msra.mxu0 %v196
    %3039 = vmatpush.msra.mxu0 %v192
    %3040 = vmatpush.msra.mxu0 %v188
    %3041 = vmatpush.msra.mxu0 %v184
    %3042 = vmatpush.msra.mxu0 %v180
    %3043 = vmatpush.msra.mxu0 %v176
    %3044 = vmatpush.msra.mxu0 %v172
    %3045 = vmatpush.msra.mxu0 %v168
    %3046 = vmatpush.msra.mxu0 %v164
    %3047 = vmatpush.msra.mxu0 %v160
    %3048 = vmatpush.msra.mxu0 %v156
    %3049 = vmatpush.msra.mxu0 %v152
    %3050 = vmatpush.msra.mxu0 %v148
    %3051 = vmatpush.msra.mxu0 %v144
    %3052 = vmatpush.msra.mxu0 %v140
    %3053 = vmatmul.f32.gmra.mxu0 %v3036
    %v3054 = vpop.f32.mrf.mxu0
    %v3055 = vadd.f32 %v699, %v3054
    %3056 = vdwg.mxu0
    %3057 = vmatpush.msra.mxu0 %v264
    %3058 = vmatpush.msra.mxu0 %v260
    %3059 = vmatpush.msra.mxu0 %v256
    %3060 = vmatpush.msra.mxu0 %v252
    %3061 = vmatpush.msra.mxu0 %v248
    %3062 = vmatpush.msra.mxu0 %v244
    %3063 = vmatpush.msra.mxu0 %v240
    %3064 = vmatpush.msra.mxu0 %v236
    %3065 = vmatpush.msra.mxu0 %v232
    %3066 = vmatpush.msra.mxu0 %v228
    %3067 = vmatpush.msra.mxu0 %v224
    %3068 = vmatpush.msra.mxu0 %v220
    %3069 = vmatpush.msra.mxu0 %v216
    %3070 = vmatpush.msra.mxu0 %v212
    %3071 = vmatpush.msra.mxu0 %v208
    %3072 = vmatpush.msra.mxu0 %v204
    %3073 = vmatmul.f32.gmra.mxu0 %v2934
    %v3074 = vpop.f32.mrf.mxu0
    %v3075 = vadd.f32 %v3055, %v3074
    %3076 = vdwg.mxu0
    %3077 = vmatpush.msra.mxu0 %v201
    %3078 = vmatpush.msra.mxu0 %v197
    %3079 = vmatpush.msra.mxu0 %v193
    %3080 = vmatpush.msra.mxu0 %v189
    %3081 = vmatpush.msra.mxu0 %v185
    %3082 = vmatpush.msra.mxu0 %v181
    %3083 = vmatpush.msra.mxu0 %v177
    %3084 = vmatpush.msra.mxu0 %v173
    %3085 = vmatpush.msra.mxu0 %v169
    %3086 = vmatpush.msra.mxu0 %v165
    %3087 = vmatpush.msra.mxu0 %v161
    %3088 = vmatpush.msra.mxu0 %v157
    %3089 = vmatpush.msra.mxu0 %v153
    %3090 = vmatpush.msra.mxu0 %v149
    %3091 = vmatpush.msra.mxu0 %v145
    %3092 = vmatpush.msra.mxu0 %v141
    %3093 = vmatmul.f32.gmra.mxu0 %v3036
    %v3094 = vpop.f32.mrf.mxu0
    %v3095 = vadd.f32 %v700, %v3094
    %3096 = vdwg.mxu0
    %3097 = vmatpush.msra.mxu0 %v265
    %3098 = vmatpush.msra.mxu0 %v261
    %3099 = vmatpush.msra.mxu0 %v257
    %3100 = vmatpush.msra.mxu0 %v253
    %3101 = vmatpush.msra.mxu0 %v249
    %3102 = vmatpush.msra.mxu0 %v245
    %3103 = vmatpush.msra.mxu0 %v241
    %3104 = vmatpush.msra.mxu0 %v237
    %3105 = vmatpush.msra.mxu0 %v233
    %3106 = vmatpush.msra.mxu0 %v229
    %3107 = vmatpush.msra.mxu0 %v225
    %3108 = vmatpush.msra.mxu0 %v221
    %3109 = vmatpush.msra.mxu0 %v217
    %3110 = vmatpush.msra.mxu0 %v213
    %3111 = vmatpush.msra.mxu0 %v209
    %3112 = vmatpush.msra.mxu0 %v205
    %3113 = vmatmul.f32.gmra.mxu0 %v2934
    %v3114 = vpop.f32.mrf.mxu0
    %v3115 = vadd.f32 %v3095, %v3114
    %3116 = vdwg.mxu0
    %3117 = vmatpush.msra.mxu0 %v202
    %3118 = vmatpush.msra.mxu0 %v198
    %3119 = vmatpush.msra.mxu0 %v194
    %3120 = vmatpush.msra.mxu0 %v190
    %3121 = vmatpush.msra.mxu0 %v186
    %3122 = vmatpush.msra.mxu0 %v182
    %3123 = vmatpush.msra.mxu0 %v178
    %3124 = vmatpush.msra.mxu0 %v174
    %3125 = vmatpush.msra.mxu0 %v170
    %3126 = vmatpush.msra.mxu0 %v166
    %3127 = vmatpush.msra.mxu0 %v162
    %3128 = vmatpush.msra.mxu0 %v158
    %3129 = vmatpush.msra.mxu0 %v154
    %3130 = vmatpush.msra.mxu0 %v150
    %3131 = vmatpush.msra.mxu0 %v146
    %3132 = vmatpush.msra.mxu0 %v142
    %3133 = vmatmul.f32.gmra.mxu0 %v3036
    %v3134 = vpop.f32.mrf.mxu0
    %v3135 = vadd.f32 %v701, %v3134
    %3136 = vdwg.mxu0
    %3137 = vmatpush.msra.mxu0 %v266
    %3138 = vmatpush.msra.mxu0 %v262
    %3139 = vmatpush.msra.mxu0 %v258
    %3140 = vmatpush.msra.mxu0 %v254
    %3141 = vmatpush.msra.mxu0 %v250
    %3142 = vmatpush.msra.mxu0 %v246
    %3143 = vmatpush.msra.mxu0 %v242
    %3144 = vmatpush.msra.mxu0 %v238
    %3145 = vmatpush.msra.mxu0 %v234
    %3146 = vmatpush.msra.mxu0 %v230
    %3147 = vmatpush.msra.mxu0 %v226
    %3148 = vmatpush.msra.mxu0 %v222
    %3149 = vmatpush.msra.mxu0 %v218
    %3150 = vmatpush.msra.mxu0 %v214
    %3151 = vmatpush.msra.mxu0 %v210
    %3152 = vmatpush.msra.mxu0 %v206
    %3153 = vmatmul.f32.gmra.mxu0 %v2934
    %v3154 = vpop.f32.mrf.mxu0
    %v3155 = vadd.f32 %v3135, %v3154
    %3156 = vdwg.mxu0
    %3157 = vmatpush.msra.mxu0 %v203
    %3158 = vmatpush.msra.mxu0 %v199
    %3159 = vmatpush.msra.mxu0 %v195
    %3160 = vmatpush.msra.mxu0 %v191
    %3161 = vmatpush.msra.mxu0 %v187
    %3162 = vmatpush.msra.mxu0 %v183
    %3163 = vmatpush.msra.mxu0 %v179
    %3164 = vmatpush.msra.mxu0 %v175
    %3165 = vmatpush.msra.mxu0 %v171
    %3166 = vmatpush.msra.mxu0 %v167
    %3167 = vmatpush.msra.mxu0 %v163
    %3168 = vmatpush.msra.mxu0 %v159
    %3169 = vmatpush.msra.mxu0 %v155
    %3170 = vmatpush.msra.mxu0 %v151
    %3171 = vmatpush.msra.mxu0 %v147
    %3172 = vmatpush.msra.mxu0 %v143
    %3173 = vmatmul.f32.gmra.mxu0 %v3036
    %v3174 = vpop.f32.mrf.mxu0
    %v3175 = vadd.f32 %v702, %v3174
    %3176 = vdwg.mxu0
    %3177 = vmatpush.msra.mxu0 %v267
    %3178 = vmatpush.msra.mxu0 %v263
    %3179 = vmatpush.msra.mxu0 %v259
    %3180 = vmatpush.msra.mxu0 %v255
    %3181 = vmatpush.msra.mxu0 %v251
    %3182 = vmatpush.msra.mxu0 %v247
    %3183 = vmatpush.msra.mxu0 %v243
    %3184 = vmatpush.msra.mxu0 %v239
    %3185 = vmatpush.msra.mxu0 %v235
    %3186 = vmatpush.msra.mxu0 %v231
    %3187 = vmatpush.msra.mxu0 %v227
    %3188 = vmatpush.msra.mxu0 %v223
    %3189 = vmatpush.msra.mxu0 %v219
    %3190 = vmatpush.msra.mxu0 %v215
    %3191 = vmatpush.msra.mxu0 %v211
    %3192 = vmatpush.msra.mxu0 %v207
    %3193 = vmatmul.f32.gmra.mxu0 %v2934
    %v3194 = vpop.f32.mrf.mxu0
    %v3195 = vadd.f32 %v3175, %v3194
    %3196 = vdwg.mxu0
    %v3197 = vtanh.pop %v3075
    %v3198 = vtanh.pop %v3115
    %v3199 = vtanh.pop %v3155
    %v3200 = vtanh.pop %v3195
    %v3201 = vmul.f32 %v3197, 0.5
    %v3202 = vadd.f32 %v3201, 0.5
    %v3203 = vmul.f32 %v3198, 0.5
    %v3204 = vadd.f32 %v3203, 0.5
    %v3205 = vmul.f32 %v3200, 0.5
    %v3206 = vadd.f32 %v3205, 0.5
    %v3207 = vmul.f32 %v3204, %v2932
    %v3208 = vmul.f32 %v3202, %v3199
    %v3209 = vadd.f32 %v3207, %v3208
    %v3210 = vtanh.pop %v3209
    %v3211 = vmul.f32 %v3206, %v3210
    %3212 = vmatpush.msra.mxu0 %v136
    %3213 = vmatpush.msra.mxu0 %v132
    %3214 = vmatpush.msra.mxu0 %v128
    %3215 = vmatpush.msra.mxu0 %v124
    %3216 = vmatpush.msra.mxu0 %v120
    %3217 = vmatpush.msra.mxu0 %v116
    %3218 = vmatpush.msra.mxu0 %v112
    %3219 = vmatpush.msra.mxu0 %v108
    %3220 = vmatpush.msra.mxu0 %v104
    %3221 = vmatpush.msra.mxu0 %v100
    %3222 = vmatpush.msra.mxu0 %v96
    %3223 = vmatpush.msra.mxu0 %v92
    %3224 = vmatpush.msra.mxu0 %v88
    %3225 = vmatpush.msra.mxu0 %v84
    %3226 = vmatpush.msra.mxu0 %v80
    %3227 = vmatpush.msra.mxu0 %v76
    %3228 = vmatmul.f32.gmra.mxu0 %v3036
    %v3229 = vpop.f32.mrf.mxu0
    %v3230 = vadd.f32 0.0, %v3229
    %3231 = vdwg.mxu0
    %3232 = vmatpush.msra.mxu0 %v137
    %3233 = vmatpush.msra.mxu0 %v133
    %3234 = vmatpush.msra.mxu0 %v129
    %3235 = vmatpush.msra.mxu0 %v125
    %3236 = vmatpush.msra.mxu0 %v121
    %3237 = vmatpush.msra.mxu0 %v117
    %3238 = vmatpush.msra.mxu0 %v113
    %3239 = vmatpush.msra.mxu0 %v109
    %3240 = vmatpush.msra.mxu0 %v105
    %3241 = vmatpush.msra.mxu0 %v101
    %3242 = vmatpush.msra.mxu0 %v97
    %3243 = vmatpush.msra.mxu0 %v93
    %3244 = vmatpush.msra.mxu0 %v89
    %3245 = vmatpush.msra.mxu0 %v85
    %3246 = vmatpush.msra.mxu0 %v81
    %3247 = vmatpush.msra.mxu0 %v77
    %3248 = vmatmul.f32.gmra.mxu0 %v3036
    %v3249 = vpop.f32.mrf.mxu0
    %v3250 = vadd.f32 0.0, %v3249
    %3251 = vdwg.mxu0
    %3252 = vmatpush.msra.mxu0 %v138
    %3253 = vmatpush.msra.mxu0 %v134
    %3254 = vmatpush.msra.mxu0 %v130
    %3255 = vmatpush.msra.mxu0 %v126
    %3256 = vmatpush.msra.mxu0 %v122
    %3257 = vmatpush.msra.mxu0 %v118
    %3258 = vmatpush.msra.mxu0 %v114
    %3259 = vmatpush.msra.mxu0 %v110
    %3260 = vmatpush.msra.mxu0 %v106
    %3261 = vmatpush.msra.mxu0 %v102
    %3262 = vmatpush.msra.mxu0 %v98
    %3263 = vmatpush.msra.mxu0 %v94
    %3264 = vmatpush.msra.mxu0 %v90
    %3265 = vmatpush.msra.mxu0 %v86
    %3266 = vmatpush.msra.mxu0 %v82
    %3267 = vmatpush.msra.mxu0 %v78
    %3268 = vmatmul.f32.gmra.mxu0 %v3036
    %v3269 = vpop.f32.mrf.mxu0
    %v3270 = vadd.f32 0.0, %v3269
    %3271 = vdwg.mxu0
    %3272 = vmatpush.msra.mxu0 %v139
    %3273 = vmatpush.msra.mxu0 %v135
    %3274 = vmatpush.msra.mxu0 %v131
    %3275 = vmatpush.msra.mxu0 %v127
    %3276 = vmatpush.msra.mxu0 %v123
    %3277 = vmatpush.msra.mxu0 %v119
    %3278 = vmatpush.msra.mxu0 %v115
    %3279 = vmatpush.msra.mxu0 %v111
    %3280 = vmatpush.msra.mxu0 %v107
    %3281 = vmatpush.msra.mxu0 %v103
    %3282 = vmatpush.msra.mxu0 %v99
    %3283 = vmatpush.msra.mxu0 %v95
    %3284 = vmatpush.msra.mxu0 %v91
    %3285 = vmatpush.msra.mxu0 %v87
    %3286 = vmatpush.msra.mxu0 %v83
    %3287 = vmatpush.msra.mxu0 %v79
    %3288 = vmatmul.f32.gmra.mxu0 %v3036
    %v3289 = vpop.f32.mrf.mxu0
    %v3290 = vadd.f32 0.0, %v3289
    %3291 = vdwg.mxu0
    %v3296 = vrot.slane %v3230, 6
    %v3297 = vrot.slane %v3250, 6
    %v3298 = vrot.slane %v3270, 6
    %v3299 = vrot.slane %v3290, 6
    %v3304 = vadd.f32 %v519, %v3296
    %v3305 = vadd.f32 %v545, %v3297
    %v3306 = vadd.f32 %v571, %v3298
    %v3307 = vadd.f32 %v597, %v3299
    %v3308 = vtanh.pop %v3304
    %v3309 = vtanh.pop %v3305
    %v3310 = vtanh.pop %v3306
    %v3311 = vtanh.pop %v3307
    %v3312 = vmul.f32 %v3308, 0.5
    %v3313 = vadd.f32 %v3312, 0.5
    %v3314 = vmul.f32 %v3309, 0.5
    %v3315 = vadd.f32 %v3314, 0.5
    %v3316 = vmul.f32 %v3311, 0.5
    %v3317 = vadd.f32 %v3316, 0.5
    %v3319 = vrot.slane %v3034, 6
    %v3321 = vmul.f32 %v3315, %v3319
    %v3322 = vmul.f32 %v3313, %v3310
    %v3323 = vadd.f32 %v3321, %v3322
    %v3324 = vtanh.pop %v3323
    %v3325 = vmul.f32 %v3317, %v3324
    %v3327 = vrot.slane %v3211, 6
    %v3329 = vrot.slane %v3325, 2
    %v3330 = vrot.slane %v3327, 2
    %3333 = vmatpush.msra.mxu0 %v200
    %3334 = vmatpush.msra.mxu0 %v196
    %3335 = vmatpush.msra.mxu0 %v192
    %3336 = vmatpush.msra.mxu0 %v188
    %3337 = vmatpush.msra.mxu0 %v184
    %3338 = vmatpush.msra.mxu0 %v180
    %3339 = vmatpush.msra.mxu0 %v176
    %3340 = vmatpush.msra.mxu0 %v172
    %3341 = vmatpush.msra.mxu0 %v168
    %3342 = vmatpush.msra.mxu0 %v164
    %3343 = vmatpush.msra.mxu0 %v160
    %3344 = vmatpush.msra.mxu0 %v156
    %3345 = vmatpush.msra.mxu0 %v152
    %3346 = vmatpush.msra.mxu0 %v148
    %3347 = vmatpush.msra.mxu0 %v144
    %3348 = vmatpush.msra.mxu0 %v140
    %3349 = vmatmul.f32.gmra.mxu0 %v3329
    %v3350 = vpop.f32.mrf.mxu0
    %v3351 = vadd.f32 %v699, %v3350
    %3352 = vdwg.mxu0
    %3353 = vmatpush.msra.mxu0 %v264
    %3354 = vmatpush.msra.mxu0 %v260
    %3355 = vmatpush.msra.mxu0 %v256
    %3356 = vmatpush.msra.mxu0 %v252
    %3357 = vmatpush.msra.mxu0 %v248
    %3358 = vmatpush.msra.mxu0 %v244
    %3359 = vmatpush.msra.mxu0 %v240
    %3360 = vmatpush.msra.mxu0 %v236
    %3361 = vmatpush.msra.mxu0 %v232
    %3362 = vmatpush.msra.mxu0 %v228
    %3363 = vmatpush.msra.mxu0 %v224
    %3364 = vmatpush.msra.mxu0 %v220
    %3365 = vmatpush.msra.mxu0 %v216
    %3366 = vmatpush.msra.mxu0 %v212
    %3367 = vmatpush.msra.mxu0 %v208
    %3368 = vmatpush.msra.mxu0 %v204
    %3369 = vmatmul.f32.gmra.mxu0 %v3330
    %v3370 = vpop.f32.mrf.mxu0
    %v3371 = vadd.f32 %v3351, %v3370
    %3372 = vdwg.mxu0
    %3373 = vmatpush.msra.mxu0 %v201
    %3374 = vmatpush.msra.mxu0 %v197
    %3375 = vmatpush.msra.mxu0 %v193
    %3376 = vmatpush.msra.mxu0 %v189
    %3377 = vmatpush.msra.mxu0 %v185
    %3378 = vmatpush.msra.mxu0 %v181
    %3379 = vmatpush.msra.mxu0 %v177
    %3380 = vmatpush.msra.mxu0 %v173
    %3381 = vmatpush.msra.mxu0 %v169
    %3382 = vmatpush.msra.mxu0 %v165
    %3383 = vmatpush.msra.mxu0 %v161
    %3384 = vmatpush.msra.mxu0 %v157
    %3385 = vmatpush.msra.mxu0 %v153
    %3386 = vmatpush.msra.mxu0 %v149
    %3387 = vmatpush.msra.mxu0 %v145
    %3388 = vmatpush.msra.mxu0 %v141
    %3389 = vmatmul.f32.gmra.mxu0 %v3329
    %v3390 = vpop.f32.mrf.mxu0
    %v3391 = vadd.f32 %v700, %v3390
    %3392 = vdwg.mxu0
    %3393 = vmatpush.msra.mxu0 %v265
    %3394 = vmatpush.msra.mxu0 %v261
    %3395 = vmatpush.msra.mxu0 %v257
    %3396 = vmatpush.msra.mxu0 %v253
    %3397 = vmatpush.msra.mxu0 %v249
    %3398 = vmatpush.msra.mxu0 %v245
    %3399 = vmatpush.msra.mxu0 %v241
    %3400 = vmatpush.msra.mxu0 %v237
    %3401 = vmatpush.msra.mxu0 %v233
    %3402 = vmatpush.msra.mxu0 %v229
    %3403 = vmatpush.msra.mxu0 %v225
    %3404 = vmatpush.msra.mxu0 %v221
    %3405 = vmatpush.msra.mxu0 %v217
    %3406 = vmatpush.msra.mxu0 %v213
    %3407 = vmatpush.msra.mxu0 %v209
    %3408 = vmatpush.msra.mxu0 %v205
    %3409 = vmatmul.f32.gmra.mxu0 %v3330
    %v3410 = vpop.f32.mrf.mxu0
    %v3411 = vadd.f32 %v3391, %v3410
    %3412 = vdwg.mxu0
    %3413 = vmatpush.msra.mxu0 %v202
    %3414 = vmatpush.msra.mxu0 %v198
    %3415 = vmatpush.msra.mxu0 %v194
    %3416 = vmatpush.msra.mxu0 %v190
    %3417 = vmatpush.msra.mxu0 %v186
    %3418 = vmatpush.msra.mxu0 %v182
    %3419 = vmatpush.msra.mxu0 %v178
    %3420 = vmatpush.msra.mxu0 %v174
    %3421 = vmatpush.msra.mxu0 %v170
    %3422 = vmatpush.msra.mxu0 %v166
    %3423 = vmatpush.msra.mxu0 %v162
    %3424 = vmatpush.msra.mxu0 %v158
    %3425 = vmatpush.msra.mxu0 %v154
    %3426 = vmatpush.msra.mxu0 %v150
    %3427 = vmatpush.msra.mxu0 %v146
    %3428 = vmatpush.msra.mxu0 %v142
    %3429 = vmatmul.f32.gmra.mxu0 %v3329
    %v3430 = vpop.f32.mrf.mxu0
    %v3431 = vadd.f32 %v701, %v3430
    %3432 = vdwg.mxu0
    %3433 = vmatpush.msra.mxu0 %v266
    %3434 = vmatpush.msra.mxu0 %v262
    %3435 = vmatpush.msra.mxu0 %v258
    %3436 = vmatpush.msra.mxu0 %v254
    %3437 = vmatpush.msra.mxu0 %v250
    %3438 = vmatpush.msra.mxu0 %v246
    %3439 = vmatpush.msra.mxu0 %v242
    %3440 = vmatpush.msra.mxu0 %v238
    %3441 = vmatpush.msra.mxu0 %v234
    %3442 = vmatpush.msra.mxu0 %v230
    %3443 = vmatpush.msra.mxu0 %v226
    %3444 = vmatpush.msra.mxu0 %v222
    %3445 = vmatpush.msra.mxu0 %v218
    %3446 = vmatpush.msra.mxu0 %v214
    %3447 = vmatpush.msra.mxu0 %v210
    %3448 = vmatpush.msra.mxu0 %v206
    %3449 = vmatmul.f32.gmra.mxu0 %v3330
    %v3450 = vpop.f32.mrf.mxu0
    %v3451 = vadd.f32 %v3431, %v3450
    %3452 = vdwg.mxu0
    %3453 = vmatpush.msra.mxu0 %v203
    %3454 = vmatpush.msra.mxu0 %v199
    %3455 = vmatpush.msra.mxu0 %v195
    %3456 = vmatpush.msra.mxu0 %v191
    %3457 = vmatpush.msra.mxu0 %v187
    %3458 = vmatpush.msra.mxu0 %v183
    %3459 = vmatpush.msra.mxu0 %v179
    %3460 = vmatpush.msra.mxu0 %v175
    %3461 = vmatpush.msra.mxu0 %v171
    %3462 = vmatpush.msra.mxu0 %v167
    %3463 = vmatpush.msra.mxu0 %v163
    %3464 = vmatpush.msra.mxu0 %v159
    %3465 = vmatpush.msra.mxu0 %v155
    %3466 = vmatpush.msra.mxu0 %v151
    %3467 = vmatpush.msra.mxu0 %v147
    %3468 = vmatpush.msra.mxu0 %v143
    %3469 = vmatmul.f32.gmra.mxu0 %v3329
    %v3470 = vpop.f32.mrf.mxu0
    %v3471 = vadd.f32 %v702, %v3470
    %3472 = vdwg.mxu0
    %3473 = vmatpush.msra.mxu0 %v267
    %3474 = vmatpush.msra.mxu0 %v263
    %3475 = vmatpush.msra.mxu0 %v259
    %3476 = vmatpush.msra.mxu0 %v255
    %3477 = vmatpush.msra.mxu0 %v251
    %3478 = vmatpush.msra.mxu0 %v247
    %3479 = vmatpush.msra.mxu0 %v243
    %3480 = vmatpush.msra.mxu0 %v239
    %3481 = vmatpush.msra.mxu0 %v235
    %3482 = vmatpush.msra.mxu0 %v231
    %3483 = vmatpush.msra.mxu0 %v227
    %3484 = vmatpush.msra.mxu0 %v223
    %3485 = vmatpush.msra.mxu0 %v219
    %3486 = vmatpush.msra.mxu0 %v215
    %3487 = vmatpush.msra.mxu0 %v211
    %3488 = vmatpush.msra.mxu0 %v207
    %3489 = vmatmul.f32.gmra.mxu0 %v3330
    %v3490 = vpop.f32.mrf.mxu0
    %v3491 = vadd.f32 %v3471, %v3490
    %3492 = vdwg.mxu0
    %v3493 = vtanh.pop %v3371
    %v3494 = vtanh.pop %v3411
    %v3495 = vtanh.pop %v3451
    %v3496 = vtanh.pop %v3491
    %v3497 = vmul.f32 %v3493, 0.5
    %v3498 = vadd.f32 %v3497, 0.5
    %v3499 = vmul.f32 %v3494, 0.5
    %v3500 = vadd.f32 %v3499, 0.5
    %v3501 = vmul.f32 %v3496, 0.5
    %v3502 = vadd.f32 %v3501, 0.5
    %v3503 = vmul.f32 %v3500, %v3209
    %v3504 = vmul.f32 %v3498, %v3495
    %v3505 = vadd.f32 %v3503, %v3504
    %v3506 = vtanh.pop %v3505
    %v3507 = vmul.f32 %v3502, %v3506
    %3508 = vmatpush.msra.mxu0 %v136
    %3509 = vmatpush.msra.mxu0 %v132
    %3510 = vmatpush.msra.mxu0 %v128
    %3511 = vmatpush.msra.mxu0 %v124
    %3512 = vmatpush.msra.mxu0 %v120
    %3513 = vmatpush.msra.mxu0 %v116
    %3514 = vmatpush.msra.mxu0 %v112
    %3515 = vmatpush.msra.mxu0 %v108
    %3516 = vmatpush.msra.mxu0 %v104
    %3517 = vmatpush.msra.mxu0 %v100
    %3518 = vmatpush.msra.mxu0 %v96
    %3519 = vmatpush.msra.mxu0 %v92
    %3520 = vmatpush.msra.mxu0 %v88
    %3521 = vmatpush.msra.mxu0 %v84
    %3522 = vmatpush.msra.mxu0 %v80
    %3523 = vmatpush.msra.mxu0 %v76
    %3524 = vmatmul.f32.gmra.mxu0 %v3329
    %v3525 = vpop.f32.mrf.mxu0
    %v3526 = vadd.f32 0.0, %v3525
    %3527 = vdwg.mxu0
    %3528 = vmatpush.msra.mxu0 %v137
    %3529 = vmatpush.msra.mxu0 %v133
    %3530 = vmatpush.msra.mxu0 %v129
    %3531 = vmatpush.msra.mxu0 %v125
    %3532 = vmatpush.msra.mxu0 %v121
    %3533 = vmatpush.msra.mxu0 %v117
    %3534 = vmatpush.msra.mxu0 %v113
    %3535 = vmatpush.msra.mxu0 %v109
    %3536 = vmatpush.msra.mxu0 %v105
    %3537 = vmatpush.msra.mxu0 %v101
    %3538 = vmatpush.msra.mxu0 %v97
    %3539 = vmatpush.msra.mxu0 %v93
    %3540 = vmatpush.msra.mxu0 %v89
    %3541 = vmatpush.msra.mxu0 %v85
    %3542 = vmatpush.msra.mxu0 %v81
    %3543 = vmatpush.msra.mxu0 %v77
    %3544 = vmatmul.f32.gmra.mxu0 %v3329
    %v3545 = vpop.f32.mrf.mxu0
    %v3546 = vadd.f32 0.0, %v3545
    %3547 = vdwg.mxu0
    %3548 = vmatpush.msra.mxu0 %v138
    %3549 = vmatpush.msra.mxu0 %v134
    %3550 = vmatpush.msra.mxu0 %v130
    %3551 = vmatpush.msra.mxu0 %v126
    %3552 = vmatpush.msra.mxu0 %v122
    %3553 = vmatpush.msra.mxu0 %v118
    %3554 = vmatpush.msra.mxu0 %v114
    %3555 = vmatpush.msra.mxu0 %v110
    %3556 = vmatpush.msra.mxu0 %v106
    %3557 = vmatpush.msra.mxu0 %v102
    %3558 = vmatpush.msra.mxu0 %v98
    %3559 = vmatpush.msra.mxu0 %v94
    %3560 = vmatpush.msra.mxu0 %v90
    %3561 = vmatpush.msra.mxu0 %v86
    %3562 = vmatpush.msra.mxu0 %v82
    %3563 = vmatpush.msra.mxu0 %v78
    %3564 = vmatmul.f32.gmra.mxu0 %v3329
    %v3565 = vpop.f32.mrf.mxu0
    %v3566 = vadd.f32 0.0, %v3565
    %3567 = vdwg.mxu0
    %3568 = vmatpush.msra.mxu0 %v139
    %3569 = vmatpush.msra.mxu0 %v135
    %3570 = vmatpush.msra.mxu0 %v131
    %3571 = vmatpush.msra.mxu0 %v127
    %3572 = vmatpush.msra.mxu0 %v123
    %3573 = vmatpush.msra.mxu0 %v119
    %3574 = vmatpush.msra.mxu0 %v115
    %3575 = vmatpush.msra.mxu0 %v111
    %3576 = vmatpush.msra.mxu0 %v107
    %3577 = vmatpush.msra.mxu0 %v103
    %3578 = vmatpush.msra.mxu0 %v99
    %3579 = vmatpush.msra.mxu0 %v95
    %3580 = vmatpush.msra.mxu0 %v91
    %3581 = vmatpush.msra.mxu0 %v87
    %3582 = vmatpush.msra.mxu0 %v83
    %3583 = vmatpush.msra.mxu0 %v79
    %3584 = vmatmul.f32.gmra.mxu0 %v3329
    %v3585 = vpop.f32.mrf.mxu0
    %v3586 = vadd.f32 0.0, %v3585
    %3587 = vdwg.mxu0
    %v3592 = vrot.slane %v3526, 4
    %v3593 = vrot.slane %v3546, 4
    %v3594 = vrot.slane %v3566, 4
    %v3595 = vrot.slane %v3586, 4
    %v3600 = vadd.f32 %v519, %v3592
    %v3601 = vadd.f32 %v545, %v3593
    %v3602 = vadd.f32 %v571, %v3594
    %v3603 = vadd.f32 %v597, %v3595
    %v3604 = vtanh.pop %v3600
    %v3605 = vtanh.pop %v3601
    %v3606 = vtanh.pop %v3602
    %v3607 = vtanh.pop %v3603
    %v3608 = vmul.f32 %v3604, 0.5
    %v3609 = vadd.f32 %v3608, 0.5
    %v3610 = vmul.f32 %v3605, 0.5
    %v3611 = vadd.f32 %v3610, 0.5
    %v3612 = vmul.f32 %v3607, 0.5
    %v3613 = vadd.f32 %v3612, 0.5
    %v3615 = vrot.slane %v3323, 6
    %v3617 = vmul.f32 %v3611, %v3615
    %v3618 = vmul.f32 %v3609, %v3606
    %v3619 = vadd.f32 %v3617, %v3618
    %v3620 = vtanh.pop %v3619
    %v3621 = vmul.f32 %v3613, %v3620
    %v3623 = vrot.slane %v3507, 4
    %v3625 = vrot.slane %v3621, 4
    %v3626 = vrot.slane %v3623, 4
    %3629 = vmatpush.msra.mxu0 %v200
    %3630 = vmatpush.msra.mxu0 %v196
    %3631 = vmatpush.msra.mxu0 %v192
    %3632 = vmatpush.msra.mxu0 %v188
    %3633 = vmatpush.msra.mxu0 %v184
    %3634 = vmatpush.msra.mxu0 %v180
    %3635 = vmatpush.msra.mxu0 %v176
    %3636 = vmatpush.msra.mxu0 %v172
    %3637 = vmatpush.msra.mxu0 %v168
    %3638 = vmatpush.msra.mxu0 %v164
    %3639 = vmatpush.msra.mxu0 %v160
    %3640 = vmatpush.msra.mxu0 %v156
    %3641 = vmatpush.msra.mxu0 %v152
    %3642 = vmatpush.msra.mxu0 %v148
    %3643 = vmatpush.msra.mxu0 %v144
    %3644 = vmatpush.msra.mxu0 %v140
    %3645 = vmatmul.f32.gmra.mxu0 %v3625
    %v3646 = vpop.f32.mrf.mxu0
    %v3647 = vadd.f32 %v699, %v3646
    %3648 = vdwg.mxu0
    %3649 = vmatpush.msra.mxu0 %v264
    %3650 = vmatpush.msra.mxu0 %v260
    %3651 = vmatpush.msra.mxu0 %v256
    %3652 = vmatpush.msra.mxu0 %v252
    %3653 = vmatpush.msra.mxu0 %v248
    %3654 = vmatpush.msra.mxu0 %v244
    %3655 = vmatpush.msra.mxu0 %v240
    %3656 = vmatpush.msra.mxu0 %v236
    %3657 = vmatpush.msra.mxu0 %v232
    %3658 = vmatpush.msra.mxu0 %v228
    %3659 = vmatpush.msra.mxu0 %v224
    %3660 = vmatpush.msra.mxu0 %v220
    %3661 = vmatpush.msra.mxu0 %v216
    %3662 = vmatpush.msra.mxu0 %v212
    %3663 = vmatpush.msra.mxu0 %v208
    %3664 = vmatpush.msra.mxu0 %v204
    %3665 = vmatmul.f32.gmra.mxu0 %v3626
    %v3666 = vpop.f32.mrf.mxu0
    %v3667 = vadd.f32 %v3647, %v3666
    %3668 = vdwg.mxu0
    %3669 = vmatpush.msra.mxu0 %v201
    %3670 = vmatpush.msra.mxu0 %v197
    %3671 = vmatpush.msra.mxu0 %v193
    %3672 = vmatpush.msra.mxu0 %v189
    %3673 = vmatpush.msra.mxu0 %v185
    %3674 = vmatpush.msra.mxu0 %v181
    %3675 = vmatpush.msra.mxu0 %v177
    %3676 = vmatpush.msra.mxu0 %v173
    %3677 = vmatpush.msra.mxu0 %v169
    %3678 = vmatpush.msra.mxu0 %v165
    %3679 = vmatpush.msra.mxu0 %v161
    %3680 = vmatpush.msra.mxu0 %v157
    %3681 = vmatpush.msra.mxu0 %v153
    %3682 = vmatpush.msra.mxu0 %v149
    %3683 = vmatpush.msra.mxu0 %v145
    %3684 = vmatpush.msra.mxu0 %v141
    %3685 = vmatmul.f32.gmra.mxu0 %v3625
    %v3686 = vpop.f32.mrf.mxu0
    %v3687 = vadd.f32 %v700, %v3686
    %3688 = vdwg.mxu0
    %3689 = vmatpush.msra.mxu0 %v265
    %3690 = vmatpush.msra.mxu0 %v261
    %3691 = vmatpush.msra.mxu0 %v257
    %3692 = vmatpush.msra.mxu0 %v253
    %3693 = vmatpush.msra.mxu0 %v249
    %3694 = vmatpush.msra.mxu0 %v245
    %3695 = vmatpush.msra.mxu0 %v241
    %3696 = vmatpush.msra.mxu0 %v237
    %3697 = vmatpush.msra.mxu0 %v233
    %3698 = vmatpush.msra.mxu0 %v229
    %3699 = vmatpush.msra.mxu0 %v225
    %3700 = vmatpush.msra.mxu0 %v221
    %3701 = vmatpush.msra.mxu0 %v217
    %3702 = vmatpush.msra.mxu0 %v213
    %3703 = vmatpush.msra.mxu0 %v209
    %3704 = vmatpush.msra.mxu0 %v205
    %3705 = vmatmul.f32.gmra.mxu0 %v3626
    %v3706 = vpop.f32.mrf.mxu0
    %v3707 = vadd.f32 %v3687, %v3706
    %3708 = vdwg.mxu0
    %3709 = vmatpush.msra.mxu0 %v202
    %3710 = vmatpush.msra.mxu0 %v198
    %3711 = vmatpush.msra.mxu0 %v194
    %3712 = vmatpush.msra.mxu0 %v190
    %3713 = vmatpush.msra.mxu0 %v186
    %3714 = vmatpush.msra.mxu0 %v182
    %3715 = vmatpush.msra.mxu0 %v178
    %3716 = vmatpush.msra.mxu0 %v174
    %3717 = vmatpush.msra.mxu0 %v170
    %3718 = vmatpush.msra.mxu0 %v166
    %3719 = vmatpush.msra.mxu0 %v162
    %3720 = vmatpush.msra.mxu0 %v158
    %3721 = vmatpush.msra.mxu0 %v154
    %3722 = vmatpush.msra.mxu0 %v150
    %3723 = vmatpush.msra.mxu0 %v146
    %3724 = vmatpush.msra.mxu0 %v142
    %3725 = vmatmul.f32.gmra.mxu0 %v3625
    %v3726 = vpop.f32.mrf.mxu0
    %v3727 = vadd.f32 %v701, %v3726
    %3728 = vdwg.mxu0
    %3729 = vmatpush.msra.mxu0 %v266
    %3730 = vmatpush.msra.mxu0 %v262
    %3731 = vmatpush.msra.mxu0 %v258
    %3732 = vmatpush.msra.mxu0 %v254
    %3733 = vmatpush.msra.mxu0 %v250
    %3734 = vmatpush.msra.mxu0 %v246
    %3735 = vmatpush.msra.mxu0 %v242
    %3736 = vmatpush.msra.mxu0 %v238
    %3737 = vmatpush.msra.mxu0 %v234
    %3738 = vmatpush.msra.mxu0 %v230
    %3739 = vmatpush.msra.mxu0 %v226
    %3740 = vmatpush.msra.mxu0 %v222
    %3741 = vmatpush.msra.mxu0 %v218
    %3742 = vmatpush.msra.mxu0 %v214
    %3743 = vmatpush.msra.mxu0 %v210
    %3744 = vmatpush.msra.mxu0 %v206
    %3745 = vmatmul.f32.gmra.mxu0 %v3626
    %v3746 = vpop.f32.mrf.mxu0
    %v3747 = vadd.f32 %v3727, %v3746
    %3748 = vdwg.mxu0
    %3749 = vmatpush.msra.mxu0 %v203
    %3750 = vmatpush.msra.mxu0 %v199
    %3751 = vmatpush.msra.mxu0 %v195
    %3752 = vmatpush.msra.mxu0 %v191
    %3753 = vmatpush.msra.mxu0 %v187
    %3754 = vmatpush.msra.mxu0 %v183
    %3755 = vmatpush.msra.mxu0 %v179
    %3756 = vmatpush.msra.mxu0 %v175
    %3757 = vmatpush.msra.mxu0 %v171
    %3758 = vmatpush.msra.mxu0 %v167
    %3759 = vmatpush.msra.mxu0 %v163
    %3760 = vmatpush.msra.mxu0 %v159
    %3761 = vmatpush.msra.mxu0 %v155
    %3762 = vmatpush.msra.mxu0 %v151
    %3763 = vmatpush.msra.mxu0 %v147
    %3764 = vmatpush.msra.mxu0 %v143
    %3765 = vmatmul.f32.gmra.mxu0 %v3625
    %v3766 = vpop.f32.mrf.mxu0
    %v3767 = vadd.f32 %v702, %v3766
    %3768 = vdwg.mxu0
    %3769 = vmatpush.msra.mxu0 %v267
    %3770 = vmatpush.msra.mxu0 %v263
    %3771 = vmatpush.msra.mxu0 %v259
    %3772 = vmatpush.msra.mxu0 %v255
    %3773 = vmatpush.msra.mxu0 %v251
    %3774 = vmatpush.msra.mxu0 %v247
    %3775 = vmatpush.msra.mxu0 %v243
    %3776 = vmatpush.msra.mxu0 %v239
    %3777 = vmatpush.msra.mxu0 %v235
    %3778 = vmatpush.msra.mxu0 %v231
    %3779 = vmatpush.msra.mxu0 %v227
    %3780 = vmatpush.msra.mxu0 %v223
    %3781 = vmatpush.msra.mxu0 %v219
    %3782 = vmatpush.msra.mxu0 %v215
    %3783 = vmatpush.msra.mxu0 %v211
    %3784 = vmatpush.msra.mxu0 %v207
    %3785 = vmatmul.f32.gmra.mxu0 %v3626
    %v3786 = vpop.f32.mrf.mxu0
    %v3787 = vadd.f32 %v3767, %v3786
    %3788 = vdwg.mxu0
    %v3789 = vtanh.pop %v3667
    %v3790 = vtanh.pop %v3707
    %v3791 = vtanh.pop %v3747
    %v3792 = vtanh.pop %v3787
    %v3793 = vmul.f32 %v3789, 0.5
    %v3794 = vadd.f32 %v3793, 0.5
    %v3795 = vmul.f32 %v3790, 0.5
    %v3796 = vadd.f32 %v3795, 0.5
    %v3797 = vmul.f32 %v3792, 0.5
    %v3798 = vadd.f32 %v3797, 0.5
    %v3799 = vmul.f32 %v3796, %v3505
    %v3800 = vmul.f32 %v3794, %v3791
    %v3801 = vadd.f32 %v3799, %v3800
    %v3802 = vtanh.pop %v3801
    %v3803 = vmul.f32 %v3798, %v3802
    %3804 = vmatpush.msra.mxu0 %v136
    %3805 = vmatpush.msra.mxu0 %v132
    %3806 = vmatpush.msra.mxu0 %v128
    %3807 = vmatpush.msra.mxu0 %v124
    %3808 = vmatpush.msra.mxu0 %v120
    %3809 = vmatpush.msra.mxu0 %v116
    %3810 = vmatpush.msra.mxu0 %v112
    %3811 = vmatpush.msra.mxu0 %v108
    %3812 = vmatpush.msra.mxu0 %v104
    %3813 = vmatpush.msra.mxu0 %v100
    %3814 = vmatpush.msra.mxu0 %v96
    %3815 = vmatpush.msra.mxu0 %v92
    %3816 = vmatpush.msra.mxu0 %v88
    %3817 = vmatpush.msra.mxu0 %v84
    %3818 = vmatpush.msra.mxu0 %v80
    %3819 = vmatpush.msra.mxu0 %v76
    %3820 = vmatmul.f32.gmra.mxu0 %v3625
    %v3821 = vpop.f32.mrf.mxu0
    %v3822 = vadd.f32 0.0, %v3821
    %3823 = vdwg.mxu0
    %3824 = vmatpush.msra.mxu0 %v137
    %3825 = vmatpush.msra.mxu0 %v133
    %3826 = vmatpush.msra.mxu0 %v129
    %3827 = vmatpush.msra.mxu0 %v125
    %3828 = vmatpush.msra.mxu0 %v121
    %3829 = vmatpush.msra.mxu0 %v117
    %3830 = vmatpush.msra.mxu0 %v113
    %3831 = vmatpush.msra.mxu0 %v109
    %3832 = vmatpush.msra.mxu0 %v105
    %3833 = vmatpush.msra.mxu0 %v101
    %3834 = vmatpush.msra.mxu0 %v97
    %3835 = vmatpush.msra.mxu0 %v93
    %3836 = vmatpush.msra.mxu0 %v89
    %3837 = vmatpush.msra.mxu0 %v85
    %3838 = vmatpush.msra.mxu0 %v81
    %3839 = vmatpush.msra.mxu0 %v77
    %3840 = vmatmul.f32.gmra.mxu0 %v3625
    %v3841 = vpop.f32.mrf.mxu0
    %v3842 = vadd.f32 0.0, %v3841
    %3843 = vdwg.mxu0
    %3844 = vmatpush.msra.mxu0 %v138
    %3845 = vmatpush.msra.mxu0 %v134
    %3846 = vmatpush.msra.mxu0 %v130
    %3847 = vmatpush.msra.mxu0 %v126
    %3848 = vmatpush.msra.mxu0 %v122
    %3849 = vmatpush.msra.mxu0 %v118
    %3850 = vmatpush.msra.mxu0 %v114
    %3851 = vmatpush.msra.mxu0 %v110
    %3852 = vmatpush.msra.mxu0 %v106
    %3853 = vmatpush.msra.mxu0 %v102
    %3854 = vmatpush.msra.mxu0 %v98
    %3855 = vmatpush.msra.mxu0 %v94
    %3856 = vmatpush.msra.mxu0 %v90
    %3857 = vmatpush.msra.mxu0 %v86
    %3858 = vmatpush.msra.mxu0 %v82
    %3859 = vmatpush.msra.mxu0 %v78
    %3860 = vmatmul.f32.gmra.mxu0 %v3625
    %v3861 = vpop.f32.mrf.mxu0
    %v3862 = vadd.f32 0.0, %v3861
    %3863 = vdwg.mxu0
    %3864 = vmatpush.msra.mxu0 %v139
    %3865 = vmatpush.msra.mxu0 %v135
    %3866 = vmatpush.msra.mxu0 %v131
    %3867 = vmatpush.msra.mxu0 %v127
    %3868 = vmatpush.msra.mxu0 %v123
    %3869 = vmatpush.msra.mxu0 %v119
    %3870 = vmatpush.msra.mxu0 %v115
    %3871 = vmatpush.msra.mxu0 %v111
    %3872 = vmatpush.msra.mxu0 %v107
    %3873 = vmatpush.msra.mxu0 %v103
    %3874 = vmatpush.msra.mxu0 %v99
    %3875 = vmatpush.msra.mxu0 %v95
    %3876 = vmatpush.msra.mxu0 %v91
    %3877 = vmatpush.msra.mxu0 %v87
    %3878 = vmatpush.msra.mxu0 %v83
    %3879 = vmatpush.msra.mxu0 %v79
    %3880 = vmatmul.f32.gmra.mxu0 %v3625
    %v3881 = vpop.f32.mrf.mxu0
    %v3882 = vadd.f32 0.0, %v3881
    %3883 = vdwg.mxu0
    %v3888 = vrot.slane %v3822, 2
    %v3889 = vrot.slane %v3842, 2
    %v3890 = vrot.slane %v3862, 2
    %v3891 = vrot.slane %v3882, 2
    %v3896 = vadd.f32 %v519, %v3888
    %v3897 = vadd.f32 %v545, %v3889
    %v3898 = vadd.f32 %v571, %v3890
    %v3899 = vadd.f32 %v597, %v3891
    %v3900 = vtanh.pop %v3896
    %v3901 = vtanh.pop %v3897
    %v3902 = vtanh.pop %v3898
    %v3903 = vtanh.pop %v3899
    %v3904 = vmul.f32 %v3900, 0.5
    %v3905 = vadd.f32 %v3904, 0.5
    %v3906 = vmul.f32 %v3901, 0.5
    %v3907 = vadd.f32 %v3906, 0.5
    %v3908 = vmul.f32 %v3903, 0.5
    %v3909 = vadd.f32 %v3908, 0.5
    %v3911 = vrot.slane %v3619, 6
    %v3913 = vmul.f32 %v3907, %v3911
    %v3914 = vmul.f32 %v3905, %v3902
    %v3915 = vadd.f32 %v3913, %v3914
    %v3916 = vtanh.pop %v3915
    %v3917 = vmul.f32 %v3909, %v3916
    %v3919 = vrot.slane %v3803, 2
    %v3921 = vrot.slane %v3917, 6
    %v3922 = vrot.slane %v3919, 6
    %3925 = vmatpush.msra.mxu0 %v200
    %3926 = vmatpush.msra.mxu0 %v196
    %3927 = vmatpush.msra.mxu0 %v192
    %3928 = vmatpush.msra.mxu0 %v188
    %3929 = vmatpush.msra.mxu0 %v184
    %3930 = vmatpush.msra.mxu0 %v180
    %3931 = vmatpush.msra.mxu0 %v176
    %3932 = vmatpush.msra.mxu0 %v172
    %3933 = vmatpush.msra.mxu0 %v168
    %3934 = vmatpush.msra.mxu0 %v164
    %3935 = vmatpush.msra.mxu0 %v160
    %3936 = vmatpush.msra.mxu0 %v156
    %3937 = vmatpush.msra.mxu0 %v152
    %3938 = vmatpush.msra.mxu0 %v148
    %3939 = vmatpush.msra.mxu0 %v144
    %3940 = vmatpush.msra.mxu0 %v140
    %3941 = vmatmul.f32.gmra.mxu0 %v3921
    %v3942 = vpop.f32.mrf.mxu0
    %v3943 = vadd.f32 %v699, %v3942
    %3944 = vdwg.mxu0
    %3945 = vmatpush.msra.mxu0 %v264
    %3946 = vmatpush.msra.mxu0 %v260
    %3947 = vmatpush.msra.mxu0 %v256
    %3948 = vmatpush.msra.mxu0 %v252
    %3949 = vmatpush.msra.mxu0 %v248
    %3950 = vmatpush.msra.mxu0 %v244
    %3951 = vmatpush.msra.mxu0 %v240
    %3952 = vmatpush.msra.mxu0 %v236
    %3953 = vmatpush.msra.mxu0 %v232
    %3954 = vmatpush.msra.mxu0 %v228
    %3955 = vmatpush.msra.mxu0 %v224
    %3956 = vmatpush.msra.mxu0 %v220
    %3957 = vmatpush.msra.mxu0 %v216
    %3958 = vmatpush.msra.mxu0 %v212
    %3959 = vmatpush.msra.mxu0 %v208
    %3960 = vmatpush.msra.mxu0 %v204
    %3961 = vmatmul.f32.gmra.mxu0 %v3922
    %v3962 = vpop.f32.mrf.mxu0
    %v3963 = vadd.f32 %v3943, %v3962
    %3964 = vdwg.mxu0
    %3965 = vmatpush.msra.mxu0 %v201
    %3966 = vmatpush.msra.mxu0 %v197
    %3967 = vmatpush.msra.mxu0 %v193
    %3968 = vmatpush.msra.mxu0 %v189
    %3969 = vmatpush.msra.mxu0 %v185
    %3970 = vmatpush.msra.mxu0 %v181
    %3971 = vmatpush.msra.mxu0 %v177
    %3972 = vmatpush.msra.mxu0 %v173
    %3973 = vmatpush.msra.mxu0 %v169
    %3974 = vmatpush.msra.mxu0 %v165
    %3975 = vmatpush.msra.mxu0 %v161
    %3976 = vmatpush.msra.mxu0 %v157
    %3977 = vmatpush.msra.mxu0 %v153
    %3978 = vmatpush.msra.mxu0 %v149
    %3979 = vmatpush.msra.mxu0 %v145
    %3980 = vmatpush.msra.mxu0 %v141
    %3981 = vmatmul.f32.gmra.mxu0 %v3921
    %v3982 = vpop.f32.mrf.mxu0
    %v3983 = vadd.f32 %v700, %v3982
    %3984 = vdwg.mxu0
    %3985 = vmatpush.msra.mxu0 %v265
    %3986 = vmatpush.msra.mxu0 %v261
    %3987 = vmatpush.msra.mxu0 %v257
    %3988 = vmatpush.msra.mxu0 %v253
    %3989 = vmatpush.msra.mxu0 %v249
    %3990 = vmatpush.msra.mxu0 %v245
    %3991 = vmatpush.msra.mxu0 %v241
    %3992 = vmatpush.msra.mxu0 %v237
    %3993 = vmatpush.msra.mxu0 %v233
    %3994 = vmatpush.msra.mxu0 %v229
    %3995 = vmatpush.msra.mxu0 %v225
    %3996 = vmatpush.msra.mxu0 %v221
    %3997 = vmatpush.msra.mxu0 %v217
    %3998 = vmatpush.msra.mxu0 %v213
    %3999 = vmatpush.msra.mxu0 %v209
    %4000 = vmatpush.msra.mxu0 %v205
    %4001 = vmatmul.f32.gmra.mxu0 %v3922
    %v4002 = vpop.f32.mrf.mxu0
    %v4003 = vadd.f32 %v3983, %v4002
    %4004 = vdwg.mxu0
    %4005 = vmatpush.msra.mxu0 %v202
    %4006 = vmatpush.msra.mxu0 %v198
    %4007 = vmatpush.msra.mxu0 %v194
    %4008 = vmatpush.msra.mxu0 %v190
    %4009 = vmatpush.msra.mxu0 %v186
    %4010 = vmatpush.msra.mxu0 %v182
    %4011 = vmatpush.msra.mxu0 %v178
    %4012 = vmatpush.msra.mxu0 %v174
    %4013 = vmatpush.msra.mxu0 %v170
    %4014 = vmatpush.msra.mxu0 %v166
    %4015 = vmatpush.msra.mxu0 %v162
    %4016 = vmatpush.msra.mxu0 %v158
    %4017 = vmatpush.msra.mxu0 %v154
    %4018 = vmatpush.msra.mxu0 %v150
    %4019 = vmatpush.msra.mxu0 %v146
    %4020 = vmatpush.msra.mxu0 %v142
    %4021 = vmatmul.f32.gmra.mxu0 %v3921
    %v4022 = vpop.f32.mrf.mxu0
    %v4023 = vadd.f32 %v701, %v4022
    %4024 = vdwg.mxu0
    %4025 = vmatpush.msra.mxu0 %v266
    %4026 = vmatpush.msra.mxu0 %v262
    %4027 = vmatpush.msra.mxu0 %v258
    %4028 = vmatpush.msra.mxu0 %v254
    %4029 = vmatpush.msra.mxu0 %v250
    %4030 = vmatpush.msra.mxu0 %v246
    %4031 = vmatpush.msra.mxu0 %v242
    %4032 = vmatpush.msra.mxu0 %v238
    %4033 = vmatpush.msra.mxu0 %v234
    %4034 = vmatpush.msra.mxu0 %v230
    %4035 = vmatpush.msra.mxu0 %v226
    %4036 = vmatpush.msra.mxu0 %v222
    %4037 = vmatpush.msra.mxu0 %v218
    %4038 = vmatpush.msra.mxu0 %v214
    %4039 = vmatpush.msra.mxu0 %v210
    %4040 = vmatpush.msra.mxu0 %v206
    %4041 = vmatmul.f32.gmra.mxu0 %v3922
    %v4042 = vpop.f32.mrf.mxu0
    %v4043 = vadd.f32 %v4023, %v4042
    %4044 = vdwg.mxu0
    %4045 = vmatpush.msra.mxu0 %v203
    %4046 = vmatpush.msra.mxu0 %v199
    %4047 = vmatpush.msra.mxu0 %v195
    %4048 = vmatpush.msra.mxu0 %v191
    %4049 = vmatpush.msra.mxu0 %v187
    %4050 = vmatpush.msra.mxu0 %v183
    %4051 = vmatpush.msra.mxu0 %v179
    %4052 = vmatpush.msra.mxu0 %v175
    %4053 = vmatpush.msra.mxu0 %v171
    %4054 = vmatpush.msra.mxu0 %v167
    %4055 = vmatpush.msra.mxu0 %v163
    %4056 = vmatpush.msra.mxu0 %v159
    %4057 = vmatpush.msra.mxu0 %v155
    %4058 = vmatpush.msra.mxu0 %v151
    %4059 = vmatpush.msra.mxu0 %v147
    %4060 = vmatpush.msra.mxu0 %v143
    %4061 = vmatmul.f32.gmra.mxu0 %v3921
    %v4062 = vpop.f32.mrf.mxu0
    %v4063 = vadd.f32 %v702, %v4062
    %4064 = vdwg.mxu0
    %4065 = vmatpush.msra.mxu0 %v267
    %4066 = vmatpush.msra.mxu0 %v263
    %4067 = vmatpush.msra.mxu0 %v259
    %4068 = vmatpush.msra.mxu0 %v255
    %4069 = vmatpush.msra.mxu0 %v251
    %4070 = vmatpush.msra.mxu0 %v247
    %4071 = vmatpush.msra.mxu0 %v243
    %4072 = vmatpush.msra.mxu0 %v239
    %4073 = vmatpush.msra.mxu0 %v235
    %4074 = vmatpush.msra.mxu0 %v231
    %4075 = vmatpush.msra.mxu0 %v227
    %4076 = vmatpush.msra.mxu0 %v223
    %4077 = vmatpush.msra.mxu0 %v219
    %4078 = vmatpush.msra.mxu0 %v215
    %4079 = vmatpush.msra.mxu0 %v211
    %4080 = vmatpush.msra.mxu0 %v207
    %4081 = vmatmul.f32.gmra.mxu0 %v3922
    %v4082 = vpop.f32.mrf.mxu0
    %v4083 = vadd.f32 %v4063, %v4082
    %4084 = vdwg.mxu0
    %v4085 = vtanh.pop %v3963
    %v4086 = vtanh.pop %v4003
    %v4087 = vtanh.pop %v4043
    %v4088 = vtanh.pop %v4083
    %v4089 = vmul.f32 %v4085, 0.5
    %v4090 = vadd.f32 %v4089, 0.5
    %v4091 = vmul.f32 %v4086, 0.5
    %v4092 = vadd.f32 %v4091, 0.5
    %v4093 = vmul.f32 %v4088, 0.5
    %v4094 = vadd.f32 %v4093, 0.5
    %v4095 = vmul.f32 %v4092, %v3801
    %v4096 = vmul.f32 %v4090, %v4087
    %v4097 = vadd.f32 %v4095, %v4096
    %v4098 = vtanh.pop %v4097
    %v4099 = vmul.f32 %v4094, %v4098
    %v4100 = vld [vmem:[%s8] sm:$0xff]
    %v4101 = vld [vmem:[%s8 + $0x8] sm:$0xff]
    %v4102 = vld [vmem:[%s8 + $0x10] sm:$0xff]
    %v4103 = vld [vmem:[%s8 + $0x18] sm:$0xff]
    %v4104 = vld [vmem:[%s8 + $0x20] sm:$0xff]
    %v4105 = vld [vmem:[%s8 + $0x28] sm:$0xff]
    %v4106 = vld [vmem:[%s8 + $0x30] sm:$0xff]
    %v4107 = vld [vmem:[%s8 + $0x38] sm:$0xff]
    %v4108 = vld [vmem:[%s8 + $0x40] sm:$0xff]
    %v4109 = vld [vmem:[%s8 + $0x48] sm:$0xff]
    %v4110 = vld [vmem:[%s8 + $0x50] sm:$0xff]
    %v4111 = vld [vmem:[%s8 + $0x58] sm:$0xff]
    %v4112 = vld [vmem:[%s8 + $0x60] sm:$0xff]
    %v4113 = vld [vmem:[%s8 + $0x68] sm:$0xff]
    %v4114 = vld [vmem:[%s8 + $0x70] sm:$0xff]
    %v4115 = vld [vmem:[%s8 + $0x78] sm:$0xff]
    %v4116 = vld [vmem:[%s9] sm:$0x1]
    %v4118 = vperm.slane %v4116, 0
    %4120 = vmatpush.msra.mxu0 %v4115
    %4121 = vmatpush.msra.mxu0 %v4114
    %4122 = vmatpush.msra.mxu0 %v4113
    %4123 = vmatpush.msra.mxu0 %v4112
    %4124 = vmatpush.msra.mxu0 %v4111
    %4125 = vmatpush.msra.mxu0 %v4110
    %4126 = vmatpush.msra.mxu0 %v4109
    %4127 = vmatpush.msra.mxu0 %v4108
    %4128 = vmatpush.msra.mxu0 %v4107
    %4129 = vmatpush.msra.mxu0 %v4106
    %4130 = vmatpush.msra.mxu0 %v4105
    %4131 = vmatpush.msra.mxu0 %v4104
    %4132 = vmatpush.msra.mxu0 %v4103
    %4133 = vmatpush.msra.mxu0 %v4102
    %4134 = vmatpush.msra.mxu0 %v4101
    %4135 = vmatpush.msra.mxu0 %v4100
    %4136 = vmatmul.f32.gmra.mxu0 %v4099
    %v4137 = vpop.f32.mrf.mxu0
    %v4138 = vadd.f32 %v4118, %v4137
    %4139 = vdwg.mxu0
    %vm4140 = vcmask 58368
    %4141 = vst.msk [vmem:[#allocation7] sm:$0x3] %vm4140, %v4138
    // Predicated region
    $region50: #{tpu_custom_call.1} parent=1 // pred_check
      _
    $region51: #{tpu_custom_call.1} parent=1 // pred_check_branch
      %4143 = sbr.rel (0) target = $region53
    $region52: #{tpu_custom_call.1} parent=1 // pred_region
      %4145 = vsyncadd [#allocation4], 0
      %s4147 = sshll.u32 [#allocation7], 4
      %s4148 = int_to_ptr.vmem [resolvable:$true] %s4147
      %s4149 = sshll.u32 %s10, 4
      %s4150 = int_to_ptr.hbm [resolvable:$true] %s4149
      %4152 = dma.vmem_to_hbm [thread:$0]  %s4148, 32, %s4150, [#allocation4]
    $region53: #{tpu_custom_call.1} parent=1 // pred_fallthru
      _
    // Predicated region
    $region54: #{tpu_custom_call.1} parent=1 // pred_check
      _
    $region55: #{tpu_custom_call.1} parent=1 // pred_check_branch
      %4154 = sbr.rel (0) target = $region57
    $region56: #{tpu_custom_call.1} parent=1 // pred_region
      %4156 = dma.done [#allocation4], 32
    $region57: #{tpu_custom_call.1} parent=1 // pred_fallthru
      _
    %4157 = vsyncpa [#allocation3], 1
    %4158 = vsyncpa [#allocation6], 1
    %4159 = vsyncpa [#allocation4], 1

</llo_original>
